<compile_context>
chip_gen: v7x
topology: tpu7x:2x2x1
jax: 0.10.0
libtpu: 0.0.40
codegen_flags: <defaults>
</compile_context>

<pallas_src>
import functools
import math

import jax
import jax.numpy as jnp
from jax.experimental import pallas as pl
from jax.experimental.pallas import tpu as pltpu

NEG_INF = -1e30  # finite "minus infinity": safe through f32 exp / masking paths


# ----------------------------- in-kernel helpers -----------------------------

def _layernorm(x, g, b, eps=1e-5):
    mu = jnp.mean(x, axis=-1, keepdims=True)
    xc = x - mu
    var = jnp.mean(xc * xc, axis=-1, keepdims=True)
    return xc * jax.lax.rsqrt(var + eps) * g + b


def _split_heads_store(x_f32, cache, qi, *, tq, nhead, hd):
    """Scatter a [tq, D] projection into cache[:, qi*tq:(qi+1)*tq, :] per head
    (static lane slices + dynamic sublane offset; no extra matmuls)."""
    start = pl.multiple_of(qi * tq, tq)
    for h in range(nhead):
        cache[h, pl.ds(start, tq), :] = x_f32[:, h * hd:(h + 1) * hd].astype(cache.dtype)


def _fill_kv_block(xn_b, wk, bk, wv, bv, k_cache, v_cache, qi, *, tq, nhead, hd):
    """Project K/V of the current block with full-width [tq,D]x[D,D] matmuls and
    append (incremental fill) to the persistent per-head caches."""
    k = jnp.dot(xn_b, wk, preferred_element_type=jnp.float32) + bk
    v = jnp.dot(xn_b, wv, preferred_element_type=jnp.float32) + bv
    _split_heads_store(k, k_cache, qi, tq=tq, nhead=nhead, hd=hd)
    _split_heads_store(v, v_cache, qi, tq=tq, nhead=nhead, hd=hd)


def _project_q(xn_b, wq, bq, q_buf, *, nhead, hd):
    """Q projection (1/sqrt(hd) already folded into wq/bq) -> [nhead, tq, hd] bf16."""
    q = jnp.dot(xn_b, wq, preferred_element_type=jnp.float32) + bq
    for h in range(nhead):
        q_buf[h] = q[:, h * hd:(h + 1) * hd].astype(q_buf.dtype)


def _flash_attention(q_buf, k_cache, v_cache, qi, m_sc, l_sc, acc_sc, *, tq, nhead, hd):
    """Causal flash attention of query block qi against KV blocks 0..qi.
    Running max / sum / accumulator live in VMEM scratch (no big loop carries)."""
    qh = q_buf[...]                                      # [nhead, tq, hd] bf16
    m_sc[...] = jnp.full(m_sc.shape, NEG_INF, jnp.float32)
    l_sc[...] = jnp.zeros(l_sc.shape, jnp.float32)
    acc_sc[...] = jnp.zeros(acc_sc.shape, jnp.float32)

    def _update(s, vb):
        m_prev = m_sc[...]
        m_new = jnp.maximum(m_prev, jnp.max(s, axis=-1, keepdims=True))
        alpha = jnp.exp(m_prev - m_new)
        p = jnp.exp(s - m_new)
        l_sc[...] = alpha * l_sc[...] + jnp.sum(p, axis=-1, keepdims=True)
        acc_sc[...] = alpha * acc_sc[...] + jnp.einsum(
            'hqk,hkd->hqd', p.astype(jnp.bfloat16), vb,
            preferred_element_type=jnp.float32)
        m_sc[...] = m_new

    def visible_block(j, carry):                         # j < qi: fully visible, no mask
        start = pl.multiple_of(j * tq, tq)
        kb = k_cache[:, pl.ds(start, tq), :]
        vb = v_cache[:, pl.ds(start, tq), :]
        # TODO(synk): check a bundle dump for a hidden per-block K transpose here; if
        # present, store k_cache pre-transposed as [nhead, hd, T] instead.
        s = jnp.einsum('hqd,hkd->hqk', qh, kb, preferred_element_type=jnp.float32)
        _update(s, vb)
        return carry

    jax.lax.fori_loop(0, qi, visible_block, 0)

    # Diagonal block (j == qi): the only block that needs the causal mask.
    start = pl.multiple_of(qi * tq, tq)
    kb = k_cache[:, pl.ds(start, tq), :]
    vb = v_cache[:, pl.ds(start, tq), :]
    s = jnp.einsum('hqd,hkd->hqk', qh, kb, preferred_element_type=jnp.float32)
    row = jax.lax.broadcasted_iota(jnp.int32, (1, tq, tq), 1)
    col = jax.lax.broadcasted_iota(jnp.int32, (1, tq, tq), 2)
    s = jnp.where(col <= row, s, jnp.float32(NEG_INF))
    _update(s, vb)

    # Exact normalization (nhead*tq divides only; avoids the approx-recip ~1e-3 error).
    inv = 1.0 / l_sc[...]
    return acc_sc[...] * inv                             # [nhead, tq, hd] f32


def _attn_output(attn, wo, bo, *, nhead, hd):
    """Merge heads along lanes and apply the output projection as one [tq,D]x[D,D]."""
    merged = jnp.concatenate([attn[h] for h in range(nhead)], axis=-1)   # [tq, D] f32
    return jnp.dot(merged.astype(jnp.bfloat16), wo,
                   preferred_element_type=jnp.float32) + bo


def _ff_block(x, w1, b1, w2, b2):
    h = jnp.dot(x.astype(jnp.bfloat16), w1, preferred_element_type=jnp.float32) + b1
    h = jnp.maximum(h, 0.0)
    return jnp.dot(h.astype(jnp.bfloat16), w2, preferred_element_type=jnp.float32) + b2


def _encoder_step(kv_rows, q_rows, residual, qi, weights, scratch, *, nhead, tq, hd):
    """Shared norm_first encoder step for one query block.  kv_rows feeds K/V (via LN1),
    q_rows feeds Q (via LN1); residual is added to the attention output."""
    (ln1g, ln1b, ln2g, ln2b, wq, bq, wk, bk, wv, bv, wo, bo, w1, b1, w2, b2) = weights
    k_cache, v_cache, q_buf, m_sc, l_sc, acc_sc = scratch

    kvn = _layernorm(kv_rows, ln1g, ln1b).astype(jnp.bfloat16)
    _fill_kv_block(kvn, wk, bk, wv, bv, k_cache, v_cache, qi, tq=tq, nhead=nhead, hd=hd)

    qn = kvn if q_rows is kv_rows else _layernorm(q_rows, ln1g, ln1b).astype(jnp.bfloat16)
    _project_q(qn, wq, bq, q_buf, nhead=nhead, hd=hd)

    attn = _flash_attention(q_buf, k_cache, v_cache, qi, m_sc, l_sc, acc_sc,
                            tq=tq, nhead=nhead, hd=hd)
    h = residual + _attn_output(attn, wo, bo, nhead=nhead, hd=hd)
    hn = _layernorm(h, ln2g, ln2b)
    return h + _ff_block(hn, w1, b1, w2, b2)


# --------------------------------- kernels -----------------------------------

def cross_layer_kernel(a_ref, v_ref,
                       ln1g, ln1b, ln2g, ln2b,
                       wq, bq, wk, bk, wv, bv, wo, bo,
                       w1, b1, w2, b2,
                       o_ref,
                       k_cache, v_cache, q_buf, m_sc, l_sc, acc_sc,
                       *, nhead, tq):
    qi = pl.program_id(1)
    D = a_ref.shape[2]
    hd = D // nhead

    a_rows = a_ref[0].astype(jnp.float32)      # audio block qi  [tq, D]
    v_rows = v_ref[0].astype(jnp.float32)      # video block qi  [tq, D]

    weights = (ln1g[...], ln1b[...], ln2g[...], ln2b[...],
               wq[...], bq[...], wk[...], bk[...], wv[...], bv[...],
               wo[...], bo[...], w1[...], b1[...], w2[...], b2[...])
    scratch = (k_cache, v_cache, q_buf, m_sc, l_sc, acc_sc)

    # PyTorch _ca_block: query = norm1(video); key = value = norm1(audio);
    # residual = audio + video (dropout = 0 -> identity).
    out = _encoder_step(a_rows, v_rows, a_rows + v_rows, qi, weights, scratch,
                        nhead=nhead, tq=tq, hd=hd)
    o_ref[0] = out.astype(o_ref.dtype)


def self_stack_kernel(x_ref,
                      ln1g, ln1b, ln2g, ln2b,
                      wq, bq, wk, bk, wv, bv, wo, bo,
                      w1, b1, w2, b2,
                      o_ref,
                      k_cache, v_cache, q_buf, m_sc, l_sc, acc_sc,
                      *, nhead, tq):
    l = pl.program_id(1)
    qi = pl.program_id(2)
    D = x_ref.shape[2]
    hd = D // nhead

    # Seed the VMEM-resident activation slab (= the output block, whose index is constant
    # along the layer and q axes) once per batch element; every later read/write goes
    # through this slab, so the self layers never round-trip activations through HBM.
    @pl.when(jnp.logical_and(l == 0, qi == 0))
    def _():
        o_ref[0] = x_ref[0]

    q_start = pl.multiple_of(qi * tq, tq)
    x_rows = o_ref[0, pl.ds(q_start, tq), :].astype(jnp.float32)   # layer-l input block

    weights = (ln1g[0], ln1b[0], ln2g[0], ln2b[0],
               wq[0], bq[0], wk[0], bk[0], wv[0], bv[0],
               wo[0], bo[0], w1[0], b1[0], w2[0], b2[0])
    scratch = (k_cache, v_cache, q_buf, m_sc, l_sc, acc_sc)

    out = _encoder_step(x_rows, x_rows, x_rows, qi, weights, scratch,
                        nhead=nhead, tq=tq, hd=hd)
    o_ref[0, pl.ds(q_start, tq), :] = out.astype(o_ref.dtype)


# ------------------------------ pallas wrappers -------------------------------

_PARAM_ORDER = ("ln1_g", "ln1_b", "ln2_g", "ln2_b",
                "wq", "bq", "wk", "bk", "wv", "bv", "wo", "bo",
                "w1", "b1", "w2", "b2")


def _vmem_capacity_bytes():
    try:
        return int(pltpu.get_tpu_info().vmem_capacity_bytes)
    except Exception:   # interpret mode / older jax: assume the tightest (v7x) budget
        return 64 * 2**20


def _choose_tq(T, tile_q):
    if tile_q is not None:
        return tile_q
    # Bigger query blocks amortize LN / projections / per-step overhead; v7x (64 MiB
    # VMEM) gets a tighter cap than v5e/v6e (128 MiB).
    top = 256 if _vmem_capacity_bytes() > 96 * 2**20 else 128
    if T <= top:
        return T
    for cand in (256, 128, 64, 32, 16, 8):
        if cand <= top and T % cand == 0:
            return cand
    return T


def _const_spec(shape):
    # Constant index map -> the block is DMA'd once and stays VMEM-resident for the grid.
    rank = len(shape)
    return pl.BlockSpec(shape, lambda *args, _r=rank: (0,) * _r)


def _layer_spec(shape):
    # Per-layer slice of an [L, ...] stacked weight; re-DMA'd only when the layer axis
    # of the grid advances (once per layer per batch element).
    rest = tuple(shape[1:])
    return pl.BlockSpec((1,) + rest, lambda b, l, q, _n=len(rest): (l,) + (0,) * _n)


def _attn_scratch(T, D, nhead, tq):
    hd = D // nhead
    return [pltpu.VMEM((nhead, T, hd), jnp.bfloat16),    # K cache (persistent)
            pltpu.VMEM((nhead, T, hd), jnp.bfloat16),    # V cache (persistent)
            pltpu.VMEM((nhead, tq, hd), jnp.bfloat16),   # Q tile
            pltpu.VMEM((nhead, tq, 1), jnp.float32),     # running max
            pltpu.VMEM((nhead, tq, 1), jnp.float32),     # running sum
            pltpu.VMEM((nhead, tq, hd), jnp.float32)]    # output accumulator


def _estimate_vmem(T, D, F, nhead, tq, n_tile_io, n_slab_io, param_bytes):
    lane = lambda n: max(n, 128)
    sub = lambda n: ((max(n, 1) + 7) // 8) * 8
    hd = D // nhead
    caches = 2 * nhead * sub(T) * lane(hd) * 2                        # K/V (bf16)
    state = nhead * sub(tq) * (lane(hd) * 2 + lane(hd) * 4 + 2 * 128 * 4)
    io = 2 * (n_tile_io * sub(tq) + n_slab_io * sub(T)) * lane(D) * 4
    tmp = (3 * nhead * sub(tq) * lane(tq) * 4                         # scores / probs
           + sub(tq) * lane(F) * 4                                    # FFN hidden
           + 8 * sub(tq) * lane(D) * 4)                               # misc [tq, D] temps
    return caches + state + io + tmp + 2 * param_bytes


def _vmem_limit_bytes(est_bytes):
    cap = _vmem_capacity_bytes()
    return int(min(int(cap * 0.85), max(32 * 2**20, 2 * est_bytes)))


def _cross_layer_call(audio, video, params, nhead, tile_q=None):
    B, T, D = audio.shape
    F = params["w1"].shape[1]
    assert D % nhead == 0
    tq = _choose_tq(T, tile_q)
    assert T % tq == 0, (T, tq)
    nq = T // tq

    param_arrays = [params[k] for k in _PARAM_ORDER]
    param_bytes = sum(a.size * a.dtype.itemsize for a in param_arrays)

    tile_spec = pl.BlockSpec((1, tq, D), lambda b, q: (b, q, 0))
    in_specs = [tile_spec, tile_spec] + [_const_spec(a.shape) for a in param_arrays]
    out_specs = pl.BlockSpec((1, tq, D), lambda b, q: (b, q, 0))

    cost = pl.CostEstimate(
        flops=int(B * (8 * T * D * D + 2 * T * T * D + 4 * T * D * F)),
        transcendentals=int(B * nhead * T * T // 2),
        bytes_accessed=int(3 * B * T * D * 4 + param_bytes))

    return pl.pallas_call(
        functools.partial(cross_layer_kernel, nhead=nhead, tq=tq),
        out_shape=jax.ShapeDtypeStruct((B, T, D), audio.dtype),
        grid=(B, nq),
        in_specs=in_specs,
        out_specs=out_specs,
        scratch_shapes=_attn_scratch(T, D, nhead, tq),
        compiler_params=pltpu.CompilerParams(
            dimension_semantics=("parallel", "arbitrary"),
            vmem_limit_bytes=_vmem_limit_bytes(
                _estimate_vmem(T, D, F, nhead, tq, 3, 0, param_bytes))),
        cost_estimate=cost,
    )(audio, video, *param_arrays)


def _self_stack_call(x, params_list, nhead, tile_q=None):
    B, T, D = x.shape
    L = len(params_list)
    F = params_list[0]["w1"].shape[1]
    assert D % nhead == 0
    tq = _choose_tq(T, tile_q)
    assert T % tq == 0, (T, tq)
    nq = T // tq

    stacked = {k: jnp.stack([p[k] for p in params_list], axis=0) for k in _PARAM_ORDER}
    param_arrays = [stacked[k] for k in _PARAM_ORDER]
    layer_param_bytes = sum(a.size * a.dtype.itemsize for a in param_arrays) // L

    in_specs = ([pl.BlockSpec((1, T, D), lambda b, l, q: (b, 0, 0))]
                + [_layer_spec(a.shape) for a in param_arrays])
    out_specs = pl.BlockSpec((1, T, D), lambda b, l, q: (b, 0, 0))

    cost = pl.CostEstimate(
        flops=int(B * L * (8 * T * D * D + 2 * T * T * D + 4 * T * D * F)),
        transcendentals=int(B * L * nhead * T * T // 2),
        bytes_accessed=int(2 * B * T * D * 4 + B * L * layer_param_bytes))

    return pl.pallas_call(
        functools.partial(self_stack_kernel, nhead=nhead, tq=tq),
        out_shape=jax.ShapeDtypeStruct((B, T, D), x.dtype),
        grid=(B, L, nq),
        in_specs=in_specs,
        out_specs=out_specs,
        scratch_shapes=_attn_scratch(T, D, nhead, tq),
        compiler_params=pltpu.CompilerParams(
            dimension_semantics=("parallel", "arbitrary", "arbitrary"),
            vmem_limit_bytes=_vmem_limit_bytes(
                _estimate_vmem(T, D, F, nhead, tq, 0, 2, layer_param_bytes))),
        cost_estimate=cost,
    )(x, *param_arrays)


def sinusoidal_pe(T, D):
    # TODO(synk): the PositionalEncoding class is not in the provided source; standard
    # sepformer-style sinusoidal PE with dropout=0.0 is assumed.
    pos = jnp.arange(T, dtype=jnp.float32)[:, None]
    i = jnp.arange(0, D, 2, dtype=jnp.float32)
    div = jnp.exp(-(jnp.log(10000.0)) * i / D)
    pe = jnp.zeros((T, D), jnp.float32)
    pe = pe.at[:, 0::2].set(jnp.sin(pos * div))
    pe = pe.at[:, 1::2].set(jnp.cos(pos * div))
    return pe


def cross_transformer_block(x, video, layer_params, nhead,
                            use_positional_encoding=True, tile_q=None):
    """x (audio), video: [B, T, D].  layer_params[0] -> cross layer,
    layer_params[1:] -> causal self-attention encoder layers (fused into one call)."""
    if use_positional_encoding:
        pe = sinusoidal_pe(x.shape[1], x.shape[2])[None]
        x = x + pe
        video = video + pe
    h = _cross_layer_call(x, video, layer_params[0], nhead, tile_q)
    if len(layer_params) > 1:
        h = _self_stack_call(h, layer_params[1:], nhead, tile_q)
    return h


# ------------------------- deterministic parameter init -----------------------

def init_layer_params(key, D, F, nhead):
    ks = jax.random.split(key, 8)
    s = 0.1
    f32, bf16 = jnp.float32, jnp.bfloat16
    hd = D // nhead
    scale = 1.0 / math.sqrt(hd)          # folded into the Q projection at init time
    wq = jax.random.normal(ks[0], (D, D)) * s
    bq = jax.random.normal(ks[3], (1, D)) * s
    return dict(
        ln1_g=jnp.ones((1, D), f32), ln1_b=jnp.zeros((1, D), f32),
        ln2_g=jnp.ones((1, D), f32), ln2_b=jnp.zeros((1, D), f32),
        wq=(wq * scale).astype(bf16),
        bq=(bq * scale).astype(f32),
        wk=(jax.random.normal(ks[1], (D, D)) * s).astype(bf16),
        bk=(jax.random.normal(ks[4], (1, D)) * s).astype(f32),
        wv=(jax.random.normal(ks[2], (D, D)) * s).astype(bf16),
        bv=jnp.zeros((1, D), f32),
        wo=(jax.random.normal(ks[5], (D, D)) * s).astype(bf16),
        bo=jnp.zeros((1, D), f32),
        w1=(jax.random.normal(ks[6], (D, F)) * s).astype(bf16),
        b1=jnp.zeros((1, F), f32),
        w2=(jax.random.normal(ks[7], (F, D)) * s).astype(bf16),
        b2=jnp.zeros((1, D), f32),
    )


# ------------------------------ plain-JAX reference ---------------------------
# Mirrors the kernel numerics (bf16 matmul operands, f32 accumulation / LN / softmax,
# scale folded into wq/bq) so the comparison isolates kernel bugs, not dtype policy.

def _mm(a, b):
    return jnp.dot(a.astype(jnp.bfloat16), b.astype(jnp.bfloat16),
                   preferred_element_type=jnp.float32)


def _ref_ln(x, g, b, eps=1e-5):
    mu = jnp.mean(x, -1, keepdims=True)
    xc = x - mu
    var = jnp.mean(xc * xc, -1, keepdims=True)
    return xc * jax.lax.rsqrt(var + eps) * g + b


def _ref_mha(q_in, kv_in, p, nhead):
    T, D = q_in.shape
    hd = D // nhead
    q = _mm(q_in, p["wq"]) + p["bq"]
    k = _mm(kv_in, p["wk"]) + p["bk"]
    v = _mm(kv_in, p["wv"]) + p["bv"]
    qh = q.reshape(T, nhead, hd).transpose(1, 0, 2)
    kh = k.reshape(T, nhead, hd).transpose(1, 0, 2)
    vh = v.reshape(T, nhead, hd).transpose(1, 0, 2)
    s = jnp.einsum('hqd,hkd->hqk', qh.astype(jnp.bfloat16), kh.astype(jnp.bfloat16),
                   preferred_element_type=jnp.float32)
    mask = jnp.tril(jnp.ones((T, T), bool))[None]
    s = jnp.where(mask, s, NEG_INF)
    pr = jax.nn.softmax(s, axis=-1)
    o = jnp.einsum('hqk,hkd->hqd', pr.astype(jnp.bfloat16), vh.astype(jnp.bfloat16),
                   preferred_element_type=jnp.float32)
    o = o.transpose(1, 0, 2).reshape(T, D)
    return _mm(o, p["wo"]) + p["bo"]


def _ref_ffn(x, p):
    h = jnp.maximum(_mm(x, p["w1"]) + p["b1"], 0.0)
    return _mm(h, p["w2"]) + p["b2"]


def reference_block(x, video, layer_params, nhead):
    pe = sinusoidal_pe(x.shape[1], x.shape[2])[None]
    x = x + pe
    video = video + pe

    def cross(a, v, p):
        an = _ref_ln(a, p["ln1_g"], p["ln1_b"])
        vn = _ref_ln(v, p["ln1_g"], p["ln1_b"])
        h = a + v + _ref_mha(vn, an, p, nhead)
        hn = _ref_ln(h, p["ln2_g"], p["ln2_b"])
        return h + _ref_ffn(hn, p)

    def selfl(xx, p):
        xn = _ref_ln(xx, p["ln1_g"], p["ln1_b"])
        h = xx + _ref_mha(xn, xn, p, nhead)
        hn = _ref_ln(h, p["ln2_g"], p["ln2_b"])
        return h + _ref_ffn(hn, p)

    out = jnp.stack([cross(x[b], video[b], layer_params[0]) for b in range(x.shape[0])])
    for p in layer_params[1:]:
        out = jnp.stack([selfl(out[b], p) for b in range(out.shape[0])])
    return out


# ----------------------------------- main --------------------------------------

if __name__ == "__main__":
    B, T, D, NHEAD, D_FFN, NUM_LAYERS = 2, 8, 32, 4, 64, 2

    key = jax.random.PRNGKey(0)
    kx, kv, kp, kx2, kv2, kp2 = jax.random.split(key, 6)
    x = jax.random.normal(kx, (B, T, D), jnp.float32)       # audio  [B, T, D]
    video = jax.random.normal(kv, (B, T, D), jnp.float32)   # video  [B, T, D]
    layer_params = [init_layer_params(k, D, D_FFN, NHEAD)
                    for k in jax.random.split(kp, NUM_LAYERS)]

    out = jax.block_until_ready(cross_transformer_block(x, video, layer_params, NHEAD))
    ref = reference_block(x, video, layer_params, NHEAD)
    assert out.shape == (B, T, D)
    err = float(jnp.max(jnp.abs(out - ref)))
    assert err < 2e-2, f"mismatch vs JAX reference: {err}"

    # Multi-block / multi-layer path: 4 query blocks and 2 fused self layers (exercises
    # incremental KV fill, online-softmax rescaling across blocks, and the VMEM-resident
    # activation slab carried across the fused layer axis).
    B2, T2, LAYERS2 = 1, 32, 3
    x2 = jax.random.normal(kx2, (B2, T2, D), jnp.float32)
    v2 = jax.random.normal(kv2, (B2, T2, D), jnp.float32)
    params2 = [init_layer_params(k, D, D_FFN, NHEAD)
               for k in jax.random.split(kp2, LAYERS2)]
    out2 = jax.block_until_ready(
        cross_transformer_block(x2, v2, params2, NHEAD, tile_q=8))
    ref2 = reference_block(x2, v2, params2, NHEAD)
    err2 = float(jnp.max(jnp.abs(out2 - ref2)))
    assert err2 < 2e-2, f"tiled-path mismatch vs JAX reference: {err2}"

    print("KERNEL_OK")
</pallas_src>

<mosaic_0001>
module attributes {stable_mosaic.version = 11 : i64} {
  func.func @cross_layer_kernel(%arg0: i32, %arg1: i32, %arg2: memref<1x8x32xf32, #tpu.memory_space<vmem>>, %arg3: memref<1x8x32xf32, #tpu.memory_space<vmem>>, %arg4: memref<1x32xf32, #tpu.memory_space<vmem>>, %arg5: memref<1x32xf32, #tpu.memory_space<vmem>>, %arg6: memref<1x32xf32, #tpu.memory_space<vmem>>, %arg7: memref<1x32xf32, #tpu.memory_space<vmem>>, %arg8: memref<32x32xbf16, #tpu.memory_space<vmem>>, %arg9: memref<1x32xf32, #tpu.memory_space<vmem>>, %arg10: memref<32x32xbf16, #tpu.memory_space<vmem>>, %arg11: memref<1x32xf32, #tpu.memory_space<vmem>>, %arg12: memref<32x32xbf16, #tpu.memory_space<vmem>>, %arg13: memref<1x32xf32, #tpu.memory_space<vmem>>, %arg14: memref<32x32xbf16, #tpu.memory_space<vmem>>, %arg15: memref<1x32xf32, #tpu.memory_space<vmem>>, %arg16: memref<32x64xbf16, #tpu.memory_space<vmem>>, %arg17: memref<1x64xf32, #tpu.memory_space<vmem>>, %arg18: memref<64x32xbf16, #tpu.memory_space<vmem>>, %arg19: memref<1x32xf32, #tpu.memory_space<vmem>>, %arg20: memref<1x8x32xf32, #tpu.memory_space<vmem>>, %arg21: memref<4x8x8xbf16, #tpu.memory_space<vmem>>, %arg22: memref<4x8x8xbf16, #tpu.memory_space<vmem>>, %arg23: memref<4x8x8xbf16, #tpu.memory_space<vmem>>, %arg24: memref<4x8x1xf32, #tpu.memory_space<vmem>>, %arg25: memref<4x8x1xf32, #tpu.memory_space<vmem>>, %arg26: memref<4x8x8xf32, #tpu.memory_space<vmem>>) attributes {dimension_semantics = [#tpu.dimension_semantics<parallel>, #tpu.dimension_semantics<arbitrary>], iteration_bounds = array<i64: 2, 1>, scalar_prefetch = 0 : i64, scratch_operands = 6 : i64, tpu.core_type = #tpu.core_type<tc>, window_params = [{transform_indices = @transform_0, window_bounds = array<i64: 1, 8, 32>}, {transform_indices = @transform_1, window_bounds = array<i64: 1, 8, 32>}, {pipeline_mode = #tpu.pipeline_mode<synchronous>, transform_indices = @transform_2, window_bounds = array<i64: 1, 32>}, {pipeline_mode = #tpu.pipeline_mode<synchronous>, transform_indices = @transform_3, window_bounds = array<i64: 1, 32>}, {pipeline_mode = #tpu.pipeline_mode<synchronous>, transform_indices = @transform_4, window_bounds = array<i64: 1, 32>}, {pipeline_mode = #tpu.pipeline_mode<synchronous>, transform_indices = @transform_5, window_bounds = array<i64: 1, 32>}, {pipeline_mode = #tpu.pipeline_mode<synchronous>, transform_indices = @transform_6, window_bounds = array<i64: 32, 32>}, {pipeline_mode = #tpu.pipeline_mode<synchronous>, transform_indices = @transform_7, window_bounds = array<i64: 1, 32>}, {pipeline_mode = #tpu.pipeline_mode<synchronous>, transform_indices = @transform_8, window_bounds = array<i64: 32, 32>}, {pipeline_mode = #tpu.pipeline_mode<synchronous>, transform_indices = @transform_9, window_bounds = array<i64: 1, 32>}, {pipeline_mode = #tpu.pipeline_mode<synchronous>, transform_indices = @transform_10, window_bounds = array<i64: 32, 32>}, {pipeline_mode = #tpu.pipeline_mode<synchronous>, transform_indices = @transform_11, window_bounds = array<i64: 1, 32>}, {pipeline_mode = #tpu.pipeline_mode<synchronous>, transform_indices = @transform_12, window_bounds = array<i64: 32, 32>}, {pipeline_mode = #tpu.pipeline_mode<synchronous>, transform_indices = @transform_13, window_bounds = array<i64: 1, 32>}, {pipeline_mode = #tpu.pipeline_mode<synchronous>, transform_indices = @transform_14, window_bounds = array<i64: 32, 64>}, {pipeline_mode = #tpu.pipeline_mode<synchronous>, transform_indices = @transform_15, window_bounds = array<i64: 1, 64>}, {pipeline_mode = #tpu.pipeline_mode<synchronous>, transform_indices = @transform_16, window_bounds = array<i64: 64, 32>}, {pipeline_mode = #tpu.pipeline_mode<synchronous>, transform_indices = @transform_17, window_bounds = array<i64: 1, 32>}, {transform_indices = @transform_18, window_bounds = array<i64: 1, 8, 32>}]} {
    %c0 = arith.constant 0 : index
    %c0_0 = arith.constant 0 : index
    %c0_1 = arith.constant 0 : index
    %0 = vector.load %arg2[%c0, %c0_0, %c0_1] : memref<1x8x32xf32, #tpu.memory_space<vmem>>, vector<1x8x32xf32>
    %1 = vector.shape_cast %0 : vector<1x8x32xf32> to vector<8x32xf32>
    %c0_2 = arith.constant 0 : index
    %c0_3 = arith.constant 0 : index
    %c0_4 = arith.constant 0 : index
    %2 = vector.load %arg3[%c0_2, %c0_3, %c0_4] : memref<1x8x32xf32, #tpu.memory_space<vmem>>, vector<1x8x32xf32>
    %3 = vector.shape_cast %2 : vector<1x8x32xf32> to vector<8x32xf32>
    %c0_5 = arith.constant 0 : index
    %c0_6 = arith.constant 0 : index
    %4 = vector.load %arg4[%c0_5, %c0_6] : memref<1x32xf32, #tpu.memory_space<vmem>>, vector<1x32xf32>
    %c0_7 = arith.constant 0 : index
    %c0_8 = arith.constant 0 : index
    %5 = vector.load %arg5[%c0_7, %c0_8] : memref<1x32xf32, #tpu.memory_space<vmem>>, vector<1x32xf32>
    %c0_9 = arith.constant 0 : index
    %c0_10 = arith.constant 0 : index
    %6 = vector.load %arg6[%c0_9, %c0_10] : memref<1x32xf32, #tpu.memory_space<vmem>>, vector<1x32xf32>
    %c0_11 = arith.constant 0 : index
    %c0_12 = arith.constant 0 : index
    %7 = vector.load %arg7[%c0_11, %c0_12] : memref<1x32xf32, #tpu.memory_space<vmem>>, vector<1x32xf32>
    %c0_13 = arith.constant 0 : index
    %c0_14 = arith.constant 0 : index
    %8 = vector.load %arg8[%c0_13, %c0_14] : memref<32x32xbf16, #tpu.memory_space<vmem>>, vector<32x32xbf16>
    %c0_15 = arith.constant 0 : index
    %c0_16 = arith.constant 0 : index
    %9 = vector.load %arg9[%c0_15, %c0_16] : memref<1x32xf32, #tpu.memory_space<vmem>>, vector<1x32xf32>
    %c0_17 = arith.constant 0 : index
    %c0_18 = arith.constant 0 : index
    %10 = vector.load %arg10[%c0_17, %c0_18] : memref<32x32xbf16, #tpu.memory_space<vmem>>, vector<32x32xbf16>
    %c0_19 = arith.constant 0 : index
    %c0_20 = arith.constant 0 : index
    %11 = vector.load %arg11[%c0_19, %c0_20] : memref<1x32xf32, #tpu.memory_space<vmem>>, vector<1x32xf32>
    %c0_21 = arith.constant 0 : index
    %c0_22 = arith.constant 0 : index
    %12 = vector.load %arg12[%c0_21, %c0_22] : memref<32x32xbf16, #tpu.memory_space<vmem>>, vector<32x32xbf16>
    %c0_23 = arith.constant 0 : index
    %c0_24 = arith.constant 0 : index
    %13 = vector.load %arg13[%c0_23, %c0_24] : memref<1x32xf32, #tpu.memory_space<vmem>>, vector<1x32xf32>
    %c0_25 = arith.constant 0 : index
    %c0_26 = arith.constant 0 : index
    %14 = vector.load %arg14[%c0_25, %c0_26] : memref<32x32xbf16, #tpu.memory_space<vmem>>, vector<32x32xbf16>
    %c0_27 = arith.constant 0 : index
    %c0_28 = arith.constant 0 : index
    %15 = vector.load %arg15[%c0_27, %c0_28] : memref<1x32xf32, #tpu.memory_space<vmem>>, vector<1x32xf32>
    %c0_29 = arith.constant 0 : index
    %c0_30 = arith.constant 0 : index
    %16 = vector.load %arg16[%c0_29, %c0_30] : memref<32x64xbf16, #tpu.memory_space<vmem>>, vector<32x64xbf16>
    %c0_31 = arith.constant 0 : index
    %c0_32 = arith.constant 0 : index
    %17 = vector.load %arg17[%c0_31, %c0_32] : memref<1x64xf32, #tpu.memory_space<vmem>>, vector<1x64xf32>
    %c0_33 = arith.constant 0 : index
    %c0_34 = arith.constant 0 : index
    %18 = vector.load %arg18[%c0_33, %c0_34] : memref<64x32xbf16, #tpu.memory_space<vmem>>, vector<64x32xbf16>
    %c0_35 = arith.constant 0 : index
    %c0_36 = arith.constant 0 : index
    %19 = vector.load %arg19[%c0_35, %c0_36] : memref<1x32xf32, #tpu.memory_space<vmem>>, vector<1x32xf32>
    %20 = arith.addf %1, %3 : vector<8x32xf32>
    %cst = arith.constant dense<0.000000e+00> : vector<8xf32>
    %21 = vector.multi_reduction <add>, %1, %cst [1] : vector<8x32xf32> to vector<8xf32>
    %22 = vector.shape_cast %21 : vector<8xf32> to vector<8x1xf32>
    %cst_37 = arith.constant 3.200000e+01 : f32
    %23 = vector.broadcast %cst_37 : f32 to vector<8x1xf32>
    %24 = arith.divf %22, %23 : vector<8x1xf32>
    %25 = vector.broadcast %24 : vector<8x1xf32> to vector<8x32xf32>
    %26 = arith.subf %1, %25 : vector<8x32xf32>
    %27 = arith.mulf %26, %26 : vector<8x32xf32>
    %cst_38 = arith.constant dense<0.000000e+00> : vector<8xf32>
    %28 = vector.multi_reduction <add>, %27, %cst_38 [1] : vector<8x32xf32> to vector<8xf32>
    %29 = vector.shape_cast %28 : vector<8xf32> to vector<8x1xf32>
    %cst_39 = arith.constant 3.200000e+01 : f32
    %30 = vector.broadcast %cst_39 : f32 to vector<8x1xf32>
    %31 = arith.divf %29, %30 : vector<8x1xf32>
    %cst_40 = arith.constant 9.99999974E-6 : f32
    %32 = vector.broadcast %cst_40 : f32 to vector<8x1xf32>
    %33 = arith.addf %31, %32 : vector<8x1xf32>
    %34 = math.rsqrt %33 : vector<8x1xf32>
    %35 = vector.broadcast %34 : vector<8x1xf32> to vector<8x32xf32>
    %36 = arith.mulf %26, %35 : vector<8x32xf32>
    %37 = vector.broadcast %4 : vector<1x32xf32> to vector<8x32xf32>
    %38 = arith.mulf %36, %37 : vector<8x32xf32>
    %39 = vector.broadcast %5 : vector<1x32xf32> to vector<8x32xf32>
    %40 = arith.addf %38, %39 : vector<8x32xf32>
    %41 = arith.truncf %40 : vector<8x32xf32> to vector<8x32xbf16>
    %cst_41 = arith.constant dense<0.000000e+00> : vector<8x32xf32>
    %42 = tpu.matmul %41, %10, %cst_41 {dimension_numbers = #tpu.dot_dimension_numbers<[1], [0], [0], [1], [0, 0, 1, 1], [], []>} : vector<8x32xbf16>, vector<32x32xbf16>, vector<8x32xf32> -> vector<8x32xf32>
    %43 = vector.broadcast %11 : vector<1x32xf32> to vector<8x32xf32>
    %44 = arith.addf %42, %43 : vector<8x32xf32>
    %cst_42 = arith.constant dense<0.000000e+00> : vector<8x32xf32>
    %45 = tpu.matmul %41, %12, %cst_42 {dimension_numbers = #tpu.dot_dimension_numbers<[1], [0], [0], [1], [0, 0, 1, 1], [], []>} : vector<8x32xbf16>, vector<32x32xbf16>, vector<8x32xf32> -> vector<8x32xf32>
    %46 = vector.broadcast %13 : vector<1x32xf32> to vector<8x32xf32>
    %47 = arith.addf %45, %46 : vector<8x32xf32>
    %c8_i32 = arith.constant 8 : i32
    %48 = arith.muli %arg1, %c8_i32 : i32
    %49 = tpu.assume_multiple %48, 8 : i32
    %50 = vector.extract_strided_slice %44 {offsets = [0, 0], sizes = [8, 8], strides = [1, 1]} : vector<8x32xf32> to vector<8x8xf32>
    %51 = arith.truncf %50 : vector<8x8xf32> to vector<8x8xbf16>
    %c0_43 = arith.constant 0 : index
    %52 = arith.index_cast %49 : i32 to index
    %c0_44 = arith.constant 0 : index
    %53 = vector.load %arg21[%c0_43, %52, %c0_44] : memref<4x8x8xbf16, #tpu.memory_space<vmem>>, vector<1x8x8xbf16>
    %54 = vector.shape_cast %53 : vector<1x8x8xbf16> to vector<8x8xbf16>
    %55 = vector.shape_cast %51 : vector<8x8xbf16> to vector<1x8x8xbf16>
    tpu.vector_store %arg21[%c0_43, %52, %c0_44], %55 {strides = array<i32>} : memref<4x8x8xbf16, #tpu.memory_space<vmem>>, vector<1x8x8xbf16>,
    %56 = vector.extract_strided_slice %44 {offsets = [0, 8], sizes = [8, 8], strides = [1, 1]} : vector<8x32xf32> to vector<8x8xf32>
    %57 = arith.truncf %56 : vector<8x8xf32> to vector<8x8xbf16>
    %c1 = arith.constant 1 : index
    %58 = arith.index_cast %49 : i32 to index
    %c0_45 = arith.constant 0 : index
    %59 = vector.load %arg21[%c1, %58, %c0_45] : memref<4x8x8xbf16, #tpu.memory_space<vmem>>, vector<1x8x8xbf16>
    %60 = vector.shape_cast %59 : vector<1x8x8xbf16> to vector<8x8xbf16>
    %61 = vector.shape_cast %57 : vector<8x8xbf16> to vector<1x8x8xbf16>
    tpu.vector_store %arg21[%c1, %58, %c0_45], %61 {strides = array<i32>} : memref<4x8x8xbf16, #tpu.memory_space<vmem>>, vector<1x8x8xbf16>,
    %62 = vector.extract_strided_slice %44 {offsets = [0, 16], sizes = [8, 8], strides = [1, 1]} : vector<8x32xf32> to vector<8x8xf32>
    %63 = arith.truncf %62 : vector<8x8xf32> to vector<8x8xbf16>
    %c2 = arith.constant 2 : index
    %64 = arith.index_cast %49 : i32 to index
    %c0_46 = arith.constant 0 : index
    %65 = vector.load %arg21[%c2, %64, %c0_46] : memref<4x8x8xbf16, #tpu.memory_space<vmem>>, vector<1x8x8xbf16>
    %66 = vector.shape_cast %65 : vector<1x8x8xbf16> to vector<8x8xbf16>
    %67 = vector.shape_cast %63 : vector<8x8xbf16> to vector<1x8x8xbf16>
    tpu.vector_store %arg21[%c2, %64, %c0_46], %67 {strides = array<i32>} : memref<4x8x8xbf16, #tpu.memory_space<vmem>>, vector<1x8x8xbf16>,
    %68 = vector.extract_strided_slice %44 {offsets = [0, 24], sizes = [8, 8], strides = [1, 1]} : vector<8x32xf32> to vector<8x8xf32>
    %69 = arith.truncf %68 : vector<8x8xf32> to vector<8x8xbf16>
    %c3 = arith.constant 3 : index
    %70 = arith.index_cast %49 : i32 to index
    %c0_47 = arith.constant 0 : index
    %71 = vector.load %arg21[%c3, %70, %c0_47] : memref<4x8x8xbf16, #tpu.memory_space<vmem>>, vector<1x8x8xbf16>
    %72 = vector.shape_cast %71 : vector<1x8x8xbf16> to vector<8x8xbf16>
    %73 = vector.shape_cast %69 : vector<8x8xbf16> to vector<1x8x8xbf16>
    tpu.vector_store %arg21[%c3, %70, %c0_47], %73 {strides = array<i32>} : memref<4x8x8xbf16, #tpu.memory_space<vmem>>, vector<1x8x8xbf16>,
    %c8_i32_48 = arith.constant 8 : i32
    %74 = arith.muli %arg1, %c8_i32_48 : i32
    %75 = tpu.assume_multiple %74, 8 : i32
    %76 = vector.extract_strided_slice %47 {offsets = [0, 0], sizes = [8, 8], strides = [1, 1]} : vector<8x32xf32> to vector<8x8xf32>
    %77 = arith.truncf %76 : vector<8x8xf32> to vector<8x8xbf16>
    %c0_49 = arith.constant 0 : index
    %78 = arith.index_cast %75 : i32 to index
    %c0_50 = arith.constant 0 : index
    %79 = vector.load %arg22[%c0_49, %78, %c0_50] : memref<4x8x8xbf16, #tpu.memory_space<vmem>>, vector<1x8x8xbf16>
    %80 = vector.shape_cast %79 : vector<1x8x8xbf16> to vector<8x8xbf16>
    %81 = vector.shape_cast %77 : vector<8x8xbf16> to vector<1x8x8xbf16>
    tpu.vector_store %arg22[%c0_49, %78, %c0_50], %81 {strides = array<i32>} : memref<4x8x8xbf16, #tpu.memory_space<vmem>>, vector<1x8x8xbf16>,
    %82 = vector.extract_strided_slice %47 {offsets = [0, 8], sizes = [8, 8], strides = [1, 1]} : vector<8x32xf32> to vector<8x8xf32>
    %83 = arith.truncf %82 : vector<8x8xf32> to vector<8x8xbf16>
    %c1_51 = arith.constant 1 : index
    %84 = arith.index_cast %75 : i32 to index
    %c0_52 = arith.constant 0 : index
    %85 = vector.load %arg22[%c1_51, %84, %c0_52] : memref<4x8x8xbf16, #tpu.memory_space<vmem>>, vector<1x8x8xbf16>
    %86 = vector.shape_cast %85 : vector<1x8x8xbf16> to vector<8x8xbf16>
    %87 = vector.shape_cast %83 : vector<8x8xbf16> to vector<1x8x8xbf16>
    tpu.vector_store %arg22[%c1_51, %84, %c0_52], %87 {strides = array<i32>} : memref<4x8x8xbf16, #tpu.memory_space<vmem>>, vector<1x8x8xbf16>,
    %88 = vector.extract_strided_slice %47 {offsets = [0, 16], sizes = [8, 8], strides = [1, 1]} : vector<8x32xf32> to vector<8x8xf32>
    %89 = arith.truncf %88 : vector<8x8xf32> to vector<8x8xbf16>
    %c2_53 = arith.constant 2 : index
    %90 = arith.index_cast %75 : i32 to index
    %c0_54 = arith.constant 0 : index
    %91 = vector.load %arg22[%c2_53, %90, %c0_54] : memref<4x8x8xbf16, #tpu.memory_space<vmem>>, vector<1x8x8xbf16>
    %92 = vector.shape_cast %91 : vector<1x8x8xbf16> to vector<8x8xbf16>
    %93 = vector.shape_cast %89 : vector<8x8xbf16> to vector<1x8x8xbf16>
    tpu.vector_store %arg22[%c2_53, %90, %c0_54], %93 {strides = array<i32>} : memref<4x8x8xbf16, #tpu.memory_space<vmem>>, vector<1x8x8xbf16>,
    %94 = vector.extract_strided_slice %47 {offsets = [0, 24], sizes = [8, 8], strides = [1, 1]} : vector<8x32xf32> to vector<8x8xf32>
    %95 = arith.truncf %94 : vector<8x8xf32> to vector<8x8xbf16>
    %c3_55 = arith.constant 3 : index
    %96 = arith.index_cast %75 : i32 to index
    %c0_56 = arith.constant 0 : index
    %97 = vector.load %arg22[%c3_55, %96, %c0_56] : memref<4x8x8xbf16, #tpu.memory_space<vmem>>, vector<1x8x8xbf16>
    %98 = vector.shape_cast %97 : vector<1x8x8xbf16> to vector<8x8xbf16>
    %99 = vector.shape_cast %95 : vector<8x8xbf16> to vector<1x8x8xbf16>
    tpu.vector_store %arg22[%c3_55, %96, %c0_56], %99 {strides = array<i32>} : memref<4x8x8xbf16, #tpu.memory_space<vmem>>, vector<1x8x8xbf16>,
    %cst_57 = arith.constant dense<0.000000e+00> : vector<8xf32>
    %100 = vector.multi_reduction <add>, %3, %cst_57 [1] : vector<8x32xf32> to vector<8xf32>
    %101 = vector.shape_cast %100 : vector<8xf32> to vector<8x1xf32>
    %cst_58 = arith.constant 3.200000e+01 : f32
    %102 = vector.broadcast %cst_58 : f32 to vector<8x1xf32>
    %103 = arith.divf %101, %102 : vector<8x1xf32>
    %104 = vector.broadcast %103 : vector<8x1xf32> to vector<8x32xf32>
    %105 = arith.subf %3, %104 : vector<8x32xf32>
    %106 = arith.mulf %105, %105 : vector<8x32xf32>
    %cst_59 = arith.constant dense<0.000000e+00> : vector<8xf32>
    %107 = vector.multi_reduction <add>, %106, %cst_59 [1] : vector<8x32xf32> to vector<8xf32>
    %108 = vector.shape_cast %107 : vector<8xf32> to vector<8x1xf32>
    %cst_60 = arith.constant 3.200000e+01 : f32
    %109 = vector.broadcast %cst_60 : f32 to vector<8x1xf32>
    %110 = arith.divf %108, %109 : vector<8x1xf32>
    %cst_61 = arith.constant 9.99999974E-6 : f32
    %111 = vector.broadcast %cst_61 : f32 to vector<8x1xf32>
    %112 = arith.addf %110, %111 : vector<8x1xf32>
    %113 = math.rsqrt %112 : vector<8x1xf32>
    %114 = vector.broadcast %113 : vector<8x1xf32> to vector<8x32xf32>
    %115 = arith.mulf %105, %114 : vector<8x32xf32>
    %116 = vector.broadcast %4 : vector<1x32xf32> to vector<8x32xf32>
    %117 = arith.mulf %115, %116 : vector<8x32xf32>
    %118 = vector.broadcast %5 : vector<1x32xf32> to vector<8x32xf32>
    %119 = arith.addf %117, %118 : vector<8x32xf32>
    %120 = arith.truncf %119 : vector<8x32xf32> to vector<8x32xbf16>
    %cst_62 = arith.constant dense<0.000000e+00> : vector<8x32xf32>
    %121 = tpu.matmul %120, %8, %cst_62 {dimension_numbers = #tpu.dot_dimension_numbers<[1], [0], [0], [1], [0, 0, 1, 1], [], []>} : vector<8x32xbf16>, vector<32x32xbf16>, vector<8x32xf32> -> vector<8x32xf32>
    %122 = vector.broadcast %9 : vector<1x32xf32> to vector<8x32xf32>
    %123 = arith.addf %121, %122 : vector<8x32xf32>
    %124 = vector.extract_strided_slice %123 {offsets = [0, 0], sizes = [8, 8], strides = [1, 1]} : vector<8x32xf32> to vector<8x8xf32>
    %125 = arith.truncf %124 : vector<8x8xf32> to vector<8x8xbf16>
    %c0_63 = arith.constant 0 : index
    %c0_64 = arith.constant 0 : index
    %c0_65 = arith.constant 0 : index
    %126 = vector.load %arg23[%c0_63, %c0_64, %c0_65] : memref<4x8x8xbf16, #tpu.memory_space<vmem>>, vector<1x8x8xbf16>
    %127 = vector.shape_cast %126 : vector<1x8x8xbf16> to vector<8x8xbf16>
    %128 = vector.shape_cast %125 : vector<8x8xbf16> to vector<1x8x8xbf16>
    tpu.vector_store %arg23[%c0_63, %c0_64, %c0_65], %128 {strides = array<i32>} : memref<4x8x8xbf16, #tpu.memory_space<vmem>>, vector<1x8x8xbf16>,
    %129 = vector.extract_strided_slice %123 {offsets = [0, 8], sizes = [8, 8], strides = [1, 1]} : vector<8x32xf32> to vector<8x8xf32>
    %130 = arith.truncf %129 : vector<8x8xf32> to vector<8x8xbf16>
    %c1_66 = arith.constant 1 : index
    %c0_67 = arith.constant 0 : index
    %c0_68 = arith.constant 0 : index
    %131 = vector.load %arg23[%c1_66, %c0_67, %c0_68] : memref<4x8x8xbf16, #tpu.memory_space<vmem>>, vector<1x8x8xbf16>
    %132 = vector.shape_cast %131 : vector<1x8x8xbf16> to vector<8x8xbf16>
    %133 = vector.shape_cast %130 : vector<8x8xbf16> to vector<1x8x8xbf16>
    tpu.vector_store %arg23[%c1_66, %c0_67, %c0_68], %133 {strides = array<i32>} : memref<4x8x8xbf16, #tpu.memory_space<vmem>>, vector<1x8x8xbf16>,
    %134 = vector.extract_strided_slice %123 {offsets = [0, 16], sizes = [8, 8], strides = [1, 1]} : vector<8x32xf32> to vector<8x8xf32>
    %135 = arith.truncf %134 : vector<8x8xf32> to vector<8x8xbf16>
    %c2_69 = arith.constant 2 : index
    %c0_70 = arith.constant 0 : index
    %c0_71 = arith.constant 0 : index
    %136 = vector.load %arg23[%c2_69, %c0_70, %c0_71] : memref<4x8x8xbf16, #tpu.memory_space<vmem>>, vector<1x8x8xbf16>
    %137 = vector.shape_cast %136 : vector<1x8x8xbf16> to vector<8x8xbf16>
    %138 = vector.shape_cast %135 : vector<8x8xbf16> to vector<1x8x8xbf16>
    tpu.vector_store %arg23[%c2_69, %c0_70, %c0_71], %138 {strides = array<i32>} : memref<4x8x8xbf16, #tpu.memory_space<vmem>>, vector<1x8x8xbf16>,
    %139 = vector.extract_strided_slice %123 {offsets = [0, 24], sizes = [8, 8], strides = [1, 1]} : vector<8x32xf32> to vector<8x8xf32>
    %140 = arith.truncf %139 : vector<8x8xf32> to vector<8x8xbf16>
    %c3_72 = arith.constant 3 : index
    %c0_73 = arith.constant 0 : index
    %c0_74 = arith.constant 0 : index
    %141 = vector.load %arg23[%c3_72, %c0_73, %c0_74] : memref<4x8x8xbf16, #tpu.memory_space<vmem>>, vector<1x8x8xbf16>
    %142 = vector.shape_cast %141 : vector<1x8x8xbf16> to vector<8x8xbf16>
    %143 = vector.shape_cast %140 : vector<8x8xbf16> to vector<1x8x8xbf16>
    tpu.vector_store %arg23[%c3_72, %c0_73, %c0_74], %143 {strides = array<i32>} : memref<4x8x8xbf16, #tpu.memory_space<vmem>>, vector<1x8x8xbf16>,
    %c0_75 = arith.constant 0 : index
    %c0_76 = arith.constant 0 : index
    %c0_77 = arith.constant 0 : index
    %144 = vector.load %arg23[%c0_75, %c0_76, %c0_77] : memref<4x8x8xbf16, #tpu.memory_space<vmem>>, vector<4x8x8xbf16>
    %cst_78 = arith.constant -1.000000e+30 : f32
    %145 = vector.broadcast %cst_78 : f32 to vector<4x8x1xf32>
    %c0_79 = arith.constant 0 : index
    %c0_80 = arith.constant 0 : index
    %c0_81 = arith.constant 0 : index
    %146 = vector.load %arg24[%c0_79, %c0_80, %c0_81] : memref<4x8x1xf32, #tpu.memory_space<vmem>>, vector<4x8x1xf32>
    tpu.vector_store %arg24[%c0_79, %c0_80, %c0_81], %145 {strides = array<i32>} : memref<4x8x1xf32, #tpu.memory_space<vmem>>, vector<4x8x1xf32>,
    %cst_82 = arith.constant 0.000000e+00 : f32
    %147 = vector.broadcast %cst_82 : f32 to vector<4x8x1xf32>
    %c0_83 = arith.constant 0 : index
    %c0_84 = arith.constant 0 : index
    %c0_85 = arith.constant 0 : index
    %148 = vector.load %arg25[%c0_83, %c0_84, %c0_85] : memref<4x8x1xf32, #tpu.memory_space<vmem>>, vector<4x8x1xf32>
    tpu.vector_store %arg25[%c0_83, %c0_84, %c0_85], %147 {strides = array<i32>} : memref<4x8x1xf32, #tpu.memory_space<vmem>>, vector<4x8x1xf32>,
    %cst_86 = arith.constant 0.000000e+00 : f32
    %149 = vector.broadcast %cst_86 : f32 to vector<4x8x8xf32>
    %c0_87 = arith.constant 0 : index
    %c0_88 = arith.constant 0 : index
    %c0_89 = arith.constant 0 : index
    %150 = vector.load %arg26[%c0_87, %c0_88, %c0_89] : memref<4x8x8xf32, #tpu.memory_space<vmem>>, vector<4x8x8xf32>
    tpu.vector_store %arg26[%c0_87, %c0_88, %c0_89], %149 {strides = array<i32>} : memref<4x8x8xf32, #tpu.memory_space<vmem>>, vector<4x8x8xf32>,
    %c0_i32 = arith.constant 0 : i32
    %c0_i32_90 = arith.constant 0 : i32
    %151 = arith.subi %arg1, %c0_i32_90 : i32
    %152 = arith.addi %c0_i32_90, %151 : i32
    %c1_i32 = arith.constant 1 : i32
    scf.for %arg27 = %c0_i32_90 to %152 step %c1_i32  : i32 {
      %c8_i32_138 = arith.constant 8 : i32
      %244 = arith.muli %arg27, %c8_i32_138 : i32
      %245 = tpu.assume_multiple %244, 8 : i32
      %c0_139 = arith.constant 0 : index
      %246 = arith.index_cast %245 : i32 to index
      %c0_140 = arith.constant 0 : index
      %247 = vector.load %arg21[%c0_139, %246, %c0_140] : memref<4x8x8xbf16, #tpu.memory_space<vmem>>, vector<4x8x8xbf16>
      %c0_141 = arith.constant 0 : index
      %248 = arith.index_cast %245 : i32 to index
      %c0_142 = arith.constant 0 : index
      %249 = vector.load %arg22[%c0_141, %248, %c0_142] : memref<4x8x8xbf16, #tpu.memory_space<vmem>>, vector<4x8x8xbf16>
      "tpu.trace_start"() <{level = 10 : i32, message = "hqd,hkd->hqk"}> : () -> ()
      %cst_143 = arith.constant dense<0.000000e+00> : vector<4x8x8xf32>
      %250 = tpu.matmul %144, %247, %cst_143 {dimension_numbers = #tpu.dot_dimension_numbers<[2], [2], [1], [1], [0, 0, 0, 1, 1, 1], [0], [0]>} : vector<4x8x8xbf16>, vector<4x8x8xbf16>, vector<4x8x8xf32> -> vector<4x8x8xf32>
      "tpu.trace_stop"() : () -> ()
      %c0_144 = arith.constant 0 : index
      %c0_145 = arith.constant 0 : index
      %c0_146 = arith.constant 0 : index
      %251 = vector.load %arg24[%c0_144, %c0_145, %c0_146] : memref<4x8x1xf32, #tpu.memory_space<vmem>>, vector<4x8x1xf32>
      %cst_147 = arith.constant dense<0xFF800000> : vector<4x8xf32>
      %252 = vector.multi_reduction <maximumf>, %250, %cst_147 [2] : vector<4x8x8xf32> to vector<4x8xf32>
      %253 = vector.shape_cast %252 : vector<4x8xf32> to vector<4x8x1xf32>
      %254 = arith.maximumf %251, %253 : vector<4x8x1xf32>
      %255 = arith.subf %251, %254 : vector<4x8x1xf32>
      %256 = math.exp %255 : vector<4x8x1xf32>
      %257 = vector.broadcast %254 : vector<4x8x1xf32> to vector<4x8x8xf32>
      %258 = arith.subf %250, %257 : vector<4x8x8xf32>
      %259 = math.exp %258 : vector<4x8x8xf32>
      %c0_148 = arith.constant 0 : index
      %c0_149 = arith.constant 0 : index
      %c0_150 = arith.constant 0 : index
      %260 = vector.load %arg25[%c0_148, %c0_149, %c0_150] : memref<4x8x1xf32, #tpu.memory_space<vmem>>, vector<4x8x1xf32>
      %261 = arith.mulf %256, %260 : vector<4x8x1xf32>
      %cst_151 = arith.constant dense<0.000000e+00> : vector<4x8xf32>
      %262 = vector.multi_reduction <add>, %259, %cst_151 [2] : vector<4x8x8xf32> to vector<4x8xf32>
      %263 = vector.shape_cast %262 : vector<4x8xf32> to vector<4x8x1xf32>
      %264 = arith.addf %261, %263 : vector<4x8x1xf32>
      %c0_152 = arith.constant 0 : index
      %c0_153 = arith.constant 0 : index
      %c0_154 = arith.constant 0 : index
      %265 = vector.load %arg25[%c0_152, %c0_153, %c0_154] : memref<4x8x1xf32, #tpu.memory_space<vmem>>, vector<4x8x1xf32>
      tpu.vector_store %arg25[%c0_152, %c0_153, %c0_154], %264 {strides = array<i32>} : memref<4x8x1xf32, #tpu.memory_space<vmem>>, vector<4x8x1xf32>,
      %c0_155 = arith.constant 0 : index
      %c0_156 = arith.constant 0 : index
      %c0_157 = arith.constant 0 : index
      %266 = vector.load %arg26[%c0_155, %c0_156, %c0_157] : memref<4x8x8xf32, #tpu.memory_space<vmem>>, vector<4x8x8xf32>
      %267 = vector.broadcast %256 : vector<4x8x1xf32> to vector<4x8x8xf32>
      %268 = arith.mulf %267, %266 : vector<4x8x8xf32>
      %269 = arith.truncf %259 : vector<4x8x8xf32> to vector<4x8x8xbf16>
      "tpu.trace_start"() <{level = 10 : i32, message = "hqk,hkd->hqd"}> : () -> ()
      %cst_158 = arith.constant dense<0.000000e+00> : vector<4x8x8xf32>
      %270 = tpu.matmul %269, %249, %cst_158 {dimension_numbers = #tpu.dot_dimension_numbers<[2], [1], [1], [2], [0, 0, 0, 1, 1, 2], [0], [0]>} : vector<4x8x8xbf16>, vector<4x8x8xbf16>, vector<4x8x8xf32> -> vector<4x8x8xf32>
      "tpu.trace_stop"() : () -> ()
      %271 = arith.addf %268, %270 : vector<4x8x8xf32>
      %c0_159 = arith.constant 0 : index
      %c0_160 = arith.constant 0 : index
      %c0_161 = arith.constant 0 : index
      %272 = vector.load %arg26[%c0_159, %c0_160, %c0_161] : memref<4x8x8xf32, #tpu.memory_space<vmem>>, vector<4x8x8xf32>
      tpu.vector_store %arg26[%c0_159, %c0_160, %c0_161], %271 {strides = array<i32>} : memref<4x8x8xf32, #tpu.memory_space<vmem>>, vector<4x8x8xf32>,
      %c0_162 = arith.constant 0 : index
      %c0_163 = arith.constant 0 : index
      %c0_164 = arith.constant 0 : index
      %273 = vector.load %arg24[%c0_162, %c0_163, %c0_164] : memref<4x8x1xf32, #tpu.memory_space<vmem>>, vector<4x8x1xf32>
      tpu.vector_store %arg24[%c0_162, %c0_163, %c0_164], %254 {strides = array<i32>} : memref<4x8x1xf32, #tpu.memory_space<vmem>>, vector<4x8x1xf32>,
    }
    %c8_i32_91 = arith.constant 8 : i32
    %153 = arith.muli %arg1, %c8_i32_91 : i32
    %154 = tpu.assume_multiple %153, 8 : i32
    %c0_92 = arith.constant 0 : index
    %155 = arith.index_cast %154 : i32 to index
    %c0_93 = arith.constant 0 : index
    %156 = vector.load %arg21[%c0_92, %155, %c0_93] : memref<4x8x8xbf16, #tpu.memory_space<vmem>>, vector<4x8x8xbf16>
    %c0_94 = arith.constant 0 : index
    %157 = arith.index_cast %154 : i32 to index
    %c0_95 = arith.constant 0 : index
    %158 = vector.load %arg22[%c0_94, %157, %c0_95] : memref<4x8x8xbf16, #tpu.memory_space<vmem>>, vector<4x8x8xbf16>
    "tpu.trace_start"() <{level = 10 : i32, message = "hqd,hkd->hqk"}> : () -> ()
    %cst_96 = arith.constant dense<0.000000e+00> : vector<4x8x8xf32>
    %159 = tpu.matmul %144, %156, %cst_96 {dimension_numbers = #tpu.dot_dimension_numbers<[2], [2], [1], [1], [0, 0, 0, 1, 1, 1], [0], [0]>} : vector<4x8x8xbf16>, vector<4x8x8xbf16>, vector<4x8x8xf32> -> vector<4x8x8xf32>
    "tpu.trace_stop"() : () -> ()
    %160 = tpu.iota {dimensions = array<i32: 1>} : vector<1x8x8xi32>
    %161 = tpu.iota {dimensions = array<i32: 2>} : vector<1x8x8xi32>
    %162 = arith.cmpi sle, %161, %160 : vector<1x8x8xi32>
    %cst_97 = arith.constant -1.000000e+30 : f32
    %163 = vector.shape_cast %162 : vector<1x8x8xi1> to vector<1x8x8xi1>
    %164 = vector.broadcast %163 : vector<1x8x8xi1> to vector<4x8x8xi1>
    %165 = vector.broadcast %cst_97 : f32 to vector<4x8x8xf32>
    %166 = arith.select %164, %159, %165 : vector<4x8x8xi1>, vector<4x8x8xf32>
    %c0_98 = arith.constant 0 : index
    %c0_99 = arith.constant 0 : index
    %c0_100 = arith.constant 0 : index
    %167 = vector.load %arg24[%c0_98, %c0_99, %c0_100] : memref<4x8x1xf32, #tpu.memory_space<vmem>>, vector<4x8x1xf32>
    %cst_101 = arith.constant dense<0xFF800000> : vector<4x8xf32>
    %168 = vector.multi_reduction <maximumf>, %166, %cst_101 [2] : vector<4x8x8xf32> to vector<4x8xf32>
    %169 = vector.shape_cast %168 : vector<4x8xf32> to vector<4x8x1xf32>
    %170 = arith.maximumf %167, %169 : vector<4x8x1xf32>
    %171 = arith.subf %167, %170 : vector<4x8x1xf32>
    %172 = math.exp %171 : vector<4x8x1xf32>
    %173 = vector.broadcast %170 : vector<4x8x1xf32> to vector<4x8x8xf32>
    %174 = arith.subf %166, %173 : vector<4x8x8xf32>
    %175 = math.exp %174 : vector<4x8x8xf32>
    %c0_102 = arith.constant 0 : index
    %c0_103 = arith.constant 0 : index
    %c0_104 = arith.constant 0 : index
    %176 = vector.load %arg25[%c0_102, %c0_103, %c0_104] : memref<4x8x1xf32, #tpu.memory_space<vmem>>, vector<4x8x1xf32>
    %177 = arith.mulf %172, %176 : vector<4x8x1xf32>
    %cst_105 = arith.constant dense<0.000000e+00> : vector<4x8xf32>
    %178 = vector.multi_reduction <add>, %175, %cst_105 [2] : vector<4x8x8xf32> to vector<4x8xf32>
    %179 = vector.shape_cast %178 : vector<4x8xf32> to vector<4x8x1xf32>
    %180 = arith.addf %177, %179 : vector<4x8x1xf32>
    %c0_106 = arith.constant 0 : index
    %c0_107 = arith.constant 0 : index
    %c0_108 = arith.constant 0 : index
    %181 = vector.load %arg25[%c0_106, %c0_107, %c0_108] : memref<4x8x1xf32, #tpu.memory_space<vmem>>, vector<4x8x1xf32>
    tpu.vector_store %arg25[%c0_106, %c0_107, %c0_108], %180 {strides = array<i32>} : memref<4x8x1xf32, #tpu.memory_space<vmem>>, vector<4x8x1xf32>,
    %c0_109 = arith.constant 0 : index
    %c0_110 = arith.constant 0 : index
    %c0_111 = arith.constant 0 : index
    %182 = vector.load %arg26[%c0_109, %c0_110, %c0_111] : memref<4x8x8xf32, #tpu.memory_space<vmem>>, vector<4x8x8xf32>
    %183 = vector.broadcast %172 : vector<4x8x1xf32> to vector<4x8x8xf32>
    %184 = arith.mulf %183, %182 : vector<4x8x8xf32>
    %185 = arith.truncf %175 : vector<4x8x8xf32> to vector<4x8x8xbf16>
    "tpu.trace_start"() <{level = 10 : i32, message = "hqk,hkd->hqd"}> : () -> ()
    %cst_112 = arith.constant dense<0.000000e+00> : vector<4x8x8xf32>
    %186 = tpu.matmul %185, %158, %cst_112 {dimension_numbers = #tpu.dot_dimension_numbers<[2], [1], [1], [2], [0, 0, 0, 1, 1, 2], [0], [0]>} : vector<4x8x8xbf16>, vector<4x8x8xbf16>, vector<4x8x8xf32> -> vector<4x8x8xf32>
    "tpu.trace_stop"() : () -> ()
    %187 = arith.addf %184, %186 : vector<4x8x8xf32>
    %c0_113 = arith.constant 0 : index
    %c0_114 = arith.constant 0 : index
    %c0_115 = arith.constant 0 : index
    %188 = vector.load %arg26[%c0_113, %c0_114, %c0_115] : memref<4x8x8xf32, #tpu.memory_space<vmem>>, vector<4x8x8xf32>
    tpu.vector_store %arg26[%c0_113, %c0_114, %c0_115], %187 {strides = array<i32>} : memref<4x8x8xf32, #tpu.memory_space<vmem>>, vector<4x8x8xf32>,
    %c0_116 = arith.constant 0 : index
    %c0_117 = arith.constant 0 : index
    %c0_118 = arith.constant 0 : index
    %189 = vector.load %arg24[%c0_116, %c0_117, %c0_118] : memref<4x8x1xf32, #tpu.memory_space<vmem>>, vector<4x8x1xf32>
    tpu.vector_store %arg24[%c0_116, %c0_117, %c0_118], %170 {strides = array<i32>} : memref<4x8x1xf32, #tpu.memory_space<vmem>>, vector<4x8x1xf32>,
    %c0_119 = arith.constant 0 : index
    %c0_120 = arith.constant 0 : index
    %c0_121 = arith.constant 0 : index
    %190 = vector.load %arg25[%c0_119, %c0_120, %c0_121] : memref<4x8x1xf32, #tpu.memory_space<vmem>>, vector<4x8x1xf32>
    %cst_122 = arith.constant 1.000000e+00 : f32
    %191 = vector.broadcast %cst_122 : f32 to vector<4x8x1xf32>
    %192 = arith.divf %191, %190 : vector<4x8x1xf32>
    %c0_123 = arith.constant 0 : index
    %c0_124 = arith.constant 0 : index
    %c0_125 = arith.constant 0 : index
    %193 = vector.load %arg26[%c0_123, %c0_124, %c0_125] : memref<4x8x8xf32, #tpu.memory_space<vmem>>, vector<4x8x8xf32>
    %194 = vector.broadcast %192 : vector<4x8x1xf32> to vector<4x8x8xf32>
    %195 = arith.mulf %193, %194 : vector<4x8x8xf32>
    %196 = vector.extract_strided_slice %195 {offsets = [0, 0, 0], sizes = [1, 8, 8], strides = [1, 1, 1]} : vector<4x8x8xf32> to vector<1x8x8xf32>
    %197 = vector.shape_cast %196 : vector<1x8x8xf32> to vector<8x8xf32>
    %198 = vector.extract_strided_slice %195 {offsets = [1, 0, 0], sizes = [1, 8, 8], strides = [1, 1, 1]} : vector<4x8x8xf32> to vector<1x8x8xf32>
    %199 = vector.shape_cast %198 : vector<1x8x8xf32> to vector<8x8xf32>
    %200 = vector.extract_strided_slice %195 {offsets = [2, 0, 0], sizes = [1, 8, 8], strides = [1, 1, 1]} : vector<4x8x8xf32> to vector<1x8x8xf32>
    %201 = vector.shape_cast %200 : vector<1x8x8xf32> to vector<8x8xf32>
    %202 = vector.extract_strided_slice %195 {offsets = [3, 0, 0], sizes = [1, 8, 8], strides = [1, 1, 1]} : vector<4x8x8xf32> to vector<1x8x8xf32>
    %203 = vector.shape_cast %202 : vector<1x8x8xf32> to vector<8x8xf32>
    %204 = tpu.concatenate %197, %199, %201, %203 in 1 : vector<8x8xf32>, vector<8x8xf32>, vector<8x8xf32>, vector<8x8xf32> -> vector<8x32xf32>
    %205 = arith.truncf %204 : vector<8x32xf32> to vector<8x32xbf16>
    %cst_126 = arith.constant dense<0.000000e+00> : vector<8x32xf32>
    %206 = tpu.matmul %205, %14, %cst_126 {dimension_numbers = #tpu.dot_dimension_numbers<[1], [0], [0], [1], [0, 0, 1, 1], [], []>} : vector<8x32xbf16>, vector<32x32xbf16>, vector<8x32xf32> -> vector<8x32xf32>
    %207 = vector.broadcast %15 : vector<1x32xf32> to vector<8x32xf32>
    %208 = arith.addf %206, %207 : vector<8x32xf32>
    %209 = arith.addf %20, %208 : vector<8x32xf32>
    %cst_127 = arith.constant dense<0.000000e+00> : vector<8xf32>
    %210 = vector.multi_reduction <add>, %209, %cst_127 [1] : vector<8x32xf32> to vector<8xf32>
    %211 = vector.shape_cast %210 : vector<8xf32> to vector<8x1xf32>
    %cst_128 = arith.constant 3.200000e+01 : f32
    %212 = vector.broadcast %cst_128 : f32 to vector<8x1xf32>
    %213 = arith.divf %211, %212 : vector<8x1xf32>
    %214 = vector.broadcast %213 : vector<8x1xf32> to vector<8x32xf32>
    %215 = arith.subf %209, %214 : vector<8x32xf32>
    %216 = arith.mulf %215, %215 : vector<8x32xf32>
    %cst_129 = arith.constant dense<0.000000e+00> : vector<8xf32>
    %217 = vector.multi_reduction <add>, %216, %cst_129 [1] : vector<8x32xf32> to vector<8xf32>
    %218 = vector.shape_cast %217 : vector<8xf32> to vector<8x1xf32>
    %cst_130 = arith.constant 3.200000e+01 : f32
    %219 = vector.broadcast %cst_130 : f32 to vector<8x1xf32>
    %220 = arith.divf %218, %219 : vector<8x1xf32>
    %cst_131 = arith.constant 9.99999974E-6 : f32
    %221 = vector.broadcast %cst_131 : f32 to vector<8x1xf32>
    %222 = arith.addf %220, %221 : vector<8x1xf32>
    %223 = math.rsqrt %222 : vector<8x1xf32>
    %224 = vector.broadcast %223 : vector<8x1xf32> to vector<8x32xf32>
    %225 = arith.mulf %215, %224 : vector<8x32xf32>
    %226 = vector.broadcast %6 : vector<1x32xf32> to vector<8x32xf32>
    %227 = arith.mulf %225, %226 : vector<8x32xf32>
    %228 = vector.broadcast %7 : vector<1x32xf32> to vector<8x32xf32>
    %229 = arith.addf %227, %228 : vector<8x32xf32>
    %230 = arith.truncf %229 : vector<8x32xf32> to vector<8x32xbf16>
    %cst_132 = arith.constant dense<0.000000e+00> : vector<8x64xf32>
    %231 = tpu.matmul %230, %16, %cst_132 {dimension_numbers = #tpu.dot_dimension_numbers<[1], [0], [0], [1], [0, 0, 1, 1], [], []>} : vector<8x32xbf16>, vector<32x64xbf16>, vector<8x64xf32> -> vector<8x64xf32>
    %232 = vector.broadcast %17 : vector<1x64xf32> to vector<8x64xf32>
    %233 = arith.addf %231, %232 : vector<8x64xf32>
    %cst_133 = arith.constant 0.000000e+00 : f32
    %234 = vector.broadcast %cst_133 : f32 to vector<8x64xf32>
    %235 = arith.maximumf %233, %234 : vector<8x64xf32>
    %236 = arith.truncf %235 : vector<8x64xf32> to vector<8x64xbf16>
    %cst_134 = arith.constant dense<0.000000e+00> : vector<8x32xf32>
    %237 = tpu.matmul %236, %18, %cst_134 {dimension_numbers = #tpu.dot_dimension_numbers<[1], [0], [0], [1], [0, 0, 1, 1], [], []>} : vector<8x64xbf16>, vector<64x32xbf16>, vector<8x32xf32> -> vector<8x32xf32>
    %238 = vector.broadcast %19 : vector<1x32xf32> to vector<8x32xf32>
    %239 = arith.addf %237, %238 : vector<8x32xf32>
    %240 = arith.addf %209, %239 : vector<8x32xf32>
    %c0_135 = arith.constant 0 : index
    %c0_136 = arith.constant 0 : index
    %c0_137 = arith.constant 0 : index
    %241 = vector.load %arg20[%c0_135, %c0_136, %c0_137] : memref<1x8x32xf32, #tpu.memory_space<vmem>>, vector<1x8x32xf32>
    %242 = vector.shape_cast %241 : vector<1x8x32xf32> to vector<8x32xf32>
    %243 = vector.shape_cast %240 : vector<8x32xf32> to vector<1x8x32xf32>
    tpu.vector_store %arg20[%c0_135, %c0_136, %c0_137], %243 {strides = array<i32>} : memref<1x8x32xf32, #tpu.memory_space<vmem>>, vector<1x8x32xf32>,
    return
  }
  func.func @transform_0(%arg0: i32, %arg1: i32) -> (i32, i32, i32) {
    %c0_i32 = arith.constant 0 : i32
    %c0_i32_0 = arith.constant 0 : i32
    return %arg0, %arg1, %c0_i32 : i32, i32, i32
  }
  func.func @transform_1(%arg0: i32, %arg1: i32) -> (i32, i32, i32) {
    %c0_i32 = arith.constant 0 : i32
    %c0_i32_0 = arith.constant 0 : i32
    return %arg0, %arg1, %c0_i32 : i32, i32, i32
  }
  func.func @transform_2(%arg0: i32, %arg1: i32) -> (i32, i32) {
    %c0_i32 = arith.constant 0 : i32
    %c0_i32_0 = arith.constant 0 : i32
    %c0_i32_1 = arith.constant 0 : i32
    return %c0_i32, %c0_i32_0 : i32, i32
  }
  func.func @transform_3(%arg0: i32, %arg1: i32) -> (i32, i32) {
    %c0_i32 = arith.constant 0 : i32
    %c0_i32_0 = arith.constant 0 : i32
    %c0_i32_1 = arith.constant 0 : i32
    return %c0_i32, %c0_i32_0 : i32, i32
  }
  func.func @transform_4(%arg0: i32, %arg1: i32) -> (i32, i32) {
    %c0_i32 = arith.constant 0 : i32
    %c0_i32_0 = arith.constant 0 : i32
    %c0_i32_1 = arith.constant 0 : i32
    return %c0_i32, %c0_i32_0 : i32, i32
  }
  func.func @transform_5(%arg0: i32, %arg1: i32) -> (i32, i32) {
    %c0_i32 = arith.constant 0 : i32
    %c0_i32_0 = arith.constant 0 : i32
    %c0_i32_1 = arith.constant 0 : i32
    return %c0_i32, %c0_i32_0 : i32, i32
  }
  func.func @transform_6(%arg0: i32, %arg1: i32) -> (i32, i32) {
    %c0_i32 = arith.constant 0 : i32
    %c0_i32_0 = arith.constant 0 : i32
    %c0_i32_1 = arith.constant 0 : i32
    return %c0_i32, %c0_i32_0 : i32, i32
  }
  func.func @transform_7(%arg0: i32, %arg1: i32) -> (i32, i32) {
    %c0_i32 = arith.constant 0 : i32
    %c0_i32_0 = arith.constant 0 : i32
    %c0_i32_1 = arith.constant 0 : i32
    return %c0_i32, %c0_i32_0 : i32, i32
  }
  func.func @transform_8(%arg0: i32, %arg1: i32) -> (i32, i32) {
    %c0_i32 = arith.constant 0 : i32
    %c0_i32_0 = arith.constant 0 : i32
    %c0_i32_1 = arith.constant 0 : i32
    return %c0_i32, %c0_i32_0 : i32, i32
  }
  func.func @transform_9(%arg0: i32, %arg1: i32) -> (i32, i32) {
    %c0_i32 = arith.constant 0 : i32
    %c0_i32_0 = arith.constant 0 : i32
    %c0_i32_1 = arith.constant 0 : i32
    return %c0_i32, %c0_i32_0 : i32, i32
  }
  func.func @transform_10(%arg0: i32, %arg1: i32) -> (i32, i32) {
    %c0_i32 = arith.constant 0 : i32
    %c0_i32_0 = arith.constant 0 : i32
    %c0_i32_1 = arith.constant 0 : i32
    return %c0_i32, %c0_i32_0 : i32, i32
  }
  func.func @transform_11(%arg0: i32, %arg1: i32) -> (i32, i32) {
    %c0_i32 = arith.constant 0 : i32
    %c0_i32_0 = arith.constant 0 : i32
    %c0_i32_1 = arith.constant 0 : i32
    return %c0_i32, %c0_i32_0 : i32, i32
  }
  func.func @transform_12(%arg0: i32, %arg1: i32) -> (i32, i32) {
    %c0_i32 = arith.constant 0 : i32
    %c0_i32_0 = arith.constant 0 : i32
    %c0_i32_1 = arith.constant 0 : i32
    return %c0_i32, %c0_i32_0 : i32, i32
  }
  func.func @transform_13(%arg0: i32, %arg1: i32) -> (i32, i32) {
    %c0_i32 = arith.constant 0 : i32
    %c0_i32_0 = arith.constant 0 : i32
    %c0_i32_1 = arith.constant 0 : i32
    return %c0_i32, %c0_i32_0 : i32, i32
  }
  func.func @transform_14(%arg0: i32, %arg1: i32) -> (i32, i32) {
    %c0_i32 = arith.constant 0 : i32
    %c0_i32_0 = arith.constant 0 : i32
    %c0_i32_1 = arith.constant 0 : i32
    return %c0_i32, %c0_i32_0 : i32, i32
  }
  func.func @transform_15(%arg0: i32, %arg1: i32) -> (i32, i32) {
    %c0_i32 = arith.constant 0 : i32
    %c0_i32_0 = arith.constant 0 : i32
    %c0_i32_1 = arith.constant 0 : i32
    return %c0_i32, %c0_i32_0 : i32, i32
  }
  func.func @transform_16(%arg0: i32, %arg1: i32) -> (i32, i32) {
    %c0_i32 = arith.constant 0 : i32
    %c0_i32_0 = arith.constant 0 : i32
    %c0_i32_1 = arith.constant 0 : i32
    return %c0_i32, %c0_i32_0 : i32, i32
  }
  func.func @transform_17(%arg0: i32, %arg1: i32) -> (i32, i32) {
    %c0_i32 = arith.constant 0 : i32
    %c0_i32_0 = arith.constant 0 : i32
    %c0_i32_1 = arith.constant 0 : i32
    return %c0_i32, %c0_i32_0 : i32, i32
  }
  func.func @transform_18(%arg0: i32, %arg1: i32) -> (i32, i32, i32) {
    %c0_i32 = arith.constant 0 : i32
    %c0_i32_0 = arith.constant 0 : i32
    return %arg0, %arg1, %c0_i32 : i32, i32, i32
  }
}

</mosaic_0001>

<llo_original>
// kernel: tpu_custom_call.1
$region0: #{tpu_custom_call.1}
  #allocation0 [shape = 'u32[]', space=smem, size = 0x4, offset = 0x4, fixed_abs, tag = 'smem constant byte address 0x4 - core index']
  #allocation1 [shape = 'u32[144,128]{1,0:T(1,128)}', space=vmem, size = 0x12000, scoped, tag = 'internal scratch']
  #allocation2 [shape = 'bf16[4,8,8]{2,1,0:T(8,128)(2,1)}', space=vmem, size = 0x2000, scoped, tag = 'scratch operand']
  #allocation3 [shape = 'bf16[4,8,8]{2,1,0:T(8,128)(2,1)}', space=vmem, size = 0x2000, scoped, tag = 'scratch operand']
  #allocation4 [shape = 'bf16[4,8,8]{2,1,0:T(8,128)(2,1)}', space=vmem, size = 0x2000, scoped, tag = 'scratch operand']
  #allocation5 [shape = 'f32[4,8,1]{2,1,0:T(8,128)}', space=vmem, size = 0x4000, scoped, tag = 'scratch operand']
  #allocation6 [shape = 'f32[4,8,1]{2,1,0:T(8,128)}', space=vmem, size = 0x4000, scoped, tag = 'scratch operand']
  #allocation7 [shape = 'f32[4,8,8]{2,1,0:T(8,128)}', space=vmem, size = 0x4000, scoped, tag = 'scratch operand']
  %s0 = inlined_call_operand.vmem [shape: f32[2,8,32], index: 0, kind: input, shape index: {}]
  %s1 = inlined_call_operand.vmem [shape: f32[2,8,32], index: 1, kind: input, shape index: {}]
  %s2 = inlined_call_operand.vmem [shape: f32[1,32], index: 2, kind: input, shape index: {}]
  %s3 = inlined_call_operand.hbm [shape: f32[1,32], index: 3, kind: input, shape index: {}]
  %s4 = inlined_call_operand.hbm [shape: f32[1,32], index: 4, kind: input, shape index: {}]
  %s5 = inlined_call_operand.hbm [shape: f32[1,32], index: 5, kind: input, shape index: {}]
  %s6 = inlined_call_operand.vmem [shape: bf16[32,32], index: 6, kind: input, shape index: {}]
  %s7 = inlined_call_operand.hbm [shape: f32[1,32], index: 7, kind: input, shape index: {}]
  %s8 = inlined_call_operand.hbm [shape: bf16[32,32], index: 8, kind: input, shape index: {}]
  %s9 = inlined_call_operand.hbm [shape: f32[1,32], index: 9, kind: input, shape index: {}]
  %s10 = inlined_call_operand.vmem [shape: bf16[32,32], index: 10, kind: input, shape index: {}]
  %s11 = inlined_call_operand.hbm [shape: f32[1,32], index: 11, kind: input, shape index: {}]
  %s12 = inlined_call_operand.hbm [shape: bf16[32,32], index: 12, kind: input, shape index: {}]
  %s13 = inlined_call_operand.hbm [shape: f32[1,32], index: 13, kind: input, shape index: {}]
  %s14 = inlined_call_operand.vmem [shape: bf16[32,64], index: 14, kind: input, shape index: {}]
  %s15 = inlined_call_operand.vmem [shape: f32[1,64], index: 15, kind: input, shape index: {}]
  %s16 = inlined_call_operand.vmem [shape: bf16[64,32], index: 16, kind: input, shape index: {}]
  %s17 = inlined_call_operand.vmem [shape: f32[1,32], index: 17, kind: input, shape index: {}]
  %s18 = inlined_call_operand.hbm [shape: f32[2,8,32], index: 18, kind: output, shape index: {}]
  %s19 = sld [smem:[#allocation0]]
  $region148: #{tpu_custom_call.1} parent=0
    _
  %s21 = ssub.s32 1, %s19
  %s22 = scalar_select 0, %s21, %s19
  $region1: #{tpu_custom_call.1} parent=0
    #allocation8 [shape = 'u8[512]{0}', space=vmem, size = 0x400, scoped, tag = 'input window, operand 3, single buffered']
    #allocation9 [shape = 's32[2]{0}', space=sflag, size = 0x8, scoped, tag = 'scoped memory for tpu_custom_call.1']
    #allocation10 [shape = 's32[2]{0}', space=sflag, size = 0x8, scoped, tag = 'scoped memory for tpu_custom_call.1']
    #allocation11 [shape = 'u8[512]{0}', space=vmem, size = 0x400, scoped, tag = 'input window, operand 4, single buffered']
    #allocation12 [shape = 's32[1]{0}', space=sflag, size = 0x4, scoped, tag = 'scoped memory for tpu_custom_call.1']
    #allocation13 [shape = 'u8[512]{0}', space=vmem, size = 0x400, scoped, tag = 'input window, operand 5, single buffered']
    #allocation14 [shape = 'u8[512]{0}', space=vmem, size = 0x400, scoped, tag = 'input window, operand 7, single buffered']
    #allocation15 [shape = 's32[1]{0}', space=sflag, size = 0x4, scoped, tag = 'scoped memory for tpu_custom_call.1']
    #allocation16 [shape = 'u8[8192]{0}', space=vmem, size = 0x2000, scoped, tag = 'input window, operand 8, single buffered']
    #allocation17 [shape = 'u8[512]{0}', space=vmem, size = 0x400, scoped, tag = 'input window, operand 9, single buffered']
    #allocation18 [shape = 's32[1]{0}', space=sflag, size = 0x4, scoped, tag = 'scoped memory for tpu_custom_call.1']
    #allocation19 [shape = 'u8[512]{0}', space=vmem, size = 0x400, scoped, tag = 'input window, operand 11, single buffered']
    #allocation20 [shape = 'u8[8192]{0}', space=vmem, size = 0x2000, scoped, tag = 'input window, operand 12, single buffered']
    #allocation21 [shape = 's32[1]{0}', space=sflag, size = 0x4, scoped, tag = 'scoped memory for tpu_custom_call.1']
    #allocation22 [shape = 'u8[512]{0}', space=vmem, size = 0x400, scoped, tag = 'input window, operand 13, single buffered']
    #allocation23 [shape = 'u8[8192]{0}', space=vmem, size = 0x2000, scoped, tag = 'output window, operand 0']
    %23 = vsyncpa [#allocation9], 0
    %24 = vsyncpa [#allocation12], 0
    %25 = vsyncpa [#allocation15], 0
    %26 = vsyncpa [#allocation18], 0
    %27 = vsyncpa [#allocation21], 0
    %28 = vsyncpa [#allocation10], 0
    %s29 = scalar_lea.sflag [#allocation10], 1
    %30 = vsyncpa %s29, 0
    loop: start=0, step=1, limit=4
    $region2: #{tpu_custom_call.1} parent=1 // loop_pre_header
      _
    $region3: #{tpu_custom_call.1} parent=1 // loop_header
      %s32 = sphi 0, %s36
      %p33 = scmp.ge.s32.totalorder %s32, 4
      %s39 = sphi 0, %s51
      %s40 = sphi 0, %s47
      %s41 = sphi 0, %s39
      %s42 = sphi 0, %s40
      %s43 = sphi 0, %s41
      %s44 = sphi 0, %s42
      %s56 = sphi 0, %s58
      %s59 = sphi 0, %s56
      %s60 = sphi 0, %s59
      %s76 = sphi 0, %s60
      %s84 = sphi 0, %s86
      %s87 = sphi 0, %s84
      %s88 = sphi 0, %s87
      %s104 = sphi 0, %s88
      %s108 = sphi 0, %s108
      %s110 = sphi 0, %s108
      %s111 = sphi 0, %s110
      %s125 = sphi 0, %s111
      %s129 = sphi 0, %s129
      %s131 = sphi 0, %s129
      %s132 = sphi 0, %s131
      %s146 = sphi 0, %s132
      %s150 = sphi 0, %s150
      %s152 = sphi 0, %s150
      %s153 = sphi 0, %s152
      %s167 = sphi 0, %s153
      %s171 = sphi 0, %s171
      %s173 = sphi 0, %s171
      %s174 = sphi 0, %s173
      %s188 = sphi 0, %s174
      %s192 = sphi 0, %s192
      %s194 = sphi 0, %s192
      %s195 = sphi 0, %s194
      %s209 = sphi 0, %s195
      %s213 = sphi 0, %s213
      %s215 = sphi 0, %s213
      %s216 = sphi 0, %s215
      %s230 = sphi 0, %s216
      %s234 = sphi 0, %s234
      %s236 = sphi 0, %s234
      %s237 = sphi 0, %s236
      %s251 = sphi 0, %s237
      %s255 = sphi 0, %s255
      %s257 = sphi 0, %s255
      %s258 = sphi 0, %s257
      %s272 = sphi 0, %s258
      %s276 = sphi 0, %s276
      %s278 = sphi 0, %s276
      %s279 = sphi 0, %s278
      %s293 = sphi 0, %s279
      %s297 = sphi 0, %s297
      %s299 = sphi 0, %s297
      %s300 = sphi 0, %s299
      %s314 = sphi 0, %s300
      %s318 = sphi 0, %s318
      %s320 = sphi 0, %s318
      %s321 = sphi 0, %s320
      %s335 = sphi 0, %s321
      %s339 = sphi 0, %s339
      %s341 = sphi 0, %s339
      %s342 = sphi 0, %s341
      %s356 = sphi 0, %s342
      %s360 = sphi 0, %s360
      %s362 = sphi 0, %s360
      %s363 = sphi 0, %s362
      %s377 = sphi 0, %s363
      %s381 = sphi 0, %s381
      %s383 = sphi 0, %s381
      %s384 = sphi 0, %s383
      %s398 = sphi 0, %s384
      %s402 = sphi 0, %s402
      %s404 = sphi 0, %s402
      %s405 = sphi 0, %s404
      %s419 = sphi 0, %s405
      %s423 = sphi 0, %s423
      %s425 = sphi 0, %s423
      %s426 = sphi 0, %s425
      %s440 = sphi 0, %s426
      %s448 = sphi 0, %s450
      %s451 = sphi 0, %s448
      %s452 = sphi 0, %s451
      %s468 = sphi 0, %s452
    $region4: #{tpu_custom_call.1} parent=1 // loop_header_branch
      %35 = sbr.rel (%p33) target = $region8
    $region5: #{tpu_custom_call.1} parent=1 // loop_body
      %s37 = ssub.s32 %s32, 1
      %s38 = ssub.s32 %s32, 2
      %s45 = sadd.s32 1, %s40
      %p46 = scmp.ge.s32.totalorder %s45, 1
      %s47 = scalar_select %p46, 0, %s45
      %s48 = sadd.s32 1, %s39
      %s49 = scalar_select %p46, %s48, %s39
      %p50 = scmp.ge.s32.totalorder %s49, 2
      %s51 = scalar_select %p50, 0, %s49
      %s52 = ssub.s32 %s39, %s51
      %s53 = ssub.s32 %s40, %s47
      %s54 = sor.u32 %s52, %s53
      %p55 = scmp.eq.s32.totalorder %s54, 0
      %s57 = sadd.s32 %s56, 1
      %s58 = scalar_select %p55, %s56, %s57
      %p61 = pneg %p55
      %p62 = scmp.eq.s32.totalorder %s32, 1
      %p63 = por %p61, %p62
      %p64 = scmp.ne.s32.totalorder %s56, %s59
      %p65 = scmp.eq.s32.totalorder %s32, 0
      %p66 = por %p64, %p65
      %p67 = scmp.ne.s32.totalorder %s56, %s59
      %p68 = scmp.eq.s32.totalorder %s37, 1
      %p69 = por %p67, %p68
      %p70 = scmp.ne.s32.totalorder %s59, %s60
      %p71 = scmp.eq.s32.totalorder %s37, 0
      %p72 = por %p70, %p71
      %p73 = scmp.ne.s32.totalorder %s59, %s60
      %p74 = scmp.eq.s32.totalorder %s38, 1
      %p75 = por %p73, %p74
      %p77 = scmp.ne.s32.totalorder %s60, %s76
      %p78 = scmp.eq.s32.totalorder %s38, 0
      %p79 = por %p77, %p78
      %s80 = ssub.s32 %s39, %s51
      %s81 = ssub.s32 %s40, %s47
      %s82 = sor.u32 %s80, %s81
      %p83 = scmp.eq.s32.totalorder %s82, 0
      %s85 = sadd.s32 %s84, 1
      %s86 = scalar_select %p83, %s84, %s85
      %p89 = pneg %p83
      %p90 = scmp.eq.s32.totalorder %s32, 1
      %p91 = por %p89, %p90
      %p92 = scmp.ne.s32.totalorder %s84, %s87
      %p93 = scmp.eq.s32.totalorder %s32, 0
      %p94 = por %p92, %p93
      %p95 = scmp.ne.s32.totalorder %s84, %s87
      %p96 = scmp.eq.s32.totalorder %s37, 1
      %p97 = por %p95, %p96
      %p98 = scmp.ne.s32.totalorder %s87, %s88
      %p99 = scmp.eq.s32.totalorder %s37, 0
      %p100 = por %p98, %p99
      %p101 = scmp.ne.s32.totalorder %s87, %s88
      %p102 = scmp.eq.s32.totalorder %s38, 1
      %p103 = por %p101, %p102
      %p105 = scmp.ne.s32.totalorder %s88, %s104
      %p106 = scmp.eq.s32.totalorder %s38, 0
      %p107 = por %p105, %p106
      %s109 = sadd.s32 %s108, 1
      %p112 = scmp.eq.s32.totalorder %s32, 1
      %p113 = scmp.ne.s32.totalorder %s108, %s110
      %p114 = scmp.eq.s32.totalorder %s32, 0
      %p115 = por %p113, %p114
      %p116 = scmp.ne.s32.totalorder %s108, %s110
      %p117 = scmp.eq.s32.totalorder %s37, 1
      %p118 = por %p116, %p117
      %p119 = scmp.ne.s32.totalorder %s110, %s111
      %p120 = scmp.eq.s32.totalorder %s37, 0
      %p121 = por %p119, %p120
      %p122 = scmp.ne.s32.totalorder %s110, %s111
      %p123 = scmp.eq.s32.totalorder %s38, 1
      %p124 = por %p122, %p123
      %p126 = scmp.ne.s32.totalorder %s111, %s125
      %p127 = scmp.eq.s32.totalorder %s38, 0
      %p128 = por %p126, %p127
      %s130 = sadd.s32 %s129, 1
      %p133 = scmp.eq.s32.totalorder %s32, 1
      %p134 = scmp.ne.s32.totalorder %s129, %s131
      %p135 = scmp.eq.s32.totalorder %s32, 0
      %p136 = por %p134, %p135
      %p137 = scmp.ne.s32.totalorder %s129, %s131
      %p138 = scmp.eq.s32.totalorder %s37, 1
      %p139 = por %p137, %p138
      %p140 = scmp.ne.s32.totalorder %s131, %s132
      %p141 = scmp.eq.s32.totalorder %s37, 0
      %p142 = por %p140, %p141
      %p143 = scmp.ne.s32.totalorder %s131, %s132
      %p144 = scmp.eq.s32.totalorder %s38, 1
      %p145 = por %p143, %p144
      %p147 = scmp.ne.s32.totalorder %s132, %s146
      %p148 = scmp.eq.s32.totalorder %s38, 0
      %p149 = por %p147, %p148
      %s151 = sadd.s32 %s150, 1
      %p154 = scmp.eq.s32.totalorder %s32, 1
      %p155 = scmp.ne.s32.totalorder %s150, %s152
      %p156 = scmp.eq.s32.totalorder %s32, 0
      %p157 = por %p155, %p156
      %p158 = scmp.ne.s32.totalorder %s150, %s152
      %p159 = scmp.eq.s32.totalorder %s37, 1
      %p160 = por %p158, %p159
      %p161 = scmp.ne.s32.totalorder %s152, %s153
      %p162 = scmp.eq.s32.totalorder %s37, 0
      %p163 = por %p161, %p162
      %p164 = scmp.ne.s32.totalorder %s152, %s153
      %p165 = scmp.eq.s32.totalorder %s38, 1
      %p166 = por %p164, %p165
      %p168 = scmp.ne.s32.totalorder %s153, %s167
      %p169 = scmp.eq.s32.totalorder %s38, 0
      %p170 = por %p168, %p169
      %s172 = sadd.s32 %s171, 1
      %p175 = scmp.eq.s32.totalorder %s32, 1
      %p176 = scmp.ne.s32.totalorder %s171, %s173
      %p177 = scmp.eq.s32.totalorder %s32, 0
      %p178 = por %p176, %p177
      %p179 = scmp.ne.s32.totalorder %s171, %s173
      %p180 = scmp.eq.s32.totalorder %s37, 1
      %p181 = por %p179, %p180
      %p182 = scmp.ne.s32.totalorder %s173, %s174
      %p183 = scmp.eq.s32.totalorder %s37, 0
      %p184 = por %p182, %p183
      %p185 = scmp.ne.s32.totalorder %s173, %s174
      %p186 = scmp.eq.s32.totalorder %s38, 1
      %p187 = por %p185, %p186
      %p189 = scmp.ne.s32.totalorder %s174, %s188
      %p190 = scmp.eq.s32.totalorder %s38, 0
      %p191 = por %p189, %p190
      %s193 = sadd.s32 %s192, 1
      %p196 = scmp.eq.s32.totalorder %s32, 1
      %p197 = scmp.ne.s32.totalorder %s192, %s194
      %p198 = scmp.eq.s32.totalorder %s32, 0
      %p199 = por %p197, %p198
      %p200 = scmp.ne.s32.totalorder %s192, %s194
      %p201 = scmp.eq.s32.totalorder %s37, 1
      %p202 = por %p200, %p201
      %p203 = scmp.ne.s32.totalorder %s194, %s195
      %p204 = scmp.eq.s32.totalorder %s37, 0
      %p205 = por %p203, %p204
      %p206 = scmp.ne.s32.totalorder %s194, %s195
      %p207 = scmp.eq.s32.totalorder %s38, 1
      %p208 = por %p206, %p207
      %p210 = scmp.ne.s32.totalorder %s195, %s209
      %p211 = scmp.eq.s32.totalorder %s38, 0
      %p212 = por %p210, %p211
      %s214 = sadd.s32 %s213, 1
      %p217 = scmp.eq.s32.totalorder %s32, 1
      %p218 = scmp.ne.s32.totalorder %s213, %s215
      %p219 = scmp.eq.s32.totalorder %s32, 0
      %p220 = por %p218, %p219
      %p221 = scmp.ne.s32.totalorder %s213, %s215
      %p222 = scmp.eq.s32.totalorder %s37, 1
      %p223 = por %p221, %p222
      %p224 = scmp.ne.s32.totalorder %s215, %s216
      %p225 = scmp.eq.s32.totalorder %s37, 0
      %p226 = por %p224, %p225
      %p227 = scmp.ne.s32.totalorder %s215, %s216
      %p228 = scmp.eq.s32.totalorder %s38, 1
      %p229 = por %p227, %p228
      %p231 = scmp.ne.s32.totalorder %s216, %s230
      %p232 = scmp.eq.s32.totalorder %s38, 0
      %p233 = por %p231, %p232
      %s235 = sadd.s32 %s234, 1
      %p238 = scmp.eq.s32.totalorder %s32, 1
      %p239 = scmp.ne.s32.totalorder %s234, %s236
      %p240 = scmp.eq.s32.totalorder %s32, 0
      %p241 = por %p239, %p240
      %p242 = scmp.ne.s32.totalorder %s234, %s236
      %p243 = scmp.eq.s32.totalorder %s37, 1
      %p244 = por %p242, %p243
      %p245 = scmp.ne.s32.totalorder %s236, %s237
      %p246 = scmp.eq.s32.totalorder %s37, 0
      %p247 = por %p245, %p246
      %p248 = scmp.ne.s32.totalorder %s236, %s237
      %p249 = scmp.eq.s32.totalorder %s38, 1
      %p250 = por %p248, %p249
      %p252 = scmp.ne.s32.totalorder %s237, %s251
      %p253 = scmp.eq.s32.totalorder %s38, 0
      %p254 = por %p252, %p253
      %s256 = sadd.s32 %s255, 1
      %p259 = scmp.eq.s32.totalorder %s32, 1
      %p260 = scmp.ne.s32.totalorder %s255, %s257
      %p261 = scmp.eq.s32.totalorder %s32, 0
      %p262 = por %p260, %p261
      %p263 = scmp.ne.s32.totalorder %s255, %s257
      %p264 = scmp.eq.s32.totalorder %s37, 1
      %p265 = por %p263, %p264
      %p266 = scmp.ne.s32.totalorder %s257, %s258
      %p267 = scmp.eq.s32.totalorder %s37, 0
      %p268 = por %p266, %p267
      %p269 = scmp.ne.s32.totalorder %s257, %s258
      %p270 = scmp.eq.s32.totalorder %s38, 1
      %p271 = por %p269, %p270
      %p273 = scmp.ne.s32.totalorder %s258, %s272
      %p274 = scmp.eq.s32.totalorder %s38, 0
      %p275 = por %p273, %p274
      %s277 = sadd.s32 %s276, 1
      %p280 = scmp.eq.s32.totalorder %s32, 1
      %p281 = scmp.ne.s32.totalorder %s276, %s278
      %p282 = scmp.eq.s32.totalorder %s32, 0
      %p283 = por %p281, %p282
      %p284 = scmp.ne.s32.totalorder %s276, %s278
      %p285 = scmp.eq.s32.totalorder %s37, 1
      %p286 = por %p284, %p285
      %p287 = scmp.ne.s32.totalorder %s278, %s279
      %p288 = scmp.eq.s32.totalorder %s37, 0
      %p289 = por %p287, %p288
      %p290 = scmp.ne.s32.totalorder %s278, %s279
      %p291 = scmp.eq.s32.totalorder %s38, 1
      %p292 = por %p290, %p291
      %p294 = scmp.ne.s32.totalorder %s279, %s293
      %p295 = scmp.eq.s32.totalorder %s38, 0
      %p296 = por %p294, %p295
      %s298 = sadd.s32 %s297, 1
      %p301 = scmp.eq.s32.totalorder %s32, 1
      %p302 = scmp.ne.s32.totalorder %s297, %s299
      %p303 = scmp.eq.s32.totalorder %s32, 0
      %p304 = por %p302, %p303
      %p305 = scmp.ne.s32.totalorder %s297, %s299
      %p306 = scmp.eq.s32.totalorder %s37, 1
      %p307 = por %p305, %p306
      %p308 = scmp.ne.s32.totalorder %s299, %s300
      %p309 = scmp.eq.s32.totalorder %s37, 0
      %p310 = por %p308, %p309
      %p311 = scmp.ne.s32.totalorder %s299, %s300
      %p312 = scmp.eq.s32.totalorder %s38, 1
      %p313 = por %p311, %p312
      %p315 = scmp.ne.s32.totalorder %s300, %s314
      %p316 = scmp.eq.s32.totalorder %s38, 0
      %p317 = por %p315, %p316
      %s319 = sadd.s32 %s318, 1
      %p322 = scmp.eq.s32.totalorder %s32, 1
      %p323 = scmp.ne.s32.totalorder %s318, %s320
      %p324 = scmp.eq.s32.totalorder %s32, 0
      %p325 = por %p323, %p324
      %p326 = scmp.ne.s32.totalorder %s318, %s320
      %p327 = scmp.eq.s32.totalorder %s37, 1
      %p328 = por %p326, %p327
      %p329 = scmp.ne.s32.totalorder %s320, %s321
      %p330 = scmp.eq.s32.totalorder %s37, 0
      %p331 = por %p329, %p330
      %p332 = scmp.ne.s32.totalorder %s320, %s321
      %p333 = scmp.eq.s32.totalorder %s38, 1
      %p334 = por %p332, %p333
      %p336 = scmp.ne.s32.totalorder %s321, %s335
      %p337 = scmp.eq.s32.totalorder %s38, 0
      %p338 = por %p336, %p337
      %s340 = sadd.s32 %s339, 1
      %p343 = scmp.eq.s32.totalorder %s32, 1
      %p344 = scmp.ne.s32.totalorder %s339, %s341
      %p345 = scmp.eq.s32.totalorder %s32, 0
      %p346 = por %p344, %p345
      %p347 = scmp.ne.s32.totalorder %s339, %s341
      %p348 = scmp.eq.s32.totalorder %s37, 1
      %p349 = por %p347, %p348
      %p350 = scmp.ne.s32.totalorder %s341, %s342
      %p351 = scmp.eq.s32.totalorder %s37, 0
      %p352 = por %p350, %p351
      %p353 = scmp.ne.s32.totalorder %s341, %s342
      %p354 = scmp.eq.s32.totalorder %s38, 1
      %p355 = por %p353, %p354
      %p357 = scmp.ne.s32.totalorder %s342, %s356
      %p358 = scmp.eq.s32.totalorder %s38, 0
      %p359 = por %p357, %p358
      %s361 = sadd.s32 %s360, 1
      %p364 = scmp.eq.s32.totalorder %s32, 1
      %p365 = scmp.ne.s32.totalorder %s360, %s362
      %p366 = scmp.eq.s32.totalorder %s32, 0
      %p367 = por %p365, %p366
      %p368 = scmp.ne.s32.totalorder %s360, %s362
      %p369 = scmp.eq.s32.totalorder %s37, 1
      %p370 = por %p368, %p369
      %p371 = scmp.ne.s32.totalorder %s362, %s363
      %p372 = scmp.eq.s32.totalorder %s37, 0
      %p373 = por %p371, %p372
      %p374 = scmp.ne.s32.totalorder %s362, %s363
      %p375 = scmp.eq.s32.totalorder %s38, 1
      %p376 = por %p374, %p375
      %p378 = scmp.ne.s32.totalorder %s363, %s377
      %p379 = scmp.eq.s32.totalorder %s38, 0
      %p380 = por %p378, %p379
      %s382 = sadd.s32 %s381, 1
      %p385 = scmp.eq.s32.totalorder %s32, 1
      %p386 = scmp.ne.s32.totalorder %s381, %s383
      %p387 = scmp.eq.s32.totalorder %s32, 0
      %p388 = por %p386, %p387
      %p389 = scmp.ne.s32.totalorder %s381, %s383
      %p390 = scmp.eq.s32.totalorder %s37, 1
      %p391 = por %p389, %p390
      %p392 = scmp.ne.s32.totalorder %s383, %s384
      %p393 = scmp.eq.s32.totalorder %s37, 0
      %p394 = por %p392, %p393
      %p395 = scmp.ne.s32.totalorder %s383, %s384
      %p396 = scmp.eq.s32.totalorder %s38, 1
      %p397 = por %p395, %p396
      %p399 = scmp.ne.s32.totalorder %s384, %s398
      %p400 = scmp.eq.s32.totalorder %s38, 0
      %p401 = por %p399, %p400
      %s403 = sadd.s32 %s402, 1
      %p406 = scmp.eq.s32.totalorder %s32, 1
      %p407 = scmp.ne.s32.totalorder %s402, %s404
      %p408 = scmp.eq.s32.totalorder %s32, 0
      %p409 = por %p407, %p408
      %p410 = scmp.ne.s32.totalorder %s402, %s404
      %p411 = scmp.eq.s32.totalorder %s37, 1
      %p412 = por %p410, %p411
      %p413 = scmp.ne.s32.totalorder %s404, %s405
      %p414 = scmp.eq.s32.totalorder %s37, 0
      %p415 = por %p413, %p414
      %p416 = scmp.ne.s32.totalorder %s404, %s405
      %p417 = scmp.eq.s32.totalorder %s38, 1
      %p418 = por %p416, %p417
      %p420 = scmp.ne.s32.totalorder %s405, %s419
      %p421 = scmp.eq.s32.totalorder %s38, 0
      %p422 = por %p420, %p421
      %s424 = sadd.s32 %s423, 1
      %p427 = scmp.eq.s32.totalorder %s32, 1
      %p428 = scmp.ne.s32.totalorder %s423, %s425
      %p429 = scmp.eq.s32.totalorder %s32, 0
      %p430 = por %p428, %p429
      %p431 = scmp.ne.s32.totalorder %s423, %s425
      %p432 = scmp.eq.s32.totalorder %s37, 1
      %p433 = por %p431, %p432
      %p434 = scmp.ne.s32.totalorder %s425, %s426
      %p435 = scmp.eq.s32.totalorder %s37, 0
      %p436 = por %p434, %p435
      %p437 = scmp.ne.s32.totalorder %s425, %s426
      %p438 = scmp.eq.s32.totalorder %s38, 1
      %p439 = por %p437, %p438
      %p441 = scmp.ne.s32.totalorder %s426, %s440
      %p442 = scmp.eq.s32.totalorder %s38, 0
      %p443 = por %p441, %p442
      %s444 = ssub.s32 %s39, %s51
      %s445 = ssub.s32 %s40, %s47
      %s446 = sor.u32 %s444, %s445
      %p447 = scmp.eq.s32.totalorder %s446, 0
      %s449 = sadd.s32 %s448, 1
      %s450 = scalar_select %p447, %s448, %s449
      %p453 = pneg %p447
      %p454 = scmp.eq.s32.totalorder %s32, 1
      %p455 = por %p453, %p454
      %p456 = scmp.ne.s32.totalorder %s448, %s451
      %p457 = scmp.eq.s32.totalorder %s32, 0
      %p458 = por %p456, %p457
      %p459 = scmp.ne.s32.totalorder %s448, %s451
      %p460 = scmp.eq.s32.totalorder %s37, 1
      %p461 = por %p459, %p460
      %p462 = scmp.ne.s32.totalorder %s451, %s452
      %p463 = scmp.eq.s32.totalorder %s37, 0
      %p464 = por %p462, %p463
      %p465 = scmp.ne.s32.totalorder %s451, %s452
      %p466 = scmp.eq.s32.totalorder %s38, 1
      %p467 = por %p465, %p466
      %p469 = scmp.ne.s32.totalorder %s452, %s468
      %p470 = scmp.eq.s32.totalorder %s38, 0
      %p471 = por %p469, %p470
      %p472 = scmp.le.s32.totalorder 1, %s32
      %p473 = scmp.lt.s32.totalorder %s32, 3
      %p474 = pnand %p472, %p473
      %p475 = pneg %p474
      // Predicated region
      $region9: #{tpu_custom_call.1} parent=5 // pred_check
        _
      $region10: #{tpu_custom_call.1} parent=5 // pred_check_branch
        %477 = sbr.rel (%p474) target = $region12
      $region11: #{tpu_custom_call.1} parent=5 // pred_region
        %s478 = ssub.s32 %s32, 1
        // Predicated region
        $region13: #{tpu_custom_call.1} parent=11 // pred_check
          %p479 = pneg %p121
        $region14: #{tpu_custom_call.1} parent=11 // pred_check_branch
          %481 = sbr.rel (%p479) target = $region16
        $region15: #{tpu_custom_call.1} parent=11 // pred_region
          _
        $region16: #{tpu_custom_call.1} parent=11 // pred_fallthru
          _
        // Predicated region
        $region17: #{tpu_custom_call.1} parent=11 // pred_check
          %p482 = pneg %p142
        $region18: #{tpu_custom_call.1} parent=11 // pred_check_branch
          %484 = sbr.rel (%p482) target = $region20
        $region19: #{tpu_custom_call.1} parent=11 // pred_region
          %s486 = ssub.s32 16, 16
          %487 = vsyncadd [#allocation9], %s486
          %s489 = sshll.u32 [#allocation8], 4
          %s490 = int_to_ptr.vmem [resolvable:$true] %s489
          %492 = dma.hbm_to_vmem [thread:$0]  %s3, 16, %s490, [#allocation9]
        $region20: #{tpu_custom_call.1} parent=11 // pred_fallthru
          _
        // Predicated region
        $region21: #{tpu_custom_call.1} parent=11 // pred_check
          %p493 = pneg %p163
        $region22: #{tpu_custom_call.1} parent=11 // pred_check_branch
          %495 = sbr.rel (%p493) target = $region24
        $region23: #{tpu_custom_call.1} parent=11 // pred_region
          %s497 = ssub.s32 16, 16
          %498 = vsyncadd [#allocation12], %s497
          %s500 = sshll.u32 [#allocation11], 4
          %s501 = int_to_ptr.vmem [resolvable:$true] %s500
          %503 = dma.hbm_to_vmem [thread:$0]  %s4, 16, %s501, [#allocation12]
        $region24: #{tpu_custom_call.1} parent=11 // pred_fallthru
          _
        // Predicated region
        $region25: #{tpu_custom_call.1} parent=11 // pred_check
          %p504 = pneg %p184
        $region26: #{tpu_custom_call.1} parent=11 // pred_check_branch
          %506 = sbr.rel (%p504) target = $region28
        $region27: #{tpu_custom_call.1} parent=11 // pred_region
          %s508 = ssub.s32 16, 16
          %509 = vsyncadd [#allocation12], %s508
          %s511 = sshll.u32 [#allocation13], 4
          %s512 = int_to_ptr.vmem [resolvable:$true] %s511
          %514 = dma.hbm_to_vmem [thread:$0]  %s5, 16, %s512, [#allocation12]
        $region28: #{tpu_custom_call.1} parent=11 // pred_fallthru
          _
        // Predicated region
        $region29: #{tpu_custom_call.1} parent=11 // pred_check
          %p515 = pneg %p205
        $region30: #{tpu_custom_call.1} parent=11 // pred_check_branch
          %517 = sbr.rel (%p515) target = $region32
        $region31: #{tpu_custom_call.1} parent=11 // pred_region
          _
        $region32: #{tpu_custom_call.1} parent=11 // pred_fallthru
          _
        // Predicated region
        $region33: #{tpu_custom_call.1} parent=11 // pred_check
          %p518 = pneg %p226
        $region34: #{tpu_custom_call.1} parent=11 // pred_check_branch
          %520 = sbr.rel (%p518) target = $region36
        $region35: #{tpu_custom_call.1} parent=11 // pred_region
          %s522 = ssub.s32 16, 16
          %523 = vsyncadd [#allocation15], %s522
          %s525 = sshll.u32 [#allocation14], 4
          %s526 = int_to_ptr.vmem [resolvable:$true] %s525
          %528 = dma.hbm_to_vmem [thread:$0]  %s7, 16, %s526, [#allocation15]
        $region36: #{tpu_custom_call.1} parent=11 // pred_fallthru
          _
        // Predicated region
        $region37: #{tpu_custom_call.1} parent=11 // pred_check
          %p529 = pneg %p247
        $region38: #{tpu_custom_call.1} parent=11 // pred_check_branch
          %531 = sbr.rel (%p529) target = $region40
        $region39: #{tpu_custom_call.1} parent=11 // pred_region
          %s533 = ssub.s32 256, 256
          %534 = vsyncadd [#allocation15], %s533
          %s535 = sshll.u32 [#allocation16], 4
          %s536 = int_to_ptr.vmem [resolvable:$true] %s535
          %541 = dma.hbm_to_vmem [thread:$0]  %s8, 256, %s536, [#allocation15], 64, 64, 4
        $region40: #{tpu_custom_call.1} parent=11 // pred_fallthru
          _
        // Predicated region
        $region41: #{tpu_custom_call.1} parent=11 // pred_check
          %p542 = pneg %p268
        $region42: #{tpu_custom_call.1} parent=11 // pred_check_branch
          %544 = sbr.rel (%p542) target = $region44
        $region43: #{tpu_custom_call.1} parent=11 // pred_region
          %s546 = ssub.s32 16, 16
          %547 = vsyncadd [#allocation18], %s546
          %s549 = sshll.u32 [#allocation17], 4
          %s550 = int_to_ptr.vmem [resolvable:$true] %s549
          %552 = dma.hbm_to_vmem [thread:$0]  %s9, 16, %s550, [#allocation18]
        $region44: #{tpu_custom_call.1} parent=11 // pred_fallthru
          _
        // Predicated region
        $region45: #{tpu_custom_call.1} parent=11 // pred_check
          %p553 = pneg %p289
        $region46: #{tpu_custom_call.1} parent=11 // pred_check_branch
          %555 = sbr.rel (%p553) target = $region48
        $region47: #{tpu_custom_call.1} parent=11 // pred_region
          _
        $region48: #{tpu_custom_call.1} parent=11 // pred_fallthru
          _
        // Predicated region
        $region49: #{tpu_custom_call.1} parent=11 // pred_check
          %p556 = pneg %p310
        $region50: #{tpu_custom_call.1} parent=11 // pred_check_branch
          %558 = sbr.rel (%p556) target = $region52
        $region51: #{tpu_custom_call.1} parent=11 // pred_region
          %s560 = ssub.s32 16, 16
          %561 = vsyncadd [#allocation18], %s560
          %s563 = sshll.u32 [#allocation19], 4
          %s564 = int_to_ptr.vmem [resolvable:$true] %s563
          %566 = dma.hbm_to_vmem [thread:$0]  %s11, 16, %s564, [#allocation18]
        $region52: #{tpu_custom_call.1} parent=11 // pred_fallthru
          _
        // Predicated region
        $region53: #{tpu_custom_call.1} parent=11 // pred_check
          %p567 = pneg %p331
        $region54: #{tpu_custom_call.1} parent=11 // pred_check_branch
          %569 = sbr.rel (%p567) target = $region56
        $region55: #{tpu_custom_call.1} parent=11 // pred_region
          %s571 = ssub.s32 256, 256
          %572 = vsyncadd [#allocation21], %s571
          %s573 = sshll.u32 [#allocation20], 4
          %s574 = int_to_ptr.vmem [resolvable:$true] %s573
          %579 = dma.hbm_to_vmem [thread:$0]  %s12, 256, %s574, [#allocation21], 64, 64, 4
        $region56: #{tpu_custom_call.1} parent=11 // pred_fallthru
          _
        // Predicated region
        $region57: #{tpu_custom_call.1} parent=11 // pred_check
          %p580 = pneg %p352
        $region58: #{tpu_custom_call.1} parent=11 // pred_check_branch
          %582 = sbr.rel (%p580) target = $region60
        $region59: #{tpu_custom_call.1} parent=11 // pred_region
          %s584 = ssub.s32 16, 16
          %585 = vsyncadd [#allocation21], %s584
          %s587 = sshll.u32 [#allocation22], 4
          %s588 = int_to_ptr.vmem [resolvable:$true] %s587
          %590 = dma.hbm_to_vmem [thread:$0]  %s13, 16, %s588, [#allocation21]
        $region60: #{tpu_custom_call.1} parent=11 // pred_fallthru
          _
        // Predicated region
        $region61: #{tpu_custom_call.1} parent=11 // pred_check
          %p591 = pneg %p373
        $region62: #{tpu_custom_call.1} parent=11 // pred_check_branch
          %593 = sbr.rel (%p591) target = $region64
        $region63: #{tpu_custom_call.1} parent=11 // pred_region
          _
        $region64: #{tpu_custom_call.1} parent=11 // pred_fallthru
          _
        // Predicated region
        $region65: #{tpu_custom_call.1} parent=11 // pred_check
          %p594 = pneg %p394
        $region66: #{tpu_custom_call.1} parent=11 // pred_check_branch
          %596 = sbr.rel (%p594) target = $region68
        $region67: #{tpu_custom_call.1} parent=11 // pred_region
          _
        $region68: #{tpu_custom_call.1} parent=11 // pred_fallthru
          _
        // Predicated region
        $region69: #{tpu_custom_call.1} parent=11 // pred_check
          %p597 = pneg %p415
        $region70: #{tpu_custom_call.1} parent=11 // pred_check_branch
          %599 = sbr.rel (%p597) target = $region72
        $region71: #{tpu_custom_call.1} parent=11 // pred_region
          _
        $region72: #{tpu_custom_call.1} parent=11 // pred_fallthru
          _
        // Predicated region
        $region73: #{tpu_custom_call.1} parent=11 // pred_check
          %p600 = pneg %p436
        $region74: #{tpu_custom_call.1} parent=11 // pred_check_branch
          %602 = sbr.rel (%p600) target = $region76
        $region75: #{tpu_custom_call.1} parent=11 // pred_region
          _
        $region76: #{tpu_custom_call.1} parent=11 // pred_fallthru
          _
      $region12: #{tpu_custom_call.1} parent=5 // pred_fallthru
        _
      %p603 = scmp.lt.s32.totalorder %s32, 2
      // Predicated region
      $region77: #{tpu_custom_call.1} parent=5 // pred_check
        %p604 = pneg %p603
      $region78: #{tpu_custom_call.1} parent=5 // pred_check_branch
        %606 = sbr.rel (%p604) target = $region80
      $region79: #{tpu_custom_call.1} parent=5 // pred_region
        // Predicated region
        $region81: #{tpu_custom_call.1} parent=79 // pred_check
          %p607 = pneg %p66
        $region82: #{tpu_custom_call.1} parent=79 // pred_check_branch
          %609 = sbr.rel (%p607) target = $region84
        $region83: #{tpu_custom_call.1} parent=79 // pred_region
          %p610 = scmp.lt.s32.totalorder %s39, 1
          %s611 = scalar_select %p610, %s39, 1
          %p612 = scmp.lt.s32.totalorder %s40, 0
          %s613 = scalar_select %p612, %s40, 0
          %s614 = sadd.s32 %s613, %s611
          %s615 = smul.addr %s614, 8
          %s616 = scalar_lea.vmem %s0, %s615
        $region84: #{tpu_custom_call.1} parent=79 // pred_fallthru
          _
        // Predicated region
        $region85: #{tpu_custom_call.1} parent=79 // pred_check
          %p617 = pneg %p94
        $region86: #{tpu_custom_call.1} parent=79 // pred_check_branch
          %619 = sbr.rel (%p617) target = $region88
        $region87: #{tpu_custom_call.1} parent=79 // pred_region
          %p620 = scmp.lt.s32.totalorder %s39, 1
          %s621 = scalar_select %p620, %s39, 1
          %p622 = scmp.lt.s32.totalorder %s40, 0
          %s623 = scalar_select %p622, %s40, 0
          %s624 = sadd.s32 %s623, %s621
          %s625 = smul.addr %s624, 8
          %s626 = scalar_lea.vmem %s1, %s625
        $region88: #{tpu_custom_call.1} parent=79 // pred_fallthru
          _
      $region80: #{tpu_custom_call.1} parent=5 // pred_fallthru
        _
      %p627 = scmp.le.s32.totalorder 1, %s32
      %p628 = scmp.lt.s32.totalorder %s32, 3
      %p629 = pnand %p627, %p628
      %p630 = pneg %p629
      // Predicated region
      $region89: #{tpu_custom_call.1} parent=5 // pred_check
        _
      $region90: #{tpu_custom_call.1} parent=5 // pred_check_branch
        %632 = sbr.rel (%p629) target = $region92
      $region91: #{tpu_custom_call.1} parent=5 // pred_region
        %s633 = ssub.s32 %s32, 1
        // Predicated region
        $region93: #{tpu_custom_call.1} parent=91 // pred_check
          %p634 = pneg %p142
        $region94: #{tpu_custom_call.1} parent=91 // pred_check_branch
          %636 = sbr.rel (%p634) target = $region96
        $region95: #{tpu_custom_call.1} parent=91 // pred_region
          %637 = dma.done [#allocation9], 16
        $region96: #{tpu_custom_call.1} parent=91 // pred_fallthru
          _
        // Predicated region
        $region97: #{tpu_custom_call.1} parent=91 // pred_check
          %p638 = pneg %p163
        $region98: #{tpu_custom_call.1} parent=91 // pred_check_branch
          %640 = sbr.rel (%p638) target = $region100
        $region99: #{tpu_custom_call.1} parent=91 // pred_region
          %641 = dma.done [#allocation12], 16
        $region100: #{tpu_custom_call.1} parent=91 // pred_fallthru
          _
        // Predicated region
        $region101: #{tpu_custom_call.1} parent=91 // pred_check
          %p642 = pneg %p184
        $region102: #{tpu_custom_call.1} parent=91 // pred_check_branch
          %644 = sbr.rel (%p642) target = $region104
        $region103: #{tpu_custom_call.1} parent=91 // pred_region
          %645 = dma.done [#allocation12], 16
        $region104: #{tpu_custom_call.1} parent=91 // pred_fallthru
          _
        // Predicated region
        $region105: #{tpu_custom_call.1} parent=91 // pred_check
          %p646 = pneg %p226
        $region106: #{tpu_custom_call.1} parent=91 // pred_check_branch
          %648 = sbr.rel (%p646) target = $region108
        $region107: #{tpu_custom_call.1} parent=91 // pred_region
          %649 = dma.done [#allocation15], 16
        $region108: #{tpu_custom_call.1} parent=91 // pred_fallthru
          _
        // Predicated region
        $region109: #{tpu_custom_call.1} parent=91 // pred_check
          %p650 = pneg %p247
        $region110: #{tpu_custom_call.1} parent=91 // pred_check_branch
          %652 = sbr.rel (%p650) target = $region112
        $region111: #{tpu_custom_call.1} parent=91 // pred_region
          %653 = dma.done [#allocation15], 256
        $region112: #{tpu_custom_call.1} parent=91 // pred_fallthru
          _
        // Predicated region
        $region113: #{tpu_custom_call.1} parent=91 // pred_check
          %p654 = pneg %p268
        $region114: #{tpu_custom_call.1} parent=91 // pred_check_branch
          %656 = sbr.rel (%p654) target = $region116
        $region115: #{tpu_custom_call.1} parent=91 // pred_region
          %657 = dma.done [#allocation18], 16
        $region116: #{tpu_custom_call.1} parent=91 // pred_fallthru
          _
        // Predicated region
        $region117: #{tpu_custom_call.1} parent=91 // pred_check
          %p658 = pneg %p310
        $region118: #{tpu_custom_call.1} parent=91 // pred_check_branch
          %660 = sbr.rel (%p658) target = $region120
        $region119: #{tpu_custom_call.1} parent=91 // pred_region
          %661 = dma.done [#allocation18], 16
        $region120: #{tpu_custom_call.1} parent=91 // pred_fallthru
          _
        // Predicated region
        $region121: #{tpu_custom_call.1} parent=91 // pred_check
          %p662 = pneg %p331
        $region122: #{tpu_custom_call.1} parent=91 // pred_check_branch
          %664 = sbr.rel (%p662) target = $region124
        $region123: #{tpu_custom_call.1} parent=91 // pred_region
          %665 = dma.done [#allocation21], 256
        $region124: #{tpu_custom_call.1} parent=91 // pred_fallthru
          _
        // Predicated region
        $region125: #{tpu_custom_call.1} parent=91 // pred_check
          %p666 = pneg %p352
        $region126: #{tpu_custom_call.1} parent=91 // pred_check_branch
          %668 = sbr.rel (%p666) target = $region128
        $region127: #{tpu_custom_call.1} parent=91 // pred_region
          %669 = dma.done [#allocation21], 16
        $region128: #{tpu_custom_call.1} parent=91 // pred_fallthru
          _
        %p670 = scmp.lt.s32.totalorder %s41, 1
        %s671 = scalar_select %p670, %s41, 1
        %p672 = scmp.lt.s32.totalorder %s42, 0
        %s673 = scalar_select %p672, %s42, 0
        %s674 = sadd.s32 %s673, %s671
        %s675 = smul.addr %s674, 8
        %s676 = scalar_lea.vmem %s0, %s675
        %p677 = pneg %p72
        %p678 = pneg %p69
        %p679 = scmp.lt.s32.totalorder %s41, 1
        %s680 = scalar_select %p679, %s41, 1
        %p681 = scmp.lt.s32.totalorder %s42, 0
        %s682 = scalar_select %p681, %s42, 0
        %s683 = sadd.s32 %s682, %s680
        %s684 = smul.addr %s683, 8
        %s685 = scalar_lea.vmem %s1, %s684
        %p686 = pneg %p100
        %p687 = pneg %p97
        %p688 = pneg %p121
        %p689 = pneg %p118
        %p690 = pneg %p142
        %p691 = pneg %p139
        %p692 = pneg %p163
        %p693 = pneg %p160
        %p694 = pneg %p184
        %p695 = pneg %p181
        %p696 = pneg %p205
        %p697 = pneg %p202
        %p698 = pneg %p226
        %p699 = pneg %p223
        %p700 = pneg %p247
        %p701 = pneg %p244
        %p702 = pneg %p268
        %p703 = pneg %p265
        %p704 = pneg %p289
        %p705 = pneg %p286
        %p706 = pneg %p310
        %p707 = pneg %p307
        %p708 = pneg %p331
        %p709 = pneg %p328
        %p710 = pneg %p352
        %p711 = pneg %p349
        %p712 = pneg %p373
        %p713 = pneg %p370
        %p714 = pneg %p394
        %p715 = pneg %p391
        %p716 = pneg %p415
        %p717 = pneg %p412
        %p718 = pneg %p436
        %p719 = pneg %p433
        %p720 = pneg %p464
        %p721 = pneg %p461
        %s722 = sand.u32 %s451, 1
        %s723 = scalar_lea.sflag [#allocation10], %s722
        %s724 = sand.u32 %s451, 1
        %s725 = smul.addr %s724, 8
        %s726 = scalar_lea.vmem [#allocation23], %s725
        %p727 = scmp.lt.s32.totalorder %s41, 1
        %s728 = scalar_select %p727, %s41, 1
        %p729 = scmp.lt.s32.totalorder %s42, 0
        %s730 = scalar_select %p729, %s42, 0
        %s731 = sadd.s32 %s730, %s728
        %s732 = smul.addr %s731, 8
        %s733 = scalar_lea.vmem %s0, %s732
        %p734 = scmp.lt.s32.totalorder %s41, 1
        %s735 = scalar_select %p734, %s41, 1
        %p736 = scmp.lt.s32.totalorder %s42, 0
        %s737 = scalar_select %p736, %s42, 0
        %s738 = sadd.s32 %s737, %s735
        %s739 = smul.addr %s738, 8
        %s740 = scalar_lea.vmem %s1, %s739
        %v742 = vld [vmem:[%s733] sm:$0xff]
        %v743 = vld [vmem:[%s740] sm:$0xff]
        %v744 = vld [vmem:[%s2] sm:$0x1]
        %v745 = vld [vmem:[#allocation8] sm:$0x1]
        %v746 = vld [vmem:[#allocation11] sm:$0x1]
        %v747 = vld [vmem:[#allocation13] sm:$0x1]
        %v748 = vld [vmem:[%s6] sm:$0xf]
        %v749 = vld [vmem:[%s6 + $0x4] sm:$0xf]
        %v750 = vld [vmem:[%s6 + $0x8] sm:$0xf]
        %v751 = vld [vmem:[%s6 + $0xc] sm:$0xf]
        %v752 = vld [vmem:[#allocation14] sm:$0x1]
        %v753 = vld [vmem:[#allocation16] sm:$0xf]
        %v754 = vld [vmem:[#allocation16 + $0x4] sm:$0xf]
        %v755 = vld [vmem:[#allocation16 + $0x8] sm:$0xf]
        %v756 = vld [vmem:[#allocation16 + $0xc] sm:$0xf]
        %v757 = vld [vmem:[#allocation17] sm:$0x1]
        %v758 = vld [vmem:[%s10] sm:$0xf]
        %v759 = vld [vmem:[%s10 + $0x4] sm:$0xf]
        %v760 = vld [vmem:[%s10 + $0x8] sm:$0xf]
        %v761 = vld [vmem:[%s10 + $0xc] sm:$0xf]
        %v762 = vld [vmem:[#allocation19] sm:$0x1]
        %v763 = vld [vmem:[#allocation20] sm:$0xf]
        %v764 = vld [vmem:[#allocation20 + $0x4] sm:$0xf]
        %v765 = vld [vmem:[#allocation20 + $0x8] sm:$0xf]
        %v766 = vld [vmem:[#allocation20 + $0xc] sm:$0xf]
        %v767 = vld [vmem:[#allocation22] sm:$0x1]
        %v768 = vld [vmem:[%s14] sm:$0xf]
        %v769 = vld [vmem:[%s14 + $0x4] sm:$0xf]
        %v770 = vld [vmem:[%s14 + $0x8] sm:$0xf]
        %v771 = vld [vmem:[%s14 + $0xc] sm:$0xf]
        %v772 = vld [vmem:[%s15] sm:$0x1]
        %v773 = vld [vmem:[%s16] sm:$0xf]
        %v774 = vld [vmem:[%s16 + $0x4] sm:$0xf]
        %v775 = vld [vmem:[%s16 + $0x8] sm:$0xf]
        %v776 = vld [vmem:[%s16 + $0xc] sm:$0xf]
        %v777 = vld [vmem:[%s16 + $0x10] sm:$0xf]
        %v778 = vld [vmem:[%s16 + $0x14] sm:$0xf]
        %v779 = vld [vmem:[%s16 + $0x18] sm:$0xf]
        %v780 = vld [vmem:[%s16 + $0x1c] sm:$0xf]
        %v781 = vld [vmem:[%s17] sm:$0x1]
        %v782 = vadd.f32 %v742, %v743
        %vm783 = vcmask 261120
        %v784 = vsel %vm783, %v742, 0.0
        %785 = vadd.xlane.f32.xlu0 %v784
        %v786 = vpop.xlane.xlu0 %785
        %v787 = vrcp.pop 32.0
        %v788 = vmul.f32 %v786, %v787
        %v789 = vsub.f32 %v742, %v788
        %v790 = vmul.f32 %v789, %v789
        %v791 = vsel %vm783, %v790, 0.0
        %792 = vadd.xlane.f32.xlu0 %v791
        %v793 = vpop.xlane.xlu0 %792
        %v794 = vmul.f32 %v793, %v787
        %v795 = vadd.f32 %v794, 1e-05
        %v796 = vrsqrt.pop %v795
        %v797 = vmul.f32 %v789, %v796
        %v799 = vlaneseq
        %v800 = vshrl.u32 %v799, 7
        %v801 = vsub.s32 0, %v800
        %v802 = vrot.slane %v744, %v801
        %v804 = vmul.f32 %v797, %v802
        %v806 = vlaneseq
        %v807 = vshrl.u32 %v806, 7
        %v808 = vsub.s32 0, %v807
        %v809 = vrot.slane %v745, %v808
        %v811 = vadd.f32 %v804, %v809
        %v812 = vpack.c.bf16 %v811, %v811
        %v814 = vlaneseq
        %v815 = vshrl.u32 %v814, 7
        %v816 = vsub.s32 0, %v815
        %v817 = vrot.slane %v757, %v816
        %v823 = vunpack.c.l.b16 %v753
        %v824 = vunpack.c.l.b16 %v754
        %v825 = vunpack.c.l.b16 %v755
        %v826 = vunpack.c.l.b16 %v756
        %v827 = vpack.c.b16 %v824, %v823
        %v828 = vpack.c.b16 %v826, %v825
        %v832 = vsel %vm783, %v812, 0
        %834 = vmatprep.subr.bf16.mxu0 0
        %835 = vmatpush1.bf16.msra.mxu0 %v827
        %836 = vmatprep.subr.bf16.mxu0 0
        %837 = vmatpush1.bf16.msra.mxu0 %v828
        %838 = vmatprep.subr.bf16.mxu0 0
        %839 = vmatpush1.bf16.msra.mxu0 0
        %840 = vmatprep.subr.bf16.mxu0 0
        %841 = vmatpush1.bf16.msra.mxu0 0
        %842 = vmatprep.subr.bf16.mxu0 0
        %843 = vmatpush1.bf16.msra.mxu0 0
        %844 = vmatprep.subr.bf16.mxu0 0
        %845 = vmatpush1.bf16.msra.mxu0 0
        %846 = vmatprep.subr.bf16.mxu0 0
        %847 = vmatpush1.bf16.msra.mxu0 0
        %848 = vmatprep.subr.bf16.mxu0 0
        %849 = vmatpush1.bf16.msra.mxu0 0
        %850 = vmatprep.subr.bf16.mxu0 0
        %851 = vmatpush1.bf16.msra.mxu0 0
        %852 = vmatprep.subr.bf16.mxu0 0
        %853 = vmatpush1.bf16.msra.mxu0 0
        %854 = vmatprep.subr.bf16.mxu0 0
        %855 = vmatpush1.bf16.msra.mxu0 0
        %856 = vmatprep.subr.bf16.mxu0 0
        %857 = vmatpush1.bf16.msra.mxu0 0
        %858 = vmatprep.subr.bf16.mxu0 0
        %859 = vmatpush1.bf16.msra.mxu0 0
        %860 = vmatprep.subr.bf16.mxu0 0
        %861 = vmatpush1.bf16.msra.mxu0 0
        %862 = vmatprep.subr.bf16.mxu0 0
        %863 = vmatpush1.bf16.msra.mxu0 0
        %864 = vmatprep.subr.bf16.mxu0 0
        %865 = vmatpush1.bf16.msra.mxu0 0
        %866 = vmatprep.mubr.bf16.mxu0 0
        %867 = vmatmul.mubr.bf16.gmra.mrb[0].mxu0 %v832
        %v868 = vpop.f32.mrb[0].mxu0
        %v869 = vadd.f32 %v817, %v868
        %v870 = vpop.f32.mrb[0].mxu0
        %v871 = vpop.f32.mrb[0].mxu0
        %v872 = vpop.f32.mrb[0].mxu0
        %873 = vdwg.mxu0
        %v875 = vlaneseq
        %v876 = vshrl.u32 %v875, 7
        %v877 = vsub.s32 0, %v876
        %v878 = vrot.slane %v762, %v877
        %v884 = vunpack.c.l.b16 %v758
        %v885 = vunpack.c.l.b16 %v759
        %v886 = vunpack.c.l.b16 %v760
        %v887 = vunpack.c.l.b16 %v761
        %v888 = vpack.c.b16 %v885, %v884
        %v889 = vpack.c.b16 %v887, %v886
        %892 = vmatprep.subr.bf16.mxu0 0
        %893 = vmatpush1.bf16.msra.mxu0 %v888
        %894 = vmatprep.subr.bf16.mxu0 0
        %895 = vmatpush1.bf16.msra.mxu0 %v889
        %896 = vmatprep.subr.bf16.mxu0 0
        %897 = vmatpush1.bf16.msra.mxu0 0
        %898 = vmatprep.subr.bf16.mxu0 0
        %899 = vmatpush1.bf16.msra.mxu0 0
        %900 = vmatprep.subr.bf16.mxu0 0
        %901 = vmatpush1.bf16.msra.mxu0 0
        %902 = vmatprep.subr.bf16.mxu0 0
        %903 = vmatpush1.bf16.msra.mxu0 0
        %904 = vmatprep.subr.bf16.mxu0 0
        %905 = vmatpush1.bf16.msra.mxu0 0
        %906 = vmatprep.subr.bf16.mxu0 0
        %907 = vmatpush1.bf16.msra.mxu0 0
        %908 = vmatprep.subr.bf16.mxu0 0
        %909 = vmatpush1.bf16.msra.mxu0 0
        %910 = vmatprep.subr.bf16.mxu0 0
        %911 = vmatpush1.bf16.msra.mxu0 0
        %912 = vmatprep.subr.bf16.mxu0 0
        %913 = vmatpush1.bf16.msra.mxu0 0
        %914 = vmatprep.subr.bf16.mxu0 0
        %915 = vmatpush1.bf16.msra.mxu0 0
        %916 = vmatprep.subr.bf16.mxu0 0
        %917 = vmatpush1.bf16.msra.mxu0 0
        %918 = vmatprep.subr.bf16.mxu0 0
        %919 = vmatpush1.bf16.msra.mxu0 0
        %920 = vmatprep.subr.bf16.mxu0 0
        %921 = vmatpush1.bf16.msra.mxu0 0
        %922 = vmatprep.subr.bf16.mxu0 0
        %923 = vmatpush1.bf16.msra.mxu0 0
        %924 = vmatprep.mubr.bf16.mxu0 0
        %925 = vmatmul.mubr.bf16.gmra.mrb[0].mxu0 %v832
        %v926 = vpop.f32.mrb[0].mxu0
        %v927 = vadd.f32 %v878, %v926
        %v928 = vpop.f32.mrb[0].mxu0
        %v929 = vpop.f32.mrb[0].mxu0
        %v930 = vpop.f32.mrb[0].mxu0
        %931 = vdwg.mxu0
        %s932 = smul.u32 %s42, 8
        %v933 = vpack.c.bf16 %v869, %v869
        %s934 = sshra.s32 %s932, 3
        %s935 = sand.u32 %s932, 7
        %s936 = smul.addr %s934, 4
        %s937 = scalar_lea.vmem [#allocation2], %s936
        %vm938 = vcmask 60416
        %939 = vst.msk [vmem:[%s937] sm:$0xf] %vm938, %v933
        %v941 = vunpack.c.l.b16 %v933
        %v942 = vpack.c.b16 %v941, %v941
        %943 = vrot.lane.b32.xlu0 %v942, 120
        %v944 = vpop.permute.xlu0 %943
        %s946 = sadd.s32 %s934, 1
        %s947 = smul.addr %s946, 4
        %s948 = scalar_lea.vmem [#allocation2], %s947
        %949 = vst.msk [vmem:[%s948] sm:$0xf] %vm938, %v944
        %950 = vrot.lane.b32.xlu0 %v942, 112
        %v951 = vpop.permute.xlu0 %950
        %s953 = sadd.s32 %s934, 2
        %s954 = smul.addr %s953, 4
        %s955 = scalar_lea.vmem [#allocation2], %s954
        %956 = vst.msk [vmem:[%s955] sm:$0xf] %vm938, %v951
        %957 = vrot.lane.b32.xlu0 %v942, 104
        %v958 = vpop.permute.xlu0 %957
        %s960 = sadd.s32 %s934, 3
        %s961 = smul.addr %s960, 4
        %s962 = scalar_lea.vmem [#allocation2], %s961
        %963 = vst.msk [vmem:[%s962] sm:$0xf] %vm938, %v958
        %v964 = vpack.c.bf16 %v927, %v927
        %s965 = smul.addr %s934, 4
        %s966 = scalar_lea.vmem [#allocation3], %s965
        %967 = vst.msk [vmem:[%s966] sm:$0xf] %vm938, %v964
        %v969 = vunpack.c.l.b16 %v964
        %v970 = vpack.c.b16 %v969, %v969
        %971 = vrot.lane.b32.xlu0 %v970, 120
        %v972 = vpop.permute.xlu0 %971
        %s974 = smul.addr %s946, 4
        %s975 = scalar_lea.vmem [#allocation3], %s974
        %976 = vst.msk [vmem:[%s975] sm:$0xf] %vm938, %v972
        %977 = vrot.lane.b32.xlu0 %v970, 112
        %v978 = vpop.permute.xlu0 %977
        %s980 = smul.addr %s953, 4
        %s981 = scalar_lea.vmem [#allocation3], %s980
        %982 = vst.msk [vmem:[%s981] sm:$0xf] %vm938, %v978
        %983 = vrot.lane.b32.xlu0 %v970, 104
        %v984 = vpop.permute.xlu0 %983
        %s986 = smul.addr %s960, 4
        %s987 = scalar_lea.vmem [#allocation3], %s986
        %988 = vst.msk [vmem:[%s987] sm:$0xf] %vm938, %v984
        %v989 = vsel %vm783, %v743, 0.0
        %990 = vadd.xlane.f32.xlu0 %v989
        %v991 = vpop.xlane.xlu0 %990
        %v992 = vmul.f32 %v991, %v787
        %v993 = vsub.f32 %v743, %v992
        %v994 = vmul.f32 %v993, %v993
        %v995 = vsel %vm783, %v994, 0.0
        %996 = vadd.xlane.f32.xlu0 %v995
        %v997 = vpop.xlane.xlu0 %996
        %v998 = vmul.f32 %v997, %v787
        %v999 = vadd.f32 %v998, 1e-05
        %v1000 = vrsqrt.pop %v999
        %v1001 = vmul.f32 %v993, %v1000
        %v1002 = vmul.f32 %v1001, %v802
        %v1003 = vadd.f32 %v1002, %v809
        %v1004 = vpack.c.bf16 %v1003, %v1003
        %v1006 = vlaneseq
        %v1007 = vshrl.u32 %v1006, 7
        %v1008 = vsub.s32 0, %v1007
        %v1009 = vrot.slane %v752, %v1008
        %v1015 = vunpack.c.l.b16 %v748
        %v1016 = vunpack.c.l.b16 %v749
        %v1017 = vunpack.c.l.b16 %v750
        %v1018 = vunpack.c.l.b16 %v751
        %v1019 = vpack.c.b16 %v1016, %v1015
        %v1020 = vpack.c.b16 %v1018, %v1017
        %v1024 = vsel %vm783, %v1004, 0
        %1026 = vmatprep.subr.bf16.mxu0 0
        %1027 = vmatpush1.bf16.msra.mxu0 %v1019
        %1028 = vmatprep.subr.bf16.mxu0 0
        %1029 = vmatpush1.bf16.msra.mxu0 %v1020
        %1030 = vmatprep.subr.bf16.mxu0 0
        %1031 = vmatpush1.bf16.msra.mxu0 0
        %1032 = vmatprep.subr.bf16.mxu0 0
        %1033 = vmatpush1.bf16.msra.mxu0 0
        %1034 = vmatprep.subr.bf16.mxu0 0
        %1035 = vmatpush1.bf16.msra.mxu0 0
        %1036 = vmatprep.subr.bf16.mxu0 0
        %1037 = vmatpush1.bf16.msra.mxu0 0
        %1038 = vmatprep.subr.bf16.mxu0 0
        %1039 = vmatpush1.bf16.msra.mxu0 0
        %1040 = vmatprep.subr.bf16.mxu0 0
        %1041 = vmatpush1.bf16.msra.mxu0 0
        %1042 = vmatprep.subr.bf16.mxu0 0
        %1043 = vmatpush1.bf16.msra.mxu0 0
        %1044 = vmatprep.subr.bf16.mxu0 0
        %1045 = vmatpush1.bf16.msra.mxu0 0
        %1046 = vmatprep.subr.bf16.mxu0 0
        %1047 = vmatpush1.bf16.msra.mxu0 0
        %1048 = vmatprep.subr.bf16.mxu0 0
        %1049 = vmatpush1.bf16.msra.mxu0 0
        %1050 = vmatprep.subr.bf16.mxu0 0
        %1051 = vmatpush1.bf16.msra.mxu0 0
        %1052 = vmatprep.subr.bf16.mxu0 0
        %1053 = vmatpush1.bf16.msra.mxu0 0
        %1054 = vmatprep.subr.bf16.mxu0 0
        %1055 = vmatpush1.bf16.msra.mxu0 0
        %1056 = vmatprep.subr.bf16.mxu0 0
        %1057 = vmatpush1.bf16.msra.mxu0 0
        %1058 = vmatprep.mubr.bf16.mxu0 0
        %1059 = vmatmul.mubr.bf16.gmra.mrb[0].mxu0 %v1024
        %v1060 = vpop.f32.mrb[0].mxu0
        %v1061 = vadd.f32 %v1009, %v1060
        %v1062 = vpop.f32.mrb[0].mxu0
        %v1063 = vpop.f32.mrb[0].mxu0
        %v1064 = vpop.f32.mrb[0].mxu0
        %1065 = vdwg.mxu0
        %v1066 = vpack.c.bf16 %v1061, %v1061
        %1067 = vst.msk [vmem:[#allocation4] sm:$0xf] %vm938, %v1066
        %v1069 = vunpack.c.l.b16 %v1066
        %v1070 = vpack.c.b16 %v1069, %v1069
        %1071 = vrot.lane.b32.xlu0 %v1070, 120
        %v1072 = vpop.permute.xlu0 %1071
        %s1074 = scalar_lea.vmem [#allocation4], 4
        %1075 = vst.msk [vmem:[%s1074] sm:$0xf] %vm938, %v1072
        %1076 = vrot.lane.b32.xlu0 %v1070, 112
        %v1077 = vpop.permute.xlu0 %1076
        %s1079 = scalar_lea.vmem [#allocation4], 8
        %1080 = vst.msk [vmem:[%s1079] sm:$0xf] %vm938, %v1077
        %1081 = vrot.lane.b32.xlu0 %v1070, 104
        %v1082 = vpop.permute.xlu0 %1081
        %s1084 = scalar_lea.vmem [#allocation4], 12
        %1085 = vst.msk [vmem:[%s1084] sm:$0xf] %vm938, %v1082
        %v1086 = vld [vmem:[#allocation4] sm:$0xf]
        %v1087 = vld [vmem:[#allocation4 + $0x4] sm:$0xf]
        %v1088 = vld [vmem:[#allocation4 + $0x8] sm:$0xf]
        %v1089 = vld [vmem:[#allocation4 + $0xc] sm:$0xf]
        %vm1090 = vcmask 7168
        %1091 = vst.msk [vmem:[#allocation5] sm:$0xff] %vm1090, -1e+30
        %1092 = vst.msk [vmem:[#allocation5 + $0x8] sm:$0xff] %vm1090, -1e+30
        %1093 = vst.msk [vmem:[#allocation5 + $0x10] sm:$0xff] %vm1090, -1e+30
        %1094 = vst.msk [vmem:[#allocation5 + $0x18] sm:$0xff] %vm1090, -1e+30
        %1095 = vst.msk [vmem:[#allocation6] sm:$0xff] %vm1090, 0.0
        %1096 = vst.msk [vmem:[#allocation6 + $0x8] sm:$0xff] %vm1090, 0.0
        %1097 = vst.msk [vmem:[#allocation6 + $0x10] sm:$0xff] %vm1090, 0.0
        %1098 = vst.msk [vmem:[#allocation6 + $0x18] sm:$0xff] %vm1090, 0.0
        %vm1099 = vcmask 64512
        %1100 = vst.msk [vmem:[#allocation7] sm:$0xff] %vm1099, 0.0
        %1101 = vst.msk [vmem:[#allocation7 + $0x8] sm:$0xff] %vm1099, 0.0
        %1102 = vst.msk [vmem:[#allocation7 + $0x10] sm:$0xff] %vm1099, 0.0
        %1103 = vst.msk [vmem:[#allocation7 + $0x18] sm:$0xff] %vm1099, 0.0
        // While loop
        $region129: #{tpu_custom_call.1} parent=91 // loop_pre_header
          _
        $region130: #{tpu_custom_call.1} parent=91 // loop_header
          %s1105 = sphi 0, %s1107
          %p1106 = scmp.ge.s32.totalorder %s1105, %s42
        $region131: #{tpu_custom_call.1} parent=91 // loop_header_branch
          %1109 = sbr.rel (%p1106) target = $region135
        $region132: #{tpu_custom_call.1} parent=91 // loop_body
          %s1110 = smul.u32 %s1105, 8
          %s1111 = sshra.s32 %s1110, 3
          %s1112 = sand.u32 %s1110, 7
          %s1113 = smul.addr %s1111, 4
          %s1114 = scalar_lea.vmem [#allocation2], %s1113
          %v1115 = vld [vmem:[%s1114] sm:$0xf]
          %v1116 = vld [vmem:[%s1114 + $0x4] sm:$0xf]
          %v1117 = vld [vmem:[%s1114 + $0x8] sm:$0xf]
          %v1118 = vld [vmem:[%s1114 + $0xc] sm:$0xf]
          %s1119 = smul.addr %s1111, 4
          %s1120 = scalar_lea.vmem [#allocation3], %s1119
          %v1121 = vld [vmem:[%s1120] sm:$0xf]
          %v1122 = vld [vmem:[%s1120 + $0x4] sm:$0xf]
          %v1123 = vld [vmem:[%s1120 + $0x8] sm:$0xf]
          %v1124 = vld [vmem:[%s1120 + $0xc] sm:$0xf]
          %v1126 = vsel %vm1099, %v1086, 0
          %v1129 = vsel %vm1099, %v1115, 0
          %1131 = vmatprep.subr.bf16.mxu0 0
          %1132 = vmatpush1.bf16.xpose.msra.mxu0 %v1129
          %1133 = vmatprep.subr.bf16.mxu0 0
          %1134 = vmatpush1.bf16.xpose.msra.mxu0 0
          %1135 = vmatprep.subr.bf16.mxu0 0
          %1136 = vmatpush1.bf16.xpose.msra.mxu0 0
          %1137 = vmatprep.subr.bf16.mxu0 0
          %1138 = vmatpush1.bf16.xpose.msra.mxu0 0
          %1139 = vmatprep.subr.bf16.mxu0 0
          %1140 = vmatpush1.bf16.xpose.msra.mxu0 0
          %1141 = vmatprep.subr.bf16.mxu0 0
          %1142 = vmatpush1.bf16.xpose.msra.mxu0 0
          %1143 = vmatprep.subr.bf16.mxu0 0
          %1144 = vmatpush1.bf16.xpose.msra.mxu0 0
          %1145 = vmatprep.subr.bf16.mxu0 0
          %1146 = vmatpush1.bf16.xpose.msra.mxu0 0
          %1147 = vmatprep.subr.bf16.mxu0 0
          %1148 = vmatpush1.bf16.xpose.msra.mxu0 0
          %1149 = vmatprep.subr.bf16.mxu0 0
          %1150 = vmatpush1.bf16.xpose.msra.mxu0 0
          %1151 = vmatprep.subr.bf16.mxu0 0
          %1152 = vmatpush1.bf16.xpose.msra.mxu0 0
          %1153 = vmatprep.subr.bf16.mxu0 0
          %1154 = vmatpush1.bf16.xpose.msra.mxu0 0
          %1155 = vmatprep.subr.bf16.mxu0 0
          %1156 = vmatpush1.bf16.xpose.msra.mxu0 0
          %1157 = vmatprep.subr.bf16.mxu0 0
          %1158 = vmatpush1.bf16.xpose.msra.mxu0 0
          %1159 = vmatprep.subr.bf16.mxu0 0
          %1160 = vmatpush1.bf16.xpose.msra.mxu0 0
          %1161 = vmatprep.subr.bf16.mxu0 0
          %1162 = vmatpush1.bf16.xpose.msra.mxu0 0
          %1163 = vmatprep.mubr.bf16.mxu0 0
          %1164 = vmatmul.mubr.bf16.gmra.mrb[0].mxu0 %v1126
          %v1165 = vpop.f32.mrb[0].mxu0
          %v1166 = vadd.f32 0.0, %v1165
          %v1167 = vpop.f32.mrb[0].mxu0
          %v1168 = vpop.f32.mrb[0].mxu0
          %v1169 = vpop.f32.mrb[0].mxu0
          %1170 = vdwg.mxu0
          %v1172 = vsel %vm1099, %v1087, 0
          %v1175 = vsel %vm1099, %v1116, 0
          %1177 = vmatprep.subr.bf16.mxu0 0
          %1178 = vmatpush1.bf16.xpose.msra.mxu0 %v1175
          %1179 = vmatprep.subr.bf16.mxu0 0
          %1180 = vmatpush1.bf16.xpose.msra.mxu0 0
          %1181 = vmatprep.subr.bf16.mxu0 0
          %1182 = vmatpush1.bf16.xpose.msra.mxu0 0
          %1183 = vmatprep.subr.bf16.mxu0 0
          %1184 = vmatpush1.bf16.xpose.msra.mxu0 0
          %1185 = vmatprep.subr.bf16.mxu0 0
          %1186 = vmatpush1.bf16.xpose.msra.mxu0 0
          %1187 = vmatprep.subr.bf16.mxu0 0
          %1188 = vmatpush1.bf16.xpose.msra.mxu0 0
          %1189 = vmatprep.subr.bf16.mxu0 0
          %1190 = vmatpush1.bf16.xpose.msra.mxu0 0
          %1191 = vmatprep.subr.bf16.mxu0 0
          %1192 = vmatpush1.bf16.xpose.msra.mxu0 0
          %1193 = vmatprep.subr.bf16.mxu0 0
          %1194 = vmatpush1.bf16.xpose.msra.mxu0 0
          %1195 = vmatprep.subr.bf16.mxu0 0
          %1196 = vmatpush1.bf16.xpose.msra.mxu0 0
          %1197 = vmatprep.subr.bf16.mxu0 0
          %1198 = vmatpush1.bf16.xpose.msra.mxu0 0
          %1199 = vmatprep.subr.bf16.mxu0 0
          %1200 = vmatpush1.bf16.xpose.msra.mxu0 0
          %1201 = vmatprep.subr.bf16.mxu0 0
          %1202 = vmatpush1.bf16.xpose.msra.mxu0 0
          %1203 = vmatprep.subr.bf16.mxu0 0
          %1204 = vmatpush1.bf16.xpose.msra.mxu0 0
          %1205 = vmatprep.subr.bf16.mxu0 0
          %1206 = vmatpush1.bf16.xpose.msra.mxu0 0
          %1207 = vmatprep.subr.bf16.mxu0 0
          %1208 = vmatpush1.bf16.xpose.msra.mxu0 0
          %1209 = vmatprep.mubr.bf16.mxu0 0
          %1210 = vmatmul.mubr.bf16.gmra.mrb[0].mxu0 %v1172
          %v1211 = vpop.f32.mrb[0].mxu0
          %v1212 = vadd.f32 0.0, %v1211
          %v1213 = vpop.f32.mrb[0].mxu0
          %v1214 = vpop.f32.mrb[0].mxu0
          %v1215 = vpop.f32.mrb[0].mxu0
          %1216 = vdwg.mxu0
          %v1218 = vsel %vm1099, %v1088, 0
          %v1221 = vsel %vm1099, %v1117, 0
          %1223 = vmatprep.subr.bf16.mxu0 0
          %1224 = vmatpush1.bf16.xpose.msra.mxu0 %v1221
          %1225 = vmatprep.subr.bf16.mxu0 0
          %1226 = vmatpush1.bf16.xpose.msra.mxu0 0
          %1227 = vmatprep.subr.bf16.mxu0 0
          %1228 = vmatpush1.bf16.xpose.msra.mxu0 0
          %1229 = vmatprep.subr.bf16.mxu0 0
          %1230 = vmatpush1.bf16.xpose.msra.mxu0 0
          %1231 = vmatprep.subr.bf16.mxu0 0
          %1232 = vmatpush1.bf16.xpose.msra.mxu0 0
          %1233 = vmatprep.subr.bf16.mxu0 0
          %1234 = vmatpush1.bf16.xpose.msra.mxu0 0
          %1235 = vmatprep.subr.bf16.mxu0 0
          %1236 = vmatpush1.bf16.xpose.msra.mxu0 0
          %1237 = vmatprep.subr.bf16.mxu0 0
          %1238 = vmatpush1.bf16.xpose.msra.mxu0 0
          %1239 = vmatprep.subr.bf16.mxu0 0
          %1240 = vmatpush1.bf16.xpose.msra.mxu0 0
          %1241 = vmatprep.subr.bf16.mxu0 0
          %1242 = vmatpush1.bf16.xpose.msra.mxu0 0
          %1243 = vmatprep.subr.bf16.mxu0 0
          %1244 = vmatpush1.bf16.xpose.msra.mxu0 0
          %1245 = vmatprep.subr.bf16.mxu0 0
          %1246 = vmatpush1.bf16.xpose.msra.mxu0 0
          %1247 = vmatprep.subr.bf16.mxu0 0
          %1248 = vmatpush1.bf16.xpose.msra.mxu0 0
          %1249 = vmatprep.subr.bf16.mxu0 0
          %1250 = vmatpush1.bf16.xpose.msra.mxu0 0
          %1251 = vmatprep.subr.bf16.mxu0 0
          %1252 = vmatpush1.bf16.xpose.msra.mxu0 0
          %1253 = vmatprep.subr.bf16.mxu0 0
          %1254 = vmatpush1.bf16.xpose.msra.mxu0 0
          %1255 = vmatprep.mubr.bf16.mxu0 0
          %1256 = vmatmul.mubr.bf16.gmra.mrb[0].mxu0 %v1218
          %v1257 = vpop.f32.mrb[0].mxu0
          %v1258 = vadd.f32 0.0, %v1257
          %v1259 = vpop.f32.mrb[0].mxu0
          %v1260 = vpop.f32.mrb[0].mxu0
          %v1261 = vpop.f32.mrb[0].mxu0
          %1262 = vdwg.mxu0
          %v1264 = vsel %vm1099, %v1089, 0
          %v1267 = vsel %vm1099, %v1118, 0
          %1269 = vmatprep.subr.bf16.mxu0 0
          %1270 = vmatpush1.bf16.xpose.msra.mxu0 %v1267
          %1271 = vmatprep.subr.bf16.mxu0 0
          %1272 = vmatpush1.bf16.xpose.msra.mxu0 0
          %1273 = vmatprep.subr.bf16.mxu0 0
          %1274 = vmatpush1.bf16.xpose.msra.mxu0 0
          %1275 = vmatprep.subr.bf16.mxu0 0
          %1276 = vmatpush1.bf16.xpose.msra.mxu0 0
          %1277 = vmatprep.subr.bf16.mxu0 0
          %1278 = vmatpush1.bf16.xpose.msra.mxu0 0
          %1279 = vmatprep.subr.bf16.mxu0 0
          %1280 = vmatpush1.bf16.xpose.msra.mxu0 0
          %1281 = vmatprep.subr.bf16.mxu0 0
          %1282 = vmatpush1.bf16.xpose.msra.mxu0 0
          %1283 = vmatprep.subr.bf16.mxu0 0
          %1284 = vmatpush1.bf16.xpose.msra.mxu0 0
          %1285 = vmatprep.subr.bf16.mxu0 0
          %1286 = vmatpush1.bf16.xpose.msra.mxu0 0
          %1287 = vmatprep.subr.bf16.mxu0 0
          %1288 = vmatpush1.bf16.xpose.msra.mxu0 0
          %1289 = vmatprep.subr.bf16.mxu0 0
          %1290 = vmatpush1.bf16.xpose.msra.mxu0 0
          %1291 = vmatprep.subr.bf16.mxu0 0
          %1292 = vmatpush1.bf16.xpose.msra.mxu0 0
          %1293 = vmatprep.subr.bf16.mxu0 0
          %1294 = vmatpush1.bf16.xpose.msra.mxu0 0
          %1295 = vmatprep.subr.bf16.mxu0 0
          %1296 = vmatpush1.bf16.xpose.msra.mxu0 0
          %1297 = vmatprep.subr.bf16.mxu0 0
          %1298 = vmatpush1.bf16.xpose.msra.mxu0 0
          %1299 = vmatprep.subr.bf16.mxu0 0
          %1300 = vmatpush1.bf16.xpose.msra.mxu0 0
          %1301 = vmatprep.mubr.bf16.mxu0 0
          %1302 = vmatmul.mubr.bf16.gmra.mrb[0].mxu0 %v1264
          %v1303 = vpop.f32.mrb[0].mxu0
          %v1304 = vadd.f32 0.0, %v1303
          %v1305 = vpop.f32.mrb[0].mxu0
          %v1306 = vpop.f32.mrb[0].mxu0
          %v1307 = vpop.f32.mrb[0].mxu0
          %1308 = vdwg.mxu0
          %v1309 = vld [vmem:[#allocation5] sm:$0xff]
          %v1310 = vld [vmem:[#allocation5 + $0x8] sm:$0xff]
          %v1311 = vld [vmem:[#allocation5 + $0x10] sm:$0xff]
          %v1312 = vld [vmem:[#allocation5 + $0x18] sm:$0xff]
          %v1313 = vsel %vm1099, %v1166, -inf
          %1314 = vmax.xlane.f32.xlu0 %v1313
          %v1315 = vpop.xlane.xlu0 %1314
          %v1316 = vsel %vm1099, %v1212, -inf
          %1317 = vmax.xlane.f32.xlu0 %v1316
          %v1318 = vpop.xlane.xlu0 %1317
          %v1319 = vsel %vm1099, %v1258, -inf
          %1320 = vmax.xlane.f32.xlu0 %v1319
          %v1321 = vpop.xlane.xlu0 %1320
          %v1322 = vsel %vm1099, %v1304, -inf
          %1323 = vmax.xlane.f32.xlu0 %v1322
          %v1324 = vpop.xlane.xlu0 %1323
          %v1325 = vmax.f32 %v1309, %v1315
          %v1326 = vmax.f32 %v1310, %v1318
          %v1327 = vmax.f32 %v1311, %v1321
          %v1328 = vmax.f32 %v1312, %v1324
          %v1329 = vsub.f32 %v1309, %v1325
          %v1330 = vsub.f32 %v1310, %v1326
          %v1331 = vsub.f32 %v1311, %v1327
          %v1332 = vsub.f32 %v1312, %v1328
          %v1333 = vmul.f32 %v1329, 1.442695
          %v1334 = vpow.pop %v1333
          %v1335 = vmul.f32 %v1330, 1.442695
          %v1336 = vpow.pop %v1335
          %v1337 = vmul.f32 %v1331, 1.442695
          %v1338 = vpow.pop %v1337
          %v1339 = vmul.f32 %v1332, 1.442695
          %v1340 = vpow.pop %v1339
          %1342 = vset.pattern.permute.xlu0 0
          %1343 = vperm.xlu0 %1342, %v1325
          %v1344 = vpop.permute.xlu0 %1343
          %1347 = vset.pattern.permute.xlu0 0
          %1348 = vperm.xlu0 %1347, %v1326
          %v1349 = vpop.permute.xlu0 %1348
          %1352 = vset.pattern.permute.xlu0 0
          %1353 = vperm.xlu0 %1352, %v1327
          %v1354 = vpop.permute.xlu0 %1353
          %1357 = vset.pattern.permute.xlu0 0
          %1358 = vperm.xlu0 %1357, %v1328
          %v1359 = vpop.permute.xlu0 %1358
          %v1361 = vsub.f32 %v1166, %v1344
          %v1362 = vsub.f32 %v1212, %v1349
          %v1363 = vsub.f32 %v1258, %v1354
          %v1364 = vsub.f32 %v1304, %v1359
          %v1365 = vmul.f32 %v1361, 1.442695
          %v1366 = vpow.pop %v1365
          %v1367 = vmul.f32 %v1362, 1.442695
          %v1368 = vpow.pop %v1367
          %v1369 = vmul.f32 %v1363, 1.442695
          %v1370 = vpow.pop %v1369
          %v1371 = vmul.f32 %v1364, 1.442695
          %v1372 = vpow.pop %v1371
          %v1373 = vld [vmem:[#allocation6] sm:$0xff]
          %v1374 = vld [vmem:[#allocation6 + $0x8] sm:$0xff]
          %v1375 = vld [vmem:[#allocation6 + $0x10] sm:$0xff]
          %v1376 = vld [vmem:[#allocation6 + $0x18] sm:$0xff]
          %v1377 = vmul.f32 %v1334, %v1373
          %v1378 = vmul.f32 %v1336, %v1374
          %v1379 = vmul.f32 %v1338, %v1375
          %v1380 = vmul.f32 %v1340, %v1376
          %v1381 = vsel %vm1099, %v1366, 0.0
          %1382 = vadd.xlane.f32.xlu0 %v1381
          %v1383 = vpop.xlane.xlu0 %1382
          %v1384 = vsel %vm1099, %v1368, 0.0
          %1385 = vadd.xlane.f32.xlu0 %v1384
          %v1386 = vpop.xlane.xlu0 %1385
          %v1387 = vsel %vm1099, %v1370, 0.0
          %1388 = vadd.xlane.f32.xlu0 %v1387
          %v1389 = vpop.xlane.xlu0 %1388
          %v1390 = vsel %vm1099, %v1372, 0.0
          %1391 = vadd.xlane.f32.xlu0 %v1390
          %v1392 = vpop.xlane.xlu0 %1391
          %v1393 = vadd.f32 %v1377, %v1383
          %v1394 = vadd.f32 %v1378, %v1386
          %v1395 = vadd.f32 %v1379, %v1389
          %v1396 = vadd.f32 %v1380, %v1392
          %1397 = vst.msk [vmem:[#allocation6] sm:$0xff] %vm1090, %v1393
          %1398 = vst.msk [vmem:[#allocation6 + $0x8] sm:$0xff] %vm1090, %v1394
          %1399 = vst.msk [vmem:[#allocation6 + $0x10] sm:$0xff] %vm1090, %v1395
          %1400 = vst.msk [vmem:[#allocation6 + $0x18] sm:$0xff] %vm1090, %v1396
          %v1401 = vld [vmem:[#allocation7] sm:$0xff]
          %v1402 = vld [vmem:[#allocation7 + $0x8] sm:$0xff]
          %v1403 = vld [vmem:[#allocation7 + $0x10] sm:$0xff]
          %v1404 = vld [vmem:[#allocation7 + $0x18] sm:$0xff]
          %1406 = vset.pattern.permute.xlu0 0
          %1407 = vperm.xlu0 %1406, %v1334
          %v1408 = vpop.permute.xlu0 %1407
          %1411 = vset.pattern.permute.xlu0 0
          %1412 = vperm.xlu0 %1411, %v1336
          %v1413 = vpop.permute.xlu0 %1412
          %1416 = vset.pattern.permute.xlu0 0
          %1417 = vperm.xlu0 %1416, %v1338
          %v1418 = vpop.permute.xlu0 %1417
          %1421 = vset.pattern.permute.xlu0 0
          %1422 = vperm.xlu0 %1421, %v1340
          %v1423 = vpop.permute.xlu0 %1422
          %v1425 = vmul.f32 %v1408, %v1401
          %v1426 = vmul.f32 %v1413, %v1402
          %v1427 = vmul.f32 %v1418, %v1403
          %v1428 = vmul.f32 %v1423, %v1404
          %v1429 = vpack.c.bf16 %v1366, %v1366
          %v1430 = vpack.c.bf16 %v1368, %v1368
          %v1431 = vpack.c.bf16 %v1370, %v1370
          %v1432 = vpack.c.bf16 %v1372, %v1372
          %v1434 = vsel %vm1099, %v1429, 0
          %vm1436 = vcmask 1043456
          %v1438 = vsel %vm1436, %v1121, 0
          %1440 = vmatprep.subr.bf16.mxu0 0
          %1441 = vmatpush1.bf16.msra.mxu0 %v1438
          %1442 = vmatprep.subr.bf16.mxu0 0
          %1443 = vmatpush1.bf16.msra.mxu0 0
          %1444 = vmatprep.subr.bf16.mxu0 0
          %1445 = vmatpush1.bf16.msra.mxu0 0
          %1446 = vmatprep.subr.bf16.mxu0 0
          %1447 = vmatpush1.bf16.msra.mxu0 0
          %1448 = vmatprep.subr.bf16.mxu0 0
          %1449 = vmatpush1.bf16.msra.mxu0 0
          %1450 = vmatprep.subr.bf16.mxu0 0
          %1451 = vmatpush1.bf16.msra.mxu0 0
          %1452 = vmatprep.subr.bf16.mxu0 0
          %1453 = vmatpush1.bf16.msra.mxu0 0
          %1454 = vmatprep.subr.bf16.mxu0 0
          %1455 = vmatpush1.bf16.msra.mxu0 0
          %1456 = vmatprep.subr.bf16.mxu0 0
          %1457 = vmatpush1.bf16.msra.mxu0 0
          %1458 = vmatprep.subr.bf16.mxu0 0
          %1459 = vmatpush1.bf16.msra.mxu0 0
          %1460 = vmatprep.subr.bf16.mxu0 0
          %1461 = vmatpush1.bf16.msra.mxu0 0
          %1462 = vmatprep.subr.bf16.mxu0 0
          %1463 = vmatpush1.bf16.msra.mxu0 0
          %1464 = vmatprep.subr.bf16.mxu0 0
          %1465 = vmatpush1.bf16.msra.mxu0 0
          %1466 = vmatprep.subr.bf16.mxu0 0
          %1467 = vmatpush1.bf16.msra.mxu0 0
          %1468 = vmatprep.subr.bf16.mxu0 0
          %1469 = vmatpush1.bf16.msra.mxu0 0
          %1470 = vmatprep.subr.bf16.mxu0 0
          %1471 = vmatpush1.bf16.msra.mxu0 0
          %1472 = vmatprep.mubr.bf16.mxu0 0
          %1473 = vmatmul.mubr.bf16.gmra.mrb[0].mxu0 %v1434
          %v1474 = vpop.f32.mrb[0].mxu0
          %v1475 = vadd.f32 0.0, %v1474
          %v1476 = vpop.f32.mrb[0].mxu0
          %v1477 = vpop.f32.mrb[0].mxu0
          %v1478 = vpop.f32.mrb[0].mxu0
          %1479 = vdwg.mxu0
          %v1481 = vsel %vm1099, %v1430, 0
          %v1484 = vsel %vm1436, %v1122, 0
          %1486 = vmatprep.subr.bf16.mxu0 0
          %1487 = vmatpush1.bf16.msra.mxu0 %v1484
          %1488 = vmatprep.subr.bf16.mxu0 0
          %1489 = vmatpush1.bf16.msra.mxu0 0
          %1490 = vmatprep.subr.bf16.mxu0 0
          %1491 = vmatpush1.bf16.msra.mxu0 0
          %1492 = vmatprep.subr.bf16.mxu0 0
          %1493 = vmatpush1.bf16.msra.mxu0 0
          %1494 = vmatprep.subr.bf16.mxu0 0
          %1495 = vmatpush1.bf16.msra.mxu0 0
          %1496 = vmatprep.subr.bf16.mxu0 0
          %1497 = vmatpush1.bf16.msra.mxu0 0
          %1498 = vmatprep.subr.bf16.mxu0 0
          %1499 = vmatpush1.bf16.msra.mxu0 0
          %1500 = vmatprep.subr.bf16.mxu0 0
          %1501 = vmatpush1.bf16.msra.mxu0 0
          %1502 = vmatprep.subr.bf16.mxu0 0
          %1503 = vmatpush1.bf16.msra.mxu0 0
          %1504 = vmatprep.subr.bf16.mxu0 0
          %1505 = vmatpush1.bf16.msra.mxu0 0
          %1506 = vmatprep.subr.bf16.mxu0 0
          %1507 = vmatpush1.bf16.msra.mxu0 0
          %1508 = vmatprep.subr.bf16.mxu0 0
          %1509 = vmatpush1.bf16.msra.mxu0 0
          %1510 = vmatprep.subr.bf16.mxu0 0
          %1511 = vmatpush1.bf16.msra.mxu0 0
          %1512 = vmatprep.subr.bf16.mxu0 0
          %1513 = vmatpush1.bf16.msra.mxu0 0
          %1514 = vmatprep.subr.bf16.mxu0 0
          %1515 = vmatpush1.bf16.msra.mxu0 0
          %1516 = vmatprep.subr.bf16.mxu0 0
          %1517 = vmatpush1.bf16.msra.mxu0 0
          %1518 = vmatprep.mubr.bf16.mxu0 0
          %1519 = vmatmul.mubr.bf16.gmra.mrb[0].mxu0 %v1481
          %v1520 = vpop.f32.mrb[0].mxu0
          %v1521 = vadd.f32 0.0, %v1520
          %v1522 = vpop.f32.mrb[0].mxu0
          %v1523 = vpop.f32.mrb[0].mxu0
          %v1524 = vpop.f32.mrb[0].mxu0
          %1525 = vdwg.mxu0
          %v1527 = vsel %vm1099, %v1431, 0
          %v1530 = vsel %vm1436, %v1123, 0
          %1532 = vmatprep.subr.bf16.mxu0 0
          %1533 = vmatpush1.bf16.msra.mxu0 %v1530
          %1534 = vmatprep.subr.bf16.mxu0 0
          %1535 = vmatpush1.bf16.msra.mxu0 0
          %1536 = vmatprep.subr.bf16.mxu0 0
          %1537 = vmatpush1.bf16.msra.mxu0 0
          %1538 = vmatprep.subr.bf16.mxu0 0
          %1539 = vmatpush1.bf16.msra.mxu0 0
          %1540 = vmatprep.subr.bf16.mxu0 0
          %1541 = vmatpush1.bf16.msra.mxu0 0
          %1542 = vmatprep.subr.bf16.mxu0 0
          %1543 = vmatpush1.bf16.msra.mxu0 0
          %1544 = vmatprep.subr.bf16.mxu0 0
          %1545 = vmatpush1.bf16.msra.mxu0 0
          %1546 = vmatprep.subr.bf16.mxu0 0
          %1547 = vmatpush1.bf16.msra.mxu0 0
          %1548 = vmatprep.subr.bf16.mxu0 0
          %1549 = vmatpush1.bf16.msra.mxu0 0
          %1550 = vmatprep.subr.bf16.mxu0 0
          %1551 = vmatpush1.bf16.msra.mxu0 0
          %1552 = vmatprep.subr.bf16.mxu0 0
          %1553 = vmatpush1.bf16.msra.mxu0 0
          %1554 = vmatprep.subr.bf16.mxu0 0
          %1555 = vmatpush1.bf16.msra.mxu0 0
          %1556 = vmatprep.subr.bf16.mxu0 0
          %1557 = vmatpush1.bf16.msra.mxu0 0
          %1558 = vmatprep.subr.bf16.mxu0 0
          %1559 = vmatpush1.bf16.msra.mxu0 0
          %1560 = vmatprep.subr.bf16.mxu0 0
          %1561 = vmatpush1.bf16.msra.mxu0 0
          %1562 = vmatprep.subr.bf16.mxu0 0
          %1563 = vmatpush1.bf16.msra.mxu0 0
          %1564 = vmatprep.mubr.bf16.mxu0 0
          %1565 = vmatmul.mubr.bf16.gmra.mrb[0].mxu0 %v1527
          %v1566 = vpop.f32.mrb[0].mxu0
          %v1567 = vadd.f32 0.0, %v1566
          %v1568 = vpop.f32.mrb[0].mxu0
          %v1569 = vpop.f32.mrb[0].mxu0
          %v1570 = vpop.f32.mrb[0].mxu0
          %1571 = vdwg.mxu0
          %v1573 = vsel %vm1099, %v1432, 0
          %v1576 = vsel %vm1436, %v1124, 0
          %1578 = vmatprep.subr.bf16.mxu0 0
          %1579 = vmatpush1.bf16.msra.mxu0 %v1576
          %1580 = vmatprep.subr.bf16.mxu0 0
          %1581 = vmatpush1.bf16.msra.mxu0 0
          %1582 = vmatprep.subr.bf16.mxu0 0
          %1583 = vmatpush1.bf16.msra.mxu0 0
          %1584 = vmatprep.subr.bf16.mxu0 0
          %1585 = vmatpush1.bf16.msra.mxu0 0
          %1586 = vmatprep.subr.bf16.mxu0 0
          %1587 = vmatpush1.bf16.msra.mxu0 0
          %1588 = vmatprep.subr.bf16.mxu0 0
          %1589 = vmatpush1.bf16.msra.mxu0 0
          %1590 = vmatprep.subr.bf16.mxu0 0
          %1591 = vmatpush1.bf16.msra.mxu0 0
          %1592 = vmatprep.subr.bf16.mxu0 0
          %1593 = vmatpush1.bf16.msra.mxu0 0
          %1594 = vmatprep.subr.bf16.mxu0 0
          %1595 = vmatpush1.bf16.msra.mxu0 0
          %1596 = vmatprep.subr.bf16.mxu0 0
          %1597 = vmatpush1.bf16.msra.mxu0 0
          %1598 = vmatprep.subr.bf16.mxu0 0
          %1599 = vmatpush1.bf16.msra.mxu0 0
          %1600 = vmatprep.subr.bf16.mxu0 0
          %1601 = vmatpush1.bf16.msra.mxu0 0
          %1602 = vmatprep.subr.bf16.mxu0 0
          %1603 = vmatpush1.bf16.msra.mxu0 0
          %1604 = vmatprep.subr.bf16.mxu0 0
          %1605 = vmatpush1.bf16.msra.mxu0 0
          %1606 = vmatprep.subr.bf16.mxu0 0
          %1607 = vmatpush1.bf16.msra.mxu0 0
          %1608 = vmatprep.subr.bf16.mxu0 0
          %1609 = vmatpush1.bf16.msra.mxu0 0
          %1610 = vmatprep.mubr.bf16.mxu0 0
          %1611 = vmatmul.mubr.bf16.gmra.mrb[0].mxu0 %v1573
          %v1612 = vpop.f32.mrb[0].mxu0
          %v1613 = vadd.f32 0.0, %v1612
          %v1614 = vpop.f32.mrb[0].mxu0
          %v1615 = vpop.f32.mrb[0].mxu0
          %v1616 = vpop.f32.mrb[0].mxu0
          %1617 = vdwg.mxu0
          %v1618 = vadd.f32 %v1425, %v1475
          %v1619 = vadd.f32 %v1426, %v1521
          %v1620 = vadd.f32 %v1427, %v1567
          %v1621 = vadd.f32 %v1428, %v1613
          %1622 = vst.msk [vmem:[#allocation7] sm:$0xff] %vm1099, %v1618
          %1623 = vst.msk [vmem:[#allocation7 + $0x8] sm:$0xff] %vm1099, %v1619
          %1624 = vst.msk [vmem:[#allocation7 + $0x10] sm:$0xff] %vm1099, %v1620
          %1625 = vst.msk [vmem:[#allocation7 + $0x18] sm:$0xff] %vm1099, %v1621
          %1626 = vst.msk [vmem:[#allocation5] sm:$0xff] %vm1090, %v1325
          %1627 = vst.msk [vmem:[#allocation5 + $0x8] sm:$0xff] %vm1090, %v1326
          %1628 = vst.msk [vmem:[#allocation5 + $0x10] sm:$0xff] %vm1090, %v1327
          %1629 = vst.msk [vmem:[#allocation5 + $0x18] sm:$0xff] %vm1090, %v1328
        $region133: #{tpu_custom_call.1} parent=91 // loop_footer
          %s1107 = sadd.s32 %s1105, 1
        $region134: #{tpu_custom_call.1} parent=91 // loop_footer_branch
          %1104 = sbr.rel target = $region130
        $region135: #{tpu_custom_call.1} parent=91 // loop_exit
          _
        %v1630 = vld [vmem:[%s937] sm:$0xf]
        %v1631 = vld [vmem:[%s937 + $0x4] sm:$0xf]
        %v1632 = vld [vmem:[%s937 + $0x8] sm:$0xf]
        %v1633 = vld [vmem:[%s937 + $0xc] sm:$0xf]
        %v1634 = vld [vmem:[%s966] sm:$0xf]
        %v1635 = vld [vmem:[%s966 + $0x4] sm:$0xf]
        %v1636 = vld [vmem:[%s966 + $0x8] sm:$0xf]
        %v1637 = vld [vmem:[%s966 + $0xc] sm:$0xf]
        %v1639 = vsel %vm1099, %v1086, 0
        %v1642 = vsel %vm1099, %v1630, 0
        %1644 = vmatprep.subr.bf16.mxu0 0
        %1645 = vmatpush1.bf16.xpose.msra.mxu0 %v1642
        %1646 = vmatprep.subr.bf16.mxu0 0
        %1647 = vmatpush1.bf16.xpose.msra.mxu0 0
        %1648 = vmatprep.subr.bf16.mxu0 0
        %1649 = vmatpush1.bf16.xpose.msra.mxu0 0
        %1650 = vmatprep.subr.bf16.mxu0 0
        %1651 = vmatpush1.bf16.xpose.msra.mxu0 0
        %1652 = vmatprep.subr.bf16.mxu0 0
        %1653 = vmatpush1.bf16.xpose.msra.mxu0 0
        %1654 = vmatprep.subr.bf16.mxu0 0
        %1655 = vmatpush1.bf16.xpose.msra.mxu0 0
        %1656 = vmatprep.subr.bf16.mxu0 0
        %1657 = vmatpush1.bf16.xpose.msra.mxu0 0
        %1658 = vmatprep.subr.bf16.mxu0 0
        %1659 = vmatpush1.bf16.xpose.msra.mxu0 0
        %1660 = vmatprep.subr.bf16.mxu0 0
        %1661 = vmatpush1.bf16.xpose.msra.mxu0 0
        %1662 = vmatprep.subr.bf16.mxu0 0
        %1663 = vmatpush1.bf16.xpose.msra.mxu0 0
        %1664 = vmatprep.subr.bf16.mxu0 0
        %1665 = vmatpush1.bf16.xpose.msra.mxu0 0
        %1666 = vmatprep.subr.bf16.mxu0 0
        %1667 = vmatpush1.bf16.xpose.msra.mxu0 0
        %1668 = vmatprep.subr.bf16.mxu0 0
        %1669 = vmatpush1.bf16.xpose.msra.mxu0 0
        %1670 = vmatprep.subr.bf16.mxu0 0
        %1671 = vmatpush1.bf16.xpose.msra.mxu0 0
        %1672 = vmatprep.subr.bf16.mxu0 0
        %1673 = vmatpush1.bf16.xpose.msra.mxu0 0
        %1674 = vmatprep.subr.bf16.mxu0 0
        %1675 = vmatpush1.bf16.xpose.msra.mxu0 0
        %1676 = vmatprep.mubr.bf16.mxu0 0
        %1677 = vmatmul.mubr.bf16.gmra.mrb[0].mxu0 %v1639
        %v1678 = vpop.f32.mrb[0].mxu0
        %v1679 = vadd.f32 0.0, %v1678
        %v1680 = vpop.f32.mrb[0].mxu0
        %v1681 = vpop.f32.mrb[0].mxu0
        %v1682 = vpop.f32.mrb[0].mxu0
        %1683 = vdwg.mxu0
        %v1685 = vsel %vm1099, %v1087, 0
        %v1688 = vsel %vm1099, %v1631, 0
        %1690 = vmatprep.subr.bf16.mxu0 0
        %1691 = vmatpush1.bf16.xpose.msra.mxu0 %v1688
        %1692 = vmatprep.subr.bf16.mxu0 0
        %1693 = vmatpush1.bf16.xpose.msra.mxu0 0
        %1694 = vmatprep.subr.bf16.mxu0 0
        %1695 = vmatpush1.bf16.xpose.msra.mxu0 0
        %1696 = vmatprep.subr.bf16.mxu0 0
        %1697 = vmatpush1.bf16.xpose.msra.mxu0 0
        %1698 = vmatprep.subr.bf16.mxu0 0
        %1699 = vmatpush1.bf16.xpose.msra.mxu0 0
        %1700 = vmatprep.subr.bf16.mxu0 0
        %1701 = vmatpush1.bf16.xpose.msra.mxu0 0
        %1702 = vmatprep.subr.bf16.mxu0 0
        %1703 = vmatpush1.bf16.xpose.msra.mxu0 0
        %1704 = vmatprep.subr.bf16.mxu0 0
        %1705 = vmatpush1.bf16.xpose.msra.mxu0 0
        %1706 = vmatprep.subr.bf16.mxu0 0
        %1707 = vmatpush1.bf16.xpose.msra.mxu0 0
        %1708 = vmatprep.subr.bf16.mxu0 0
        %1709 = vmatpush1.bf16.xpose.msra.mxu0 0
        %1710 = vmatprep.subr.bf16.mxu0 0
        %1711 = vmatpush1.bf16.xpose.msra.mxu0 0
        %1712 = vmatprep.subr.bf16.mxu0 0
        %1713 = vmatpush1.bf16.xpose.msra.mxu0 0
        %1714 = vmatprep.subr.bf16.mxu0 0
        %1715 = vmatpush1.bf16.xpose.msra.mxu0 0
        %1716 = vmatprep.subr.bf16.mxu0 0
        %1717 = vmatpush1.bf16.xpose.msra.mxu0 0
        %1718 = vmatprep.subr.bf16.mxu0 0
        %1719 = vmatpush1.bf16.xpose.msra.mxu0 0
        %1720 = vmatprep.subr.bf16.mxu0 0
        %1721 = vmatpush1.bf16.xpose.msra.mxu0 0
        %1722 = vmatprep.mubr.bf16.mxu0 0
        %1723 = vmatmul.mubr.bf16.gmra.mrb[0].mxu0 %v1685
        %v1724 = vpop.f32.mrb[0].mxu0
        %v1725 = vadd.f32 0.0, %v1724
        %v1726 = vpop.f32.mrb[0].mxu0
        %v1727 = vpop.f32.mrb[0].mxu0
        %v1728 = vpop.f32.mrb[0].mxu0
        %1729 = vdwg.mxu0
        %v1731 = vsel %vm1099, %v1088, 0
        %v1734 = vsel %vm1099, %v1632, 0
        %1736 = vmatprep.subr.bf16.mxu0 0
        %1737 = vmatpush1.bf16.xpose.msra.mxu0 %v1734
        %1738 = vmatprep.subr.bf16.mxu0 0
        %1739 = vmatpush1.bf16.xpose.msra.mxu0 0
        %1740 = vmatprep.subr.bf16.mxu0 0
        %1741 = vmatpush1.bf16.xpose.msra.mxu0 0
        %1742 = vmatprep.subr.bf16.mxu0 0
        %1743 = vmatpush1.bf16.xpose.msra.mxu0 0
        %1744 = vmatprep.subr.bf16.mxu0 0
        %1745 = vmatpush1.bf16.xpose.msra.mxu0 0
        %1746 = vmatprep.subr.bf16.mxu0 0
        %1747 = vmatpush1.bf16.xpose.msra.mxu0 0
        %1748 = vmatprep.subr.bf16.mxu0 0
        %1749 = vmatpush1.bf16.xpose.msra.mxu0 0
        %1750 = vmatprep.subr.bf16.mxu0 0
        %1751 = vmatpush1.bf16.xpose.msra.mxu0 0
        %1752 = vmatprep.subr.bf16.mxu0 0
        %1753 = vmatpush1.bf16.xpose.msra.mxu0 0
        %1754 = vmatprep.subr.bf16.mxu0 0
        %1755 = vmatpush1.bf16.xpose.msra.mxu0 0
        %1756 = vmatprep.subr.bf16.mxu0 0
        %1757 = vmatpush1.bf16.xpose.msra.mxu0 0
        %1758 = vmatprep.subr.bf16.mxu0 0
        %1759 = vmatpush1.bf16.xpose.msra.mxu0 0
        %1760 = vmatprep.subr.bf16.mxu0 0
        %1761 = vmatpush1.bf16.xpose.msra.mxu0 0
        %1762 = vmatprep.subr.bf16.mxu0 0
        %1763 = vmatpush1.bf16.xpose.msra.mxu0 0
        %1764 = vmatprep.subr.bf16.mxu0 0
        %1765 = vmatpush1.bf16.xpose.msra.mxu0 0
        %1766 = vmatprep.subr.bf16.mxu0 0
        %1767 = vmatpush1.bf16.xpose.msra.mxu0 0
        %1768 = vmatprep.mubr.bf16.mxu0 0
        %1769 = vmatmul.mubr.bf16.gmra.mrb[0].mxu0 %v1731
        %v1770 = vpop.f32.mrb[0].mxu0
        %v1771 = vadd.f32 0.0, %v1770
        %v1772 = vpop.f32.mrb[0].mxu0
        %v1773 = vpop.f32.mrb[0].mxu0
        %v1774 = vpop.f32.mrb[0].mxu0
        %1775 = vdwg.mxu0
        %v1777 = vsel %vm1099, %v1089, 0
        %v1780 = vsel %vm1099, %v1633, 0
        %1782 = vmatprep.subr.bf16.mxu0 0
        %1783 = vmatpush1.bf16.xpose.msra.mxu0 %v1780
        %1784 = vmatprep.subr.bf16.mxu0 0
        %1785 = vmatpush1.bf16.xpose.msra.mxu0 0
        %1786 = vmatprep.subr.bf16.mxu0 0
        %1787 = vmatpush1.bf16.xpose.msra.mxu0 0
        %1788 = vmatprep.subr.bf16.mxu0 0
        %1789 = vmatpush1.bf16.xpose.msra.mxu0 0
        %1790 = vmatprep.subr.bf16.mxu0 0
        %1791 = vmatpush1.bf16.xpose.msra.mxu0 0
        %1792 = vmatprep.subr.bf16.mxu0 0
        %1793 = vmatpush1.bf16.xpose.msra.mxu0 0
        %1794 = vmatprep.subr.bf16.mxu0 0
        %1795 = vmatpush1.bf16.xpose.msra.mxu0 0
        %1796 = vmatprep.subr.bf16.mxu0 0
        %1797 = vmatpush1.bf16.xpose.msra.mxu0 0
        %1798 = vmatprep.subr.bf16.mxu0 0
        %1799 = vmatpush1.bf16.xpose.msra.mxu0 0
        %1800 = vmatprep.subr.bf16.mxu0 0
        %1801 = vmatpush1.bf16.xpose.msra.mxu0 0
        %1802 = vmatprep.subr.bf16.mxu0 0
        %1803 = vmatpush1.bf16.xpose.msra.mxu0 0
        %1804 = vmatprep.subr.bf16.mxu0 0
        %1805 = vmatpush1.bf16.xpose.msra.mxu0 0
        %1806 = vmatprep.subr.bf16.mxu0 0
        %1807 = vmatpush1.bf16.xpose.msra.mxu0 0
        %1808 = vmatprep.subr.bf16.mxu0 0
        %1809 = vmatpush1.bf16.xpose.msra.mxu0 0
        %1810 = vmatprep.subr.bf16.mxu0 0
        %1811 = vmatpush1.bf16.xpose.msra.mxu0 0
        %1812 = vmatprep.subr.bf16.mxu0 0
        %1813 = vmatpush1.bf16.xpose.msra.mxu0 0
        %1814 = vmatprep.mubr.bf16.mxu0 0
        %1815 = vmatmul.mubr.bf16.gmra.mrb[0].mxu0 %v1777
        %v1816 = vpop.f32.mrb[0].mxu0
        %v1817 = vadd.f32 0.0, %v1816
        %v1818 = vpop.f32.mrb[0].mxu0
        %v1819 = vpop.f32.mrb[0].mxu0
        %v1820 = vpop.f32.mrb[0].mxu0
        %1821 = vdwg.mxu0
        %v1822 = vlaneseq
        %v1823 = vshrl.u32 %v1822, 7
        %v1824 = vlaneseq
        %v1825 = vand.u32 %v1824, 127
        %vm1826 = vcmp.le.s32.totalorder %v1825, %v1823
        %v1827 = vsel %vm1826, 1, 0
        %vm1828 = vcmp.eq.s32.totalorder %v1827, 1
        %v1829 = vsel %vm1828, %v1679, -1e+30
        %v1830 = vsel %vm1828, %v1725, -1e+30
        %v1831 = vsel %vm1828, %v1771, -1e+30
        %v1832 = vsel %vm1828, %v1817, -1e+30
        %v1833 = vld [vmem:[#allocation5] sm:$0xff]
        %v1834 = vld [vmem:[#allocation5 + $0x8] sm:$0xff]
        %v1835 = vld [vmem:[#allocation5 + $0x10] sm:$0xff]
        %v1836 = vld [vmem:[#allocation5 + $0x18] sm:$0xff]
        %v1837 = vsel %vm1099, %v1829, -inf
        %1838 = vmax.xlane.f32.xlu0 %v1837
        %v1839 = vpop.xlane.xlu0 %1838
        %v1840 = vsel %vm1099, %v1830, -inf
        %1841 = vmax.xlane.f32.xlu0 %v1840
        %v1842 = vpop.xlane.xlu0 %1841
        %v1843 = vsel %vm1099, %v1831, -inf
        %1844 = vmax.xlane.f32.xlu0 %v1843
        %v1845 = vpop.xlane.xlu0 %1844
        %v1846 = vsel %vm1099, %v1832, -inf
        %1847 = vmax.xlane.f32.xlu0 %v1846
        %v1848 = vpop.xlane.xlu0 %1847
        %v1849 = vmax.f32 %v1833, %v1839
        %v1850 = vmax.f32 %v1834, %v1842
        %v1851 = vmax.f32 %v1835, %v1845
        %v1852 = vmax.f32 %v1836, %v1848
        %v1853 = vsub.f32 %v1833, %v1849
        %v1854 = vsub.f32 %v1834, %v1850
        %v1855 = vsub.f32 %v1835, %v1851
        %v1856 = vsub.f32 %v1836, %v1852
        %v1857 = vmul.f32 %v1853, 1.442695
        %v1858 = vpow.pop %v1857
        %v1859 = vmul.f32 %v1854, 1.442695
        %v1860 = vpow.pop %v1859
        %v1861 = vmul.f32 %v1855, 1.442695
        %v1862 = vpow.pop %v1861
        %v1863 = vmul.f32 %v1856, 1.442695
        %v1864 = vpow.pop %v1863
        %1866 = vset.pattern.permute.xlu0 0
        %1867 = vperm.xlu0 %1866, %v1849
        %v1868 = vpop.permute.xlu0 %1867
        %1871 = vset.pattern.permute.xlu0 0
        %1872 = vperm.xlu0 %1871, %v1850
        %v1873 = vpop.permute.xlu0 %1872
        %1876 = vset.pattern.permute.xlu0 0
        %1877 = vperm.xlu0 %1876, %v1851
        %v1878 = vpop.permute.xlu0 %1877
        %1881 = vset.pattern.permute.xlu0 0
        %1882 = vperm.xlu0 %1881, %v1852
        %v1883 = vpop.permute.xlu0 %1882
        %v1885 = vsub.f32 %v1829, %v1868
        %v1886 = vsub.f32 %v1830, %v1873
        %v1887 = vsub.f32 %v1831, %v1878
        %v1888 = vsub.f32 %v1832, %v1883
        %v1889 = vmul.f32 %v1885, 1.442695
        %v1890 = vpow.pop %v1889
        %v1891 = vmul.f32 %v1886, 1.442695
        %v1892 = vpow.pop %v1891
        %v1893 = vmul.f32 %v1887, 1.442695
        %v1894 = vpow.pop %v1893
        %v1895 = vmul.f32 %v1888, 1.442695
        %v1896 = vpow.pop %v1895
        %v1897 = vld [vmem:[#allocation6] sm:$0xff]
        %v1898 = vld [vmem:[#allocation6 + $0x8] sm:$0xff]
        %v1899 = vld [vmem:[#allocation6 + $0x10] sm:$0xff]
        %v1900 = vld [vmem:[#allocation6 + $0x18] sm:$0xff]
        %v1901 = vmul.f32 %v1858, %v1897
        %v1902 = vmul.f32 %v1860, %v1898
        %v1903 = vmul.f32 %v1862, %v1899
        %v1904 = vmul.f32 %v1864, %v1900
        %v1905 = vsel %vm1099, %v1890, 0.0
        %1906 = vadd.xlane.f32.xlu0 %v1905
        %v1907 = vpop.xlane.xlu0 %1906
        %v1908 = vsel %vm1099, %v1892, 0.0
        %1909 = vadd.xlane.f32.xlu0 %v1908
        %v1910 = vpop.xlane.xlu0 %1909
        %v1911 = vsel %vm1099, %v1894, 0.0
        %1912 = vadd.xlane.f32.xlu0 %v1911
        %v1913 = vpop.xlane.xlu0 %1912
        %v1914 = vsel %vm1099, %v1896, 0.0
        %1915 = vadd.xlane.f32.xlu0 %v1914
        %v1916 = vpop.xlane.xlu0 %1915
        %v1917 = vadd.f32 %v1901, %v1907
        %v1918 = vadd.f32 %v1902, %v1910
        %v1919 = vadd.f32 %v1903, %v1913
        %v1920 = vadd.f32 %v1904, %v1916
        %1921 = vst.msk [vmem:[#allocation6] sm:$0xff] %vm1090, %v1917
        %1922 = vst.msk [vmem:[#allocation6 + $0x8] sm:$0xff] %vm1090, %v1918
        %1923 = vst.msk [vmem:[#allocation6 + $0x10] sm:$0xff] %vm1090, %v1919
        %1924 = vst.msk [vmem:[#allocation6 + $0x18] sm:$0xff] %vm1090, %v1920
        %v1925 = vld [vmem:[#allocation7] sm:$0xff]
        %v1926 = vld [vmem:[#allocation7 + $0x8] sm:$0xff]
        %v1927 = vld [vmem:[#allocation7 + $0x10] sm:$0xff]
        %v1928 = vld [vmem:[#allocation7 + $0x18] sm:$0xff]
        %1930 = vset.pattern.permute.xlu0 0
        %1931 = vperm.xlu0 %1930, %v1858
        %v1932 = vpop.permute.xlu0 %1931
        %1935 = vset.pattern.permute.xlu0 0
        %1936 = vperm.xlu0 %1935, %v1860
        %v1937 = vpop.permute.xlu0 %1936
        %1940 = vset.pattern.permute.xlu0 0
        %1941 = vperm.xlu0 %1940, %v1862
        %v1942 = vpop.permute.xlu0 %1941
        %1945 = vset.pattern.permute.xlu0 0
        %1946 = vperm.xlu0 %1945, %v1864
        %v1947 = vpop.permute.xlu0 %1946
        %v1949 = vmul.f32 %v1932, %v1925
        %v1950 = vmul.f32 %v1937, %v1926
        %v1951 = vmul.f32 %v1942, %v1927
        %v1952 = vmul.f32 %v1947, %v1928
        %v1953 = vpack.c.bf16 %v1890, %v1890
        %v1954 = vpack.c.bf16 %v1892, %v1892
        %v1955 = vpack.c.bf16 %v1894, %v1894
        %v1956 = vpack.c.bf16 %v1896, %v1896
        %v1958 = vsel %vm1099, %v1953, 0
        %vm1960 = vcmask 1043456
        %v1962 = vsel %vm1960, %v1634, 0
        %1964 = vmatprep.subr.bf16.mxu0 0
        %1965 = vmatpush1.bf16.msra.mxu0 %v1962
        %1966 = vmatprep.subr.bf16.mxu0 0
        %1967 = vmatpush1.bf16.msra.mxu0 0
        %1968 = vmatprep.subr.bf16.mxu0 0
        %1969 = vmatpush1.bf16.msra.mxu0 0
        %1970 = vmatprep.subr.bf16.mxu0 0
        %1971 = vmatpush1.bf16.msra.mxu0 0
        %1972 = vmatprep.subr.bf16.mxu0 0
        %1973 = vmatpush1.bf16.msra.mxu0 0
        %1974 = vmatprep.subr.bf16.mxu0 0
        %1975 = vmatpush1.bf16.msra.mxu0 0
        %1976 = vmatprep.subr.bf16.mxu0 0
        %1977 = vmatpush1.bf16.msra.mxu0 0
        %1978 = vmatprep.subr.bf16.mxu0 0
        %1979 = vmatpush1.bf16.msra.mxu0 0
        %1980 = vmatprep.subr.bf16.mxu0 0
        %1981 = vmatpush1.bf16.msra.mxu0 0
        %1982 = vmatprep.subr.bf16.mxu0 0
        %1983 = vmatpush1.bf16.msra.mxu0 0
        %1984 = vmatprep.subr.bf16.mxu0 0
        %1985 = vmatpush1.bf16.msra.mxu0 0
        %1986 = vmatprep.subr.bf16.mxu0 0
        %1987 = vmatpush1.bf16.msra.mxu0 0
        %1988 = vmatprep.subr.bf16.mxu0 0
        %1989 = vmatpush1.bf16.msra.mxu0 0
        %1990 = vmatprep.subr.bf16.mxu0 0
        %1991 = vmatpush1.bf16.msra.mxu0 0
        %1992 = vmatprep.subr.bf16.mxu0 0
        %1993 = vmatpush1.bf16.msra.mxu0 0
        %1994 = vmatprep.subr.bf16.mxu0 0
        %1995 = vmatpush1.bf16.msra.mxu0 0
        %1996 = vmatprep.mubr.bf16.mxu0 0
        %1997 = vmatmul.mubr.bf16.gmra.mrb[0].mxu0 %v1958
        %v1998 = vpop.f32.mrb[0].mxu0
        %v1999 = vadd.f32 0.0, %v1998
        %v2000 = vpop.f32.mrb[0].mxu0
        %v2001 = vpop.f32.mrb[0].mxu0
        %v2002 = vpop.f32.mrb[0].mxu0
        %2003 = vdwg.mxu0
        %v2005 = vsel %vm1099, %v1954, 0
        %v2008 = vsel %vm1960, %v1635, 0
        %2010 = vmatprep.subr.bf16.mxu0 0
        %2011 = vmatpush1.bf16.msra.mxu0 %v2008
        %2012 = vmatprep.subr.bf16.mxu0 0
        %2013 = vmatpush1.bf16.msra.mxu0 0
        %2014 = vmatprep.subr.bf16.mxu0 0
        %2015 = vmatpush1.bf16.msra.mxu0 0
        %2016 = vmatprep.subr.bf16.mxu0 0
        %2017 = vmatpush1.bf16.msra.mxu0 0
        %2018 = vmatprep.subr.bf16.mxu0 0
        %2019 = vmatpush1.bf16.msra.mxu0 0
        %2020 = vmatprep.subr.bf16.mxu0 0
        %2021 = vmatpush1.bf16.msra.mxu0 0
        %2022 = vmatprep.subr.bf16.mxu0 0
        %2023 = vmatpush1.bf16.msra.mxu0 0
        %2024 = vmatprep.subr.bf16.mxu0 0
        %2025 = vmatpush1.bf16.msra.mxu0 0
        %2026 = vmatprep.subr.bf16.mxu0 0
        %2027 = vmatpush1.bf16.msra.mxu0 0
        %2028 = vmatprep.subr.bf16.mxu0 0
        %2029 = vmatpush1.bf16.msra.mxu0 0
        %2030 = vmatprep.subr.bf16.mxu0 0
        %2031 = vmatpush1.bf16.msra.mxu0 0
        %2032 = vmatprep.subr.bf16.mxu0 0
        %2033 = vmatpush1.bf16.msra.mxu0 0
        %2034 = vmatprep.subr.bf16.mxu0 0
        %2035 = vmatpush1.bf16.msra.mxu0 0
        %2036 = vmatprep.subr.bf16.mxu0 0
        %2037 = vmatpush1.bf16.msra.mxu0 0
        %2038 = vmatprep.subr.bf16.mxu0 0
        %2039 = vmatpush1.bf16.msra.mxu0 0
        %2040 = vmatprep.subr.bf16.mxu0 0
        %2041 = vmatpush1.bf16.msra.mxu0 0
        %2042 = vmatprep.mubr.bf16.mxu0 0
        %2043 = vmatmul.mubr.bf16.gmra.mrb[0].mxu0 %v2005
        %v2044 = vpop.f32.mrb[0].mxu0
        %v2045 = vadd.f32 0.0, %v2044
        %v2046 = vpop.f32.mrb[0].mxu0
        %v2047 = vpop.f32.mrb[0].mxu0
        %v2048 = vpop.f32.mrb[0].mxu0
        %2049 = vdwg.mxu0
        %v2051 = vsel %vm1099, %v1955, 0
        %v2054 = vsel %vm1960, %v1636, 0
        %2056 = vmatprep.subr.bf16.mxu0 0
        %2057 = vmatpush1.bf16.msra.mxu0 %v2054
        %2058 = vmatprep.subr.bf16.mxu0 0
        %2059 = vmatpush1.bf16.msra.mxu0 0
        %2060 = vmatprep.subr.bf16.mxu0 0
        %2061 = vmatpush1.bf16.msra.mxu0 0
        %2062 = vmatprep.subr.bf16.mxu0 0
        %2063 = vmatpush1.bf16.msra.mxu0 0
        %2064 = vmatprep.subr.bf16.mxu0 0
        %2065 = vmatpush1.bf16.msra.mxu0 0
        %2066 = vmatprep.subr.bf16.mxu0 0
        %2067 = vmatpush1.bf16.msra.mxu0 0
        %2068 = vmatprep.subr.bf16.mxu0 0
        %2069 = vmatpush1.bf16.msra.mxu0 0
        %2070 = vmatprep.subr.bf16.mxu0 0
        %2071 = vmatpush1.bf16.msra.mxu0 0
        %2072 = vmatprep.subr.bf16.mxu0 0
        %2073 = vmatpush1.bf16.msra.mxu0 0
        %2074 = vmatprep.subr.bf16.mxu0 0
        %2075 = vmatpush1.bf16.msra.mxu0 0
        %2076 = vmatprep.subr.bf16.mxu0 0
        %2077 = vmatpush1.bf16.msra.mxu0 0
        %2078 = vmatprep.subr.bf16.mxu0 0
        %2079 = vmatpush1.bf16.msra.mxu0 0
        %2080 = vmatprep.subr.bf16.mxu0 0
        %2081 = vmatpush1.bf16.msra.mxu0 0
        %2082 = vmatprep.subr.bf16.mxu0 0
        %2083 = vmatpush1.bf16.msra.mxu0 0
        %2084 = vmatprep.subr.bf16.mxu0 0
        %2085 = vmatpush1.bf16.msra.mxu0 0
        %2086 = vmatprep.subr.bf16.mxu0 0
        %2087 = vmatpush1.bf16.msra.mxu0 0
        %2088 = vmatprep.mubr.bf16.mxu0 0
        %2089 = vmatmul.mubr.bf16.gmra.mrb[0].mxu0 %v2051
        %v2090 = vpop.f32.mrb[0].mxu0
        %v2091 = vadd.f32 0.0, %v2090
        %v2092 = vpop.f32.mrb[0].mxu0
        %v2093 = vpop.f32.mrb[0].mxu0
        %v2094 = vpop.f32.mrb[0].mxu0
        %2095 = vdwg.mxu0
        %v2097 = vsel %vm1099, %v1956, 0
        %v2100 = vsel %vm1960, %v1637, 0
        %2102 = vmatprep.subr.bf16.mxu0 0
        %2103 = vmatpush1.bf16.msra.mxu0 %v2100
        %2104 = vmatprep.subr.bf16.mxu0 0
        %2105 = vmatpush1.bf16.msra.mxu0 0
        %2106 = vmatprep.subr.bf16.mxu0 0
        %2107 = vmatpush1.bf16.msra.mxu0 0
        %2108 = vmatprep.subr.bf16.mxu0 0
        %2109 = vmatpush1.bf16.msra.mxu0 0
        %2110 = vmatprep.subr.bf16.mxu0 0
        %2111 = vmatpush1.bf16.msra.mxu0 0
        %2112 = vmatprep.subr.bf16.mxu0 0
        %2113 = vmatpush1.bf16.msra.mxu0 0
        %2114 = vmatprep.subr.bf16.mxu0 0
        %2115 = vmatpush1.bf16.msra.mxu0 0
        %2116 = vmatprep.subr.bf16.mxu0 0
        %2117 = vmatpush1.bf16.msra.mxu0 0
        %2118 = vmatprep.subr.bf16.mxu0 0
        %2119 = vmatpush1.bf16.msra.mxu0 0
        %2120 = vmatprep.subr.bf16.mxu0 0
        %2121 = vmatpush1.bf16.msra.mxu0 0
        %2122 = vmatprep.subr.bf16.mxu0 0
        %2123 = vmatpush1.bf16.msra.mxu0 0
        %2124 = vmatprep.subr.bf16.mxu0 0
        %2125 = vmatpush1.bf16.msra.mxu0 0
        %2126 = vmatprep.subr.bf16.mxu0 0
        %2127 = vmatpush1.bf16.msra.mxu0 0
        %2128 = vmatprep.subr.bf16.mxu0 0
        %2129 = vmatpush1.bf16.msra.mxu0 0
        %2130 = vmatprep.subr.bf16.mxu0 0
        %2131 = vmatpush1.bf16.msra.mxu0 0
        %2132 = vmatprep.subr.bf16.mxu0 0
        %2133 = vmatpush1.bf16.msra.mxu0 0
        %2134 = vmatprep.mubr.bf16.mxu0 0
        %2135 = vmatmul.mubr.bf16.gmra.mrb[0].mxu0 %v2097
        %v2136 = vpop.f32.mrb[0].mxu0
        %v2137 = vadd.f32 0.0, %v2136
        %v2138 = vpop.f32.mrb[0].mxu0
        %v2139 = vpop.f32.mrb[0].mxu0
        %v2140 = vpop.f32.mrb[0].mxu0
        %2141 = vdwg.mxu0
        %v2142 = vadd.f32 %v1949, %v1999
        %v2143 = vadd.f32 %v1950, %v2045
        %v2144 = vadd.f32 %v1951, %v2091
        %v2145 = vadd.f32 %v1952, %v2137
        %2146 = vst.msk [vmem:[#allocation7] sm:$0xff] %vm1099, %v2142
        %2147 = vst.msk [vmem:[#allocation7 + $0x8] sm:$0xff] %vm1099, %v2143
        %2148 = vst.msk [vmem:[#allocation7 + $0x10] sm:$0xff] %vm1099, %v2144
        %2149 = vst.msk [vmem:[#allocation7 + $0x18] sm:$0xff] %vm1099, %v2145
        %2150 = vst.msk [vmem:[#allocation5] sm:$0xff] %vm1090, %v1849
        %2151 = vst.msk [vmem:[#allocation5 + $0x8] sm:$0xff] %vm1090, %v1850
        %2152 = vst.msk [vmem:[#allocation5 + $0x10] sm:$0xff] %vm1090, %v1851
        %2153 = vst.msk [vmem:[#allocation5 + $0x18] sm:$0xff] %vm1090, %v1852
        %v2154 = vld [vmem:[#allocation6] sm:$0xff]
        %v2155 = vld [vmem:[#allocation6 + $0x8] sm:$0xff]
        %v2156 = vld [vmem:[#allocation6 + $0x10] sm:$0xff]
        %v2157 = vld [vmem:[#allocation6 + $0x18] sm:$0xff]
        %v2158 = vrcp.pop %v2154
        %v2159 = vmul.f32 1.0, %v2158
        %v2160 = vrcp.pop %v2155
        %v2161 = vmul.f32 1.0, %v2160
        %v2162 = vrcp.pop %v2156
        %v2163 = vmul.f32 1.0, %v2162
        %v2164 = vrcp.pop %v2157
        %v2165 = vmul.f32 1.0, %v2164
        %v2166 = vld [vmem:[#allocation7] sm:$0xff]
        %v2167 = vld [vmem:[#allocation7 + $0x8] sm:$0xff]
        %v2168 = vld [vmem:[#allocation7 + $0x10] sm:$0xff]
        %v2169 = vld [vmem:[#allocation7 + $0x18] sm:$0xff]
        %2171 = vset.pattern.permute.xlu0 0
        %2172 = vperm.xlu0 %2171, %v2159
        %v2173 = vpop.permute.xlu0 %2172
        %2176 = vset.pattern.permute.xlu0 0
        %2177 = vperm.xlu0 %2176, %v2161
        %v2178 = vpop.permute.xlu0 %2177
        %2181 = vset.pattern.permute.xlu0 0
        %2182 = vperm.xlu0 %2181, %v2163
        %v2183 = vpop.permute.xlu0 %2182
        %2186 = vset.pattern.permute.xlu0 0
        %2187 = vperm.xlu0 %2186, %v2165
        %v2188 = vpop.permute.xlu0 %2187
        %v2190 = vmul.f32 %v2166, %v2173
        %v2191 = vmul.f32 %v2167, %v2178
        %v2192 = vmul.f32 %v2168, %v2183
        %v2193 = vmul.f32 %v2169, %v2188
        %2195 = vrot.lane.b32.xlu0 %v2191, 8
        %v2196 = vpop.permute.xlu0 %2195
        %2199 = vrot.lane.b32.xlu0 %v2192, 16
        %v2200 = vpop.permute.xlu0 %2199
        %2203 = vrot.lane.b32.xlu0 %v2193, 24
        %v2204 = vpop.permute.xlu0 %2203
        %v2206 = vsel %vm1099, %v2190, %v2196
        %vm2207 = vcmask 130048
        %v2208 = vsel %vm2207, %v2206, %v2200
        %vm2209 = vcmask 195584
        %v2210 = vsel %vm2209, %v2208, %v2204
        %v2211 = vpack.c.bf16 %v2210, %v2210
        %v2213 = vlaneseq
        %v2214 = vshrl.u32 %v2213, 7
        %v2215 = vsub.s32 0, %v2214
        %v2216 = vrot.slane %v767, %v2215
        %v2222 = vunpack.c.l.b16 %v763
        %v2223 = vunpack.c.l.b16 %v764
        %v2224 = vunpack.c.l.b16 %v765
        %v2225 = vunpack.c.l.b16 %v766
        %v2226 = vpack.c.b16 %v2223, %v2222
        %v2227 = vpack.c.b16 %v2225, %v2224
        %v2231 = vsel %vm783, %v2211, 0
        %2233 = vmatprep.subr.bf16.mxu0 0
        %2234 = vmatpush1.bf16.msra.mxu0 %v2226
        %2235 = vmatprep.subr.bf16.mxu0 0
        %2236 = vmatpush1.bf16.msra.mxu0 %v2227
        %2237 = vmatprep.subr.bf16.mxu0 0
        %2238 = vmatpush1.bf16.msra.mxu0 0
        %2239 = vmatprep.subr.bf16.mxu0 0
        %2240 = vmatpush1.bf16.msra.mxu0 0
        %2241 = vmatprep.subr.bf16.mxu0 0
        %2242 = vmatpush1.bf16.msra.mxu0 0
        %2243 = vmatprep.subr.bf16.mxu0 0
        %2244 = vmatpush1.bf16.msra.mxu0 0
        %2245 = vmatprep.subr.bf16.mxu0 0
        %2246 = vmatpush1.bf16.msra.mxu0 0
        %2247 = vmatprep.subr.bf16.mxu0 0
        %2248 = vmatpush1.bf16.msra.mxu0 0
        %2249 = vmatprep.subr.bf16.mxu0 0
        %2250 = vmatpush1.bf16.msra.mxu0 0
        %2251 = vmatprep.subr.bf16.mxu0 0
        %2252 = vmatpush1.bf16.msra.mxu0 0
        %2253 = vmatprep.subr.bf16.mxu0 0
        %2254 = vmatpush1.bf16.msra.mxu0 0
        %2255 = vmatprep.subr.bf16.mxu0 0
        %2256 = vmatpush1.bf16.msra.mxu0 0
        %2257 = vmatprep.subr.bf16.mxu0 0
        %2258 = vmatpush1.bf16.msra.mxu0 0
        %2259 = vmatprep.subr.bf16.mxu0 0
        %2260 = vmatpush1.bf16.msra.mxu0 0
        %2261 = vmatprep.subr.bf16.mxu0 0
        %2262 = vmatpush1.bf16.msra.mxu0 0
        %2263 = vmatprep.subr.bf16.mxu0 0
        %2264 = vmatpush1.bf16.msra.mxu0 0
        %2265 = vmatprep.mubr.bf16.mxu0 0
        %2266 = vmatmul.mubr.bf16.gmra.mrb[0].mxu0 %v2231
        %v2267 = vpop.f32.mrb[0].mxu0
        %v2268 = vadd.f32 %v2216, %v2267
        %v2269 = vpop.f32.mrb[0].mxu0
        %v2270 = vpop.f32.mrb[0].mxu0
        %v2271 = vpop.f32.mrb[0].mxu0
        %2272 = vdwg.mxu0
        %v2273 = vadd.f32 %v782, %v2268
        %v2274 = vsel %vm783, %v2273, 0.0
        %2275 = vadd.xlane.f32.xlu0 %v2274
        %v2276 = vpop.xlane.xlu0 %2275
        %v2277 = vmul.f32 %v2276, %v787
        %v2278 = vsub.f32 %v2273, %v2277
        %v2279 = vmul.f32 %v2278, %v2278
        %v2280 = vsel %vm783, %v2279, 0.0
        %2281 = vadd.xlane.f32.xlu0 %v2280
        %v2282 = vpop.xlane.xlu0 %2281
        %v2283 = vmul.f32 %v2282, %v787
        %v2284 = vadd.f32 %v2283, 1e-05
        %v2285 = vrsqrt.pop %v2284
        %v2286 = vmul.f32 %v2278, %v2285
        %v2288 = vlaneseq
        %v2289 = vshrl.u32 %v2288, 7
        %v2290 = vsub.s32 0, %v2289
        %v2291 = vrot.slane %v746, %v2290
        %v2293 = vmul.f32 %v2286, %v2291
        %v2295 = vlaneseq
        %v2296 = vshrl.u32 %v2295, 7
        %v2297 = vsub.s32 0, %v2296
        %v2298 = vrot.slane %v747, %v2297
        %v2300 = vadd.f32 %v2293, %v2298
        %v2301 = vpack.c.bf16 %v2300, %v2300
        %v2303 = vlaneseq
        %v2304 = vshrl.u32 %v2303, 7
        %v2305 = vsub.s32 0, %v2304
        %v2306 = vrot.slane %v772, %v2305
        %v2312 = vunpack.c.l.b16 %v768
        %v2313 = vunpack.c.l.b16 %v769
        %v2314 = vunpack.c.l.b16 %v770
        %v2315 = vunpack.c.l.b16 %v771
        %v2316 = vpack.c.b16 %v2313, %v2312
        %v2317 = vpack.c.b16 %v2315, %v2314
        %v2321 = vsel %vm783, %v2301, 0
        %2323 = vmatprep.subr.bf16.mxu0 0
        %2324 = vmatpush1.bf16.msra.mxu0 %v2316
        %2325 = vmatprep.subr.bf16.mxu0 0
        %2326 = vmatpush1.bf16.msra.mxu0 %v2317
        %2327 = vmatprep.subr.bf16.mxu0 0
        %2328 = vmatpush1.bf16.msra.mxu0 0
        %2329 = vmatprep.subr.bf16.mxu0 0
        %2330 = vmatpush1.bf16.msra.mxu0 0
        %2331 = vmatprep.subr.bf16.mxu0 0
        %2332 = vmatpush1.bf16.msra.mxu0 0
        %2333 = vmatprep.subr.bf16.mxu0 0
        %2334 = vmatpush1.bf16.msra.mxu0 0
        %2335 = vmatprep.subr.bf16.mxu0 0
        %2336 = vmatpush1.bf16.msra.mxu0 0
        %2337 = vmatprep.subr.bf16.mxu0 0
        %2338 = vmatpush1.bf16.msra.mxu0 0
        %2339 = vmatprep.subr.bf16.mxu0 0
        %2340 = vmatpush1.bf16.msra.mxu0 0
        %2341 = vmatprep.subr.bf16.mxu0 0
        %2342 = vmatpush1.bf16.msra.mxu0 0
        %2343 = vmatprep.subr.bf16.mxu0 0
        %2344 = vmatpush1.bf16.msra.mxu0 0
        %2345 = vmatprep.subr.bf16.mxu0 0
        %2346 = vmatpush1.bf16.msra.mxu0 0
        %2347 = vmatprep.subr.bf16.mxu0 0
        %2348 = vmatpush1.bf16.msra.mxu0 0
        %2349 = vmatprep.subr.bf16.mxu0 0
        %2350 = vmatpush1.bf16.msra.mxu0 0
        %2351 = vmatprep.subr.bf16.mxu0 0
        %2352 = vmatpush1.bf16.msra.mxu0 0
        %2353 = vmatprep.subr.bf16.mxu0 0
        %2354 = vmatpush1.bf16.msra.mxu0 0
        %2355 = vmatprep.mubr.bf16.mxu0 0
        %2356 = vmatmul.mubr.bf16.gmra.mrb[0].mxu0 %v2321
        %v2357 = vpop.f32.mrb[0].mxu0
        %v2358 = vadd.f32 %v2306, %v2357
        %v2359 = vpop.f32.mrb[0].mxu0
        %v2360 = vpop.f32.mrb[0].mxu0
        %v2361 = vpop.f32.mrb[0].mxu0
        %2362 = vdwg.mxu0
        %v2363 = vmax.f32 %v2358, 0.0
        %v2364 = vpack.c.bf16 %v2363, %v2363
        %v2366 = vlaneseq
        %v2367 = vshrl.u32 %v2366, 7
        %v2368 = vsub.s32 0, %v2367
        %v2369 = vrot.slane %v781, %v2368
        %v2379 = vunpack.c.l.b16 %v773
        %v2380 = vunpack.c.l.b16 %v774
        %v2381 = vunpack.c.l.b16 %v775
        %v2382 = vunpack.c.l.b16 %v776
        %v2383 = vunpack.c.l.b16 %v777
        %v2384 = vunpack.c.l.b16 %v778
        %v2385 = vunpack.c.l.b16 %v779
        %v2386 = vunpack.c.l.b16 %v780
        %v2387 = vpack.c.b16 %v2380, %v2379
        %v2388 = vpack.c.b16 %v2382, %v2381
        %v2389 = vpack.c.b16 %v2384, %v2383
        %v2390 = vpack.c.b16 %v2386, %v2385
        %vm2395 = vcmask 523264
        %v2397 = vsel %vm2395, %v2364, 0
        %2399 = vmatprep.subr.bf16.mxu0 0
        %2400 = vmatpush1.bf16.msra.mxu0 %v2387
        %2401 = vmatprep.subr.bf16.mxu0 0
        %2402 = vmatpush1.bf16.msra.mxu0 %v2388
        %2403 = vmatprep.subr.bf16.mxu0 0
        %2404 = vmatpush1.bf16.msra.mxu0 %v2389
        %2405 = vmatprep.subr.bf16.mxu0 0
        %2406 = vmatpush1.bf16.msra.mxu0 %v2390
        %2407 = vmatprep.subr.bf16.mxu0 0
        %2408 = vmatpush1.bf16.msra.mxu0 0
        %2409 = vmatprep.subr.bf16.mxu0 0
        %2410 = vmatpush1.bf16.msra.mxu0 0
        %2411 = vmatprep.subr.bf16.mxu0 0
        %2412 = vmatpush1.bf16.msra.mxu0 0
        %2413 = vmatprep.subr.bf16.mxu0 0
        %2414 = vmatpush1.bf16.msra.mxu0 0
        %2415 = vmatprep.subr.bf16.mxu0 0
        %2416 = vmatpush1.bf16.msra.mxu0 0
        %2417 = vmatprep.subr.bf16.mxu0 0
        %2418 = vmatpush1.bf16.msra.mxu0 0
        %2419 = vmatprep.subr.bf16.mxu0 0
        %2420 = vmatpush1.bf16.msra.mxu0 0
        %2421 = vmatprep.subr.bf16.mxu0 0
        %2422 = vmatpush1.bf16.msra.mxu0 0
        %2423 = vmatprep.subr.bf16.mxu0 0
        %2424 = vmatpush1.bf16.msra.mxu0 0
        %2425 = vmatprep.subr.bf16.mxu0 0
        %2426 = vmatpush1.bf16.msra.mxu0 0
        %2427 = vmatprep.subr.bf16.mxu0 0
        %2428 = vmatpush1.bf16.msra.mxu0 0
        %2429 = vmatprep.subr.bf16.mxu0 0
        %2430 = vmatpush1.bf16.msra.mxu0 0
        %2431 = vmatprep.mubr.bf16.mxu0 0
        %2432 = vmatmul.mubr.bf16.gmra.mrb[0].mxu0 %v2397
        %v2433 = vpop.f32.mrb[0].mxu0
        %v2434 = vadd.f32 %v2369, %v2433
        %v2435 = vpop.f32.mrb[0].mxu0
        %v2436 = vpop.f32.mrb[0].mxu0
        %v2437 = vpop.f32.mrb[0].mxu0
        %2438 = vdwg.mxu0
        %v2439 = vadd.f32 %v2273, %v2434
        %2440 = vst.msk [vmem:[%s726] sm:$0xff] %vm783, %v2439
        %s2441 = sand.u32 %s451, 1
        %s2442 = scalar_lea.sflag [#allocation10], %s2441
        %s2443 = sand.u32 %s451, 1
        %s2444 = smul.addr %s2443, 8
        %s2445 = scalar_lea.vmem [#allocation23], %s2444
        // Predicated region
        $region136: #{tpu_custom_call.1} parent=91 // pred_check
          %p2446 = pneg %p461
        $region137: #{tpu_custom_call.1} parent=91 // pred_check_branch
          %2448 = sbr.rel (%p2446) target = $region139
        $region138: #{tpu_custom_call.1} parent=91 // pred_region
          %s2450 = ssub.s32 128, 128
          %2451 = vsyncadd %s2442, %s2450
          %s2452 = sadd.s32 %s42, %s41
          %s2453 = smul.addr %s2452, 128
          %s2454 = scalar_lea.hbm %s18, %s2453
          %s2456 = sshll.u32 %s2445, 4
          %s2457 = int_to_ptr.vmem [resolvable:$true] %s2456
          %2459 = dma.vmem_to_hbm [thread:$0]  %s2457, 128, %s2454, %s2442
        $region139: #{tpu_custom_call.1} parent=91 // pred_fallthru
          _
      $region92: #{tpu_custom_call.1} parent=5 // pred_fallthru
        _
      %p2460 = scmp.le.s32.totalorder 2, %s32
      // Predicated region
      $region140: #{tpu_custom_call.1} parent=5 // pred_check
        %p2461 = pneg %p2460
      $region141: #{tpu_custom_call.1} parent=5 // pred_check_branch
        %2463 = sbr.rel (%p2461) target = $region143
      $region142: #{tpu_custom_call.1} parent=5 // pred_region
        %s2464 = ssub.s32 %s32, 2
        // Predicated region
        $region144: #{tpu_custom_call.1} parent=142 // pred_check
          %p2465 = pneg %p467
        $region145: #{tpu_custom_call.1} parent=142 // pred_check_branch
          %2467 = sbr.rel (%p2465) target = $region147
        $region146: #{tpu_custom_call.1} parent=142 // pred_region
          %s2468 = sand.u32 %s452, 1
          %s2469 = scalar_lea.sflag [#allocation10], %s2468
          %s2470 = sand.u32 %s452, 1
          %s2471 = smul.addr %s2470, 8
          %s2472 = scalar_lea.vmem [#allocation23], %s2471
          %2473 = dma.done %s2469, 128
        $region147: #{tpu_custom_call.1} parent=142 // pred_fallthru
          _
      $region143: #{tpu_custom_call.1} parent=5 // pred_fallthru
        _
    $region6: #{tpu_custom_call.1} parent=1 // loop_footer
      %s36 = sadd.s32 1, %s32
    $region7: #{tpu_custom_call.1} parent=1 // loop_footer_branch
      %31 = sbr.rel target = $region3
    $region8: #{tpu_custom_call.1} parent=1 // loop_exit
      _
    %2474 = vsyncpa [#allocation9], 1
    %s2475 = scalar_lea.sflag [#allocation9], 1
    %2476 = vsyncpa %s2475, 1
    %2477 = vsyncpa [#allocation12], 1
    %2478 = vsyncpa [#allocation15], 1
    %2479 = vsyncpa [#allocation18], 1
    %2480 = vsyncpa [#allocation21], 1
    %2481 = vsyncpa [#allocation10], 1
    %s2482 = scalar_lea.sflag [#allocation10], 1
    %2483 = vsyncpa %s2482, 1

</llo_original>
